<compile_context>
chip_gen: v5e
topology: v5e:2x2
jax: 0.10.0
libtpu: 0.0.40
codegen_flags: <defaults>
</compile_context>

<pallas_src>
import functools

import jax
import jax.numpy as jnp
import numpy as np
from jax import lax
from jax.experimental import pallas as pl
from jax.experimental.pallas import tpu as pltpu

HIDDEN = 64          # fixed by the module's __init__
GATE_PAD = 128       # each gate padded to a full 128-lane vreg
G4 = 4 * GATE_PAD    # 512 padded gate columns (i, f, g, o)
T_CHUNK_MAX = 32     # max timesteps processed per grid step (bounds VMEM for long T)


def _sigmoid_eup(x):
    # sigmoid(x) == 0.5*(tanh(0.5*x) + 1): one EUP op instead of exp + divide.
    return 0.5 * (jnp.tanh(0.5 * x) + 1.0)


def lstm_classifier_kernel(
    x_ref,      # (1, 1, Tc*n, E)   bf16  embedded inputs, time-major within the chunk
    wih0_ref,   # (E, 512)          bf16  layer-0 input->gates (gate-padded cols)
    whh0_ref,   # (128, 512)        bf16  layer-0 hidden->gates (padded rows+cols)
    b0_ref,     # (1, 512)          f32   bias_ih_l0 + bias_hh_l0 (gate-padded)
    w1_ref,     # (256, 512)        bf16  layer-1 fused [W_ih ; W_hh] (padded)
    b1_ref,     # (1, 512)          f32   bias_ih_l1 + bias_hh_l1 (gate-padded)
    wlin_ref,   # (1, 128)          f32   final linear row (zeros in lanes 64:128)
    blin_ref,   # (1, 1)            f32
    out_ref,    # (1, 1, n)         f32   logits for this batch tile (lane-dense)
    proj_ref,   # (Tc*n, 512)       bf16  scratch: hoisted layer-0 input projection
    h0_ref, c0_ref, h1_ref, c1_ref,  # (n, 128) f32 scratch: persistent LSTM state
    *, seq_len, num_chunks, unroll,
):
    GP = GATE_PAD
    n = h0_ref.shape[0]
    t_chunk = proj_ref.shape[0] // n
    chunk = pl.program_id(1)
    needs_mask = (num_chunks * t_chunk != seq_len)   # static

    @pl.when(chunk == 0)
    def _():
        h0_ref[...] = jnp.zeros_like(h0_ref)
        c0_ref[...] = jnp.zeros_like(c0_ref)
        h1_ref[...] = jnp.zeros_like(h1_ref)
        c1_ref[...] = jnp.zeros_like(c1_ref)

    # Hoisted layer-0 input projection for this chunk: one (Tc*n, E)x(E, 512) MXU matmul.
    # Stored bf16 (halves proj VMEM + per-step load bytes); bias added in-loop in f32.
    proj_ref[...] = jnp.dot(
        x_ref[0, 0], wih0_ref[...], preferred_element_type=jnp.float32
    ).astype(jnp.bfloat16)

    b0 = b0_ref[...]
    b1 = b1_ref[...]

    def lstm_cell(g, c):
        # PyTorch gate order i, f, g, o; each slice is a whole 128-lane vreg.
        # Invariant: pad columns of all gate weights/biases are zero, so padded lanes
        # of h/c stay exactly 0 (asserted in pack_params).
        # TODO(synk): a 256-wide [i|f]/[g|o] packed layout would halve EUP/VPU lane work;
        #             keep 128-lane padding until the sub-vreg slice cost is measured.
        i = _sigmoid_eup(g[:, 0 * GP:1 * GP])
        f = _sigmoid_eup(g[:, 1 * GP:2 * GP])
        gg = jnp.tanh(g[:, 2 * GP:3 * GP])
        o = _sigmoid_eup(g[:, 3 * GP:4 * GP])
        c_new = f * c + i * gg
        h_new = o * jnp.tanh(c_new)
        return h_new, c_new

    def step(t, carry):
        h0, c0, h1, c1 = carry
        start = pl.multiple_of(t * n, n)
        # layer 0: only the recurrent matmul stays on the serial chain
        g0 = (proj_ref[pl.ds(start, n), :].astype(jnp.float32) + b0
              + jnp.dot(h0.astype(jnp.bfloat16), whh0_ref[...],
                        preferred_element_type=jnp.float32))
        h0n, c0n = lstm_cell(g0, c0)
        # layer 1: fused input+recurrent matmul [h0 | h1] @ [[W_ih]; [W_hh]]
        # (cast to bf16 BEFORE the concat: half the vregs moved on the critical path)
        xin = jnp.concatenate(
            [h0n.astype(jnp.bfloat16), h1.astype(jnp.bfloat16)], axis=-1)   # (n, 256)
        g1 = jnp.dot(xin, w1_ref[...], preferred_element_type=jnp.float32) + b1
        h1n, c1n = lstm_cell(g1, c1)
        if needs_mask:
            # Padded timesteps (time padding of the last chunk) must not update state.
            valid = (chunk * t_chunk + t) < seq_len
            h0n = jnp.where(valid, h0n, h0)
            c0n = jnp.where(valid, c0n, c0)
            h1n = jnp.where(valid, h1n, h1)
            c1n = jnp.where(valid, c1n, c1)
        return h0n, c0n, h1n, c1n

    init = (h0_ref[...], c0_ref[...], h1_ref[...], c1_ref[...])
    h0, c0, h1, c1 = lax.fori_loop(0, t_chunk, step, init, unroll=unroll)
    h0_ref[...] = h0
    c0_ref[...] = c0
    h1_ref[...] = h1
    c1_ref[...] = c1

    @pl.when(chunk == num_chunks - 1)
    def _():
        # Linear(64, 1): contract h1 and wlin over their last dims -> lane-dense (1, n)
        # row, so the store is an unmasked vst instead of 1-lane masked stores.
        row = lax.dot_general(wlin_ref[...], h1, (((1,), (1,)), ((), ())),
                              preferred_element_type=jnp.float32)           # (1, n)
        out_ref[0] = row + blin_ref[...]


# ----------------------------- parameter packing -----------------------------

def _pad_gate_cols(w, hidden=HIDDEN, gp=GATE_PAD):
    """(K, 4H) -> (K, 4*gp); gate j lands in cols [j*gp, j*gp+H), pad cols are zero."""
    out = jnp.zeros((w.shape[0], 4 * gp), w.dtype)
    for j in range(4):
        out = out.at[:, j * gp:j * gp + hidden].set(w[:, j * hidden:(j + 1) * hidden])
    return out


def _pad_rows(w, rows):
    return jnp.zeros((rows, w.shape[1]), w.dtype).at[: w.shape[0]].set(w)


def _assert_gate_pad_cols_zero(w, name):
    """Kernel invariant: pad lanes of the pre-activations (hence h/c) stay exactly 0."""
    wn = np.asarray(w)
    for j in range(4):
        assert np.all(wn[..., j * GATE_PAD + HIDDEN:(j + 1) * GATE_PAD] == 0), name


def init_raw_params(key, embedding_dim, hidden=HIDDEN):
    """PyTorch-layout LSTM/Linear parameters (deterministic uniform init)."""
    ks = jax.random.split(key, 10)
    s = 1.0 / float(np.sqrt(hidden))
    u = lambda k, shape: jax.random.uniform(k, shape, jnp.float32, minval=-s, maxval=s)
    return {
        "w_ih_l0": u(ks[0], (4 * hidden, embedding_dim)),
        "w_hh_l0": u(ks[1], (4 * hidden, hidden)),
        "b_ih_l0": u(ks[2], (4 * hidden,)),
        "b_hh_l0": u(ks[3], (4 * hidden,)),
        "w_ih_l1": u(ks[4], (4 * hidden, hidden)),
        "w_hh_l1": u(ks[5], (4 * hidden, hidden)),
        "b_ih_l1": u(ks[6], (4 * hidden,)),
        "b_hh_l1": u(ks[7], (4 * hidden,)),
        "w_lin":   u(ks[8], (1, hidden)),
        "b_lin":   u(ks[9], (1,)),
    }


def pack_params(raw):
    """Transpose / gate-pad / fuse the PyTorch weights into the kernel layout."""
    H, GP = HIDDEN, GATE_PAD
    wih0 = _pad_gate_cols(raw["w_ih_l0"].T)                           # (E, 4GP)
    whh0 = _pad_rows(_pad_gate_cols(raw["w_hh_l0"].T), GP)            # (GP, 4GP)
    b0 = _pad_gate_cols((raw["b_ih_l0"] + raw["b_hh_l0"])[None, :])   # (1, 4GP)
    wih1 = _pad_rows(_pad_gate_cols(raw["w_ih_l1"].T), GP)            # (GP, 4GP)
    whh1 = _pad_rows(_pad_gate_cols(raw["w_hh_l1"].T), GP)            # (GP, 4GP)
    w1 = jnp.concatenate([wih1, whh1], axis=0)                        # (2GP, 4GP)
    b1 = _pad_gate_cols((raw["b_ih_l1"] + raw["b_hh_l1"])[None, :])   # (1, 4GP)
    wlin = jnp.zeros((1, GP), jnp.float32).at[:, :H].set(raw["w_lin"])

    # Correctness guard: padded gate columns MUST be exactly zero.
    for name, w in (("wih0", wih0), ("whh0", whh0), ("b0", b0), ("w1", w1), ("b1", b1)):
        _assert_gate_pad_cols_zero(w, name)
    assert np.all(np.asarray(wlin)[:, H:] == 0), "wlin pad lanes must be zero"

    return {
        "wih0": wih0.astype(jnp.bfloat16),
        "whh0": whh0.astype(jnp.bfloat16),
        "b0":   b0.astype(jnp.float32),
        "w1":   w1.astype(jnp.bfloat16),
        "b1":   b1.astype(jnp.float32),
        "wlin": wlin.astype(jnp.float32),
        "blin": raw["b_lin"].reshape(1, 1).astype(jnp.float32),
    }


# --------------------------------- wrapper -----------------------------------

def _round_up(x, m):
    return ((x + m - 1) // m) * m


def _vmem_cap_bytes():
    try:
        cap = getattr(pltpu.get_tpu_info(), "vmem_capacity_bytes", None)
        if cap:
            return int(cap)
    except Exception:
        pass
    return 64 << 20   # conservative fallback (v7x per-TensorCore VMEM)


def _wide_mxu():
    # v6e/v7x have 256-row MXUs; v2-v5 are 128-row.
    try:
        kind = jax.devices()[0].device_kind.lower()
    except Exception:
        return False
    return not any(tag in kind for tag in ("v2", "v3", "v4", "v5"))


def rnn_binary_classification_forward(inputs, embedding_matrix, params):
    """inputs: (N, T) float token ids. Returns logits (N, 1) float32."""
    N, T = inputs.shape
    E = embedding_matrix.shape[1]

    # Batch tile: for moderate N make >= 2 tiles (so both v7x TensorCores get work);
    # for large N, match the MXU row count per generation (256 on v6e/v7x, else 128).
    if N <= 256:
        tile_n = max(16, _round_up(pl.cdiv(N, 2), 16))
    else:
        tile_n = 256 if (N >= 512 and _wide_mxu()) else 128
    n_pad = _round_up(N, tile_n)
    num_tiles = n_pad // tile_n

    # Time chunking: bounds VMEM independent of sequence length.
    t_chunk = T if T <= T_CHUNK_MAX else T_CHUNK_MAX
    t_pad = _round_up(T, t_chunk)
    num_chunks = t_pad // t_chunk
    unroll = True if t_chunk <= 16 else 4

    ids = inputs.astype(jnp.int32)
    ids = jnp.pad(ids, ((0, n_pad - N), (0, t_pad - T)))      # pad token 0

    # Embedding gather in XLA, then ONE relayout to (tiles, chunks, Tc*tile_n, E) so the
    # in-kernel projection matmul reads its block directly (no in-kernel reshape copy).
    # TODO(synk): for small vocabularies the gather could move in-kernel (VMEM-resident
    #             table) to avoid the (N, T, E) HBM round trip; XLA gather kept as the
    #             general-vocabulary path.
    x = jnp.take(embedding_matrix, ids, axis=0).astype(jnp.bfloat16)   # (n_pad, t_pad, E)
    x = x.reshape(num_tiles, tile_n, num_chunks, t_chunk, E)
    x = jnp.transpose(x, (0, 2, 3, 1, 4))                              # time-major in tile
    x = x.reshape(num_tiles, num_chunks, t_chunk * tile_n, E)

    # VMEM budget: actual need + small slack, capped at 3/4 of this generation's VMEM.
    need = (
        2 * t_chunk * tile_n * E * 2                        # double-buffered x block (bf16)
        + t_chunk * tile_n * G4 * 2                         # proj scratch (bf16)
        + t_chunk * tile_n * G4 * 4                         # transient f32 projection result
        + 2 * ((E + GATE_PAD + 2 * GATE_PAD) * G4 * 2       # bf16 weights (double-buffered)
               + (2 * G4 + GATE_PAD + 1) * 4)               # f32 biases / linear row
        + 4 * tile_n * GATE_PAD * 4                         # persistent h/c state
        + 2 * tile_n * 4                                    # output block
    )
    cap = (_vmem_cap_bytes() * 3) // 4
    vmem_limit = int(min(max(need + (4 << 20), 32 << 20), cap))

    kernel = functools.partial(
        lstm_classifier_kernel, seq_len=T, num_chunks=num_chunks, unroll=unroll)

    out = pl.pallas_call(
        kernel,
        out_shape=jax.ShapeDtypeStruct((num_tiles, 1, tile_n), jnp.float32),
        grid_spec=pltpu.PrefetchScalarGridSpec(
            num_scalar_prefetch=0,
            grid=(num_tiles, num_chunks),
            in_specs=[
                pl.BlockSpec((1, 1, t_chunk * tile_n, E), lambda i, c: (i, c, 0, 0)),  # x
                pl.BlockSpec((E, G4), lambda i, c: (0, 0)),                   # wih0
                pl.BlockSpec((GATE_PAD, G4), lambda i, c: (0, 0)),            # whh0
                pl.BlockSpec((1, G4), lambda i, c: (0, 0)),                   # b0
                pl.BlockSpec((2 * GATE_PAD, G4), lambda i, c: (0, 0)),        # w1 fused
                pl.BlockSpec((1, G4), lambda i, c: (0, 0)),                   # b1
                pl.BlockSpec((1, GATE_PAD), lambda i, c: (0, 0)),             # wlin
                pl.BlockSpec((1, 1), lambda i, c: (0, 0)),                    # blin
            ],
            out_specs=pl.BlockSpec((1, 1, tile_n), lambda i, c: (i, 0, 0)),
            scratch_shapes=[
                pltpu.VMEM((t_chunk * tile_n, G4), jnp.bfloat16),   # hoisted projection
                pltpu.VMEM((tile_n, GATE_PAD), jnp.float32),        # h0
                pltpu.VMEM((tile_n, GATE_PAD), jnp.float32),        # c0
                pltpu.VMEM((tile_n, GATE_PAD), jnp.float32),        # h1
                pltpu.VMEM((tile_n, GATE_PAD), jnp.float32),        # c1
            ],
        ),
        compiler_params=pltpu.CompilerParams(
            dimension_semantics=("parallel", "arbitrary"),
            vmem_limit_bytes=vmem_limit,
        ),
    )(
        x,
        params["wih0"], params["whh0"], params["b0"],
        params["w1"], params["b1"],
        params["wlin"], params["blin"],
    )
    return out.reshape(n_pad, 1)[:N]


# ----------------------- pure-JAX reference (correctness) --------------------

def reference_forward(inputs, embedding_matrix, raw, hidden=HIDDEN):
    bfc = lambda a: a.astype(jnp.bfloat16).astype(jnp.float32)
    H = hidden
    ids = inputs.astype(jnp.int32)
    x = bfc(jnp.take(embedding_matrix, ids, axis=0))    # (N, T, E)
    N, T, _ = x.shape

    def cell(xt, h, c, wih, whh, b):
        g = bfc(xt) @ bfc(wih).T + bfc(h) @ bfc(whh).T + b
        i = jax.nn.sigmoid(g[:, 0 * H:1 * H])
        f = jax.nn.sigmoid(g[:, 1 * H:2 * H])
        gg = jnp.tanh(g[:, 2 * H:3 * H])
        o = jax.nn.sigmoid(g[:, 3 * H:4 * H])
        c = f * c + i * gg
        return o * jnp.tanh(c), c

    b0 = raw["b_ih_l0"] + raw["b_hh_l0"]
    b1 = raw["b_ih_l1"] + raw["b_hh_l1"]
    h0 = c0 = h1 = c1 = jnp.zeros((N, H), jnp.float32)
    for t in range(T):
        h0, c0 = cell(x[:, t], h0, c0, raw["w_ih_l0"], raw["w_hh_l0"], b0)
        h1, c1 = cell(h0, h1, c1, raw["w_ih_l1"], raw["w_hh_l1"], b1)
    return h1 @ raw["w_lin"].T + raw["b_lin"]


if __name__ == "__main__":
    key = jax.random.PRNGKey(0)
    k_emb, k_par, k_in = jax.random.split(key, 3)

    N, T = 2, 8                      # batch, max_sequence_length
    vocab_size, emb_dim = 100, 32

    # Embedding matrix with padding_idx=0 row zeroed (as nn.Embedding(padding_idx=0)).
    embedding_matrix = jax.random.normal(k_emb, (vocab_size, emb_dim), jnp.float32)
    embedding_matrix = embedding_matrix.at[0].set(0.0)

    raw = init_raw_params(k_par, emb_dim)
    params = pack_params(raw)

    # Inputs arrive as a FloatTensor of token indices (as in the PyTorch forward).
    inputs = jax.random.randint(k_in, (N, T), 0, vocab_size).astype(jnp.float32)

    logits = rnn_binary_classification_forward(inputs, embedding_matrix, params)
    jax.block_until_ready(logits)
    assert logits.shape == (N, 1) and logits.dtype == jnp.float32

    ref = reference_forward(inputs, embedding_matrix, raw)
    np.testing.assert_allclose(np.asarray(logits), np.asarray(ref), atol=2e-2, rtol=2e-2)
    print("KERNEL_OK")
</pallas_src>

<mosaic_0001>
module attributes {stable_mosaic.version = 11 : i64} {
  func.func @lstm_classifier_kernel(%arg0: i32, %arg1: i32, %arg2: memref<1x1x128x32xbf16, #tpu.memory_space<vmem>>, %arg3: memref<32x512xbf16, #tpu.memory_space<vmem>>, %arg4: memref<128x512xbf16, #tpu.memory_space<vmem>>, %arg5: memref<1x512xf32, #tpu.memory_space<vmem>>, %arg6: memref<256x512xbf16, #tpu.memory_space<vmem>>, %arg7: memref<1x512xf32, #tpu.memory_space<vmem>>, %arg8: memref<1x128xf32, #tpu.memory_space<vmem>>, %arg9: memref<1x1xf32, #tpu.memory_space<vmem>>, %arg10: memref<1x1x16xf32, #tpu.memory_space<vmem>>, %arg11: memref<128x512xbf16, #tpu.memory_space<vmem>>, %arg12: memref<16x128xf32, #tpu.memory_space<vmem>>, %arg13: memref<16x128xf32, #tpu.memory_space<vmem>>, %arg14: memref<16x128xf32, #tpu.memory_space<vmem>>, %arg15: memref<16x128xf32, #tpu.memory_space<vmem>>) attributes {dimension_semantics = [#tpu.dimension_semantics<parallel>, #tpu.dimension_semantics<arbitrary>], iteration_bounds = array<i64: 1, 1>, scalar_prefetch = 0 : i64, scratch_operands = 5 : i64, tpu.core_type = #tpu.core_type<tc>, window_params = [{transform_indices = @transform_0, window_bounds = array<i64: 1, 1, 128, 32>}, {pipeline_mode = #tpu.pipeline_mode<synchronous>, transform_indices = @transform_1, window_bounds = array<i64: 32, 512>}, {pipeline_mode = #tpu.pipeline_mode<synchronous>, transform_indices = @transform_2, window_bounds = array<i64: 128, 512>}, {pipeline_mode = #tpu.pipeline_mode<synchronous>, transform_indices = @transform_3, window_bounds = array<i64: 1, 512>}, {pipeline_mode = #tpu.pipeline_mode<synchronous>, transform_indices = @transform_4, window_bounds = array<i64: 256, 512>}, {pipeline_mode = #tpu.pipeline_mode<synchronous>, transform_indices = @transform_5, window_bounds = array<i64: 1, 512>}, {pipeline_mode = #tpu.pipeline_mode<synchronous>, transform_indices = @transform_6, window_bounds = array<i64: 1, 128>}, {pipeline_mode = #tpu.pipeline_mode<synchronous>, transform_indices = @transform_7, window_bounds = array<i64: 1, 1>}, {transform_indices = @transform_8, window_bounds = array<i64: 1, 1, 16>}]} {
    %c0_i32 = arith.constant 0 : i32
    %0 = arith.cmpi eq, %arg1, %c0_i32 : i32
    %1 = arith.extui %0 : i1 to i32
    %c0_i32_0 = arith.constant 0 : i32
    %2 = arith.cmpi ne, %1, %c0_i32_0 : i32
    scf.if %2 {
      %cst_238 = arith.constant 0.000000e+00 : f32
      %662 = vector.broadcast %cst_238 : f32 to vector<16x128xf32>
      %c0_239 = arith.constant 0 : index
      %c0_240 = arith.constant 0 : index
      %663 = vector.load %arg12[%c0_239, %c0_240] : memref<16x128xf32, #tpu.memory_space<vmem>>, vector<16x128xf32>
      tpu.vector_store %arg12[%c0_239, %c0_240], %662 {strides = array<i32>} : memref<16x128xf32, #tpu.memory_space<vmem>>, vector<16x128xf32>,
      %cst_241 = arith.constant 0.000000e+00 : f32
      %664 = vector.broadcast %cst_241 : f32 to vector<16x128xf32>
      %c0_242 = arith.constant 0 : index
      %c0_243 = arith.constant 0 : index
      %665 = vector.load %arg13[%c0_242, %c0_243] : memref<16x128xf32, #tpu.memory_space<vmem>>, vector<16x128xf32>
      tpu.vector_store %arg13[%c0_242, %c0_243], %664 {strides = array<i32>} : memref<16x128xf32, #tpu.memory_space<vmem>>, vector<16x128xf32>,
      %cst_244 = arith.constant 0.000000e+00 : f32
      %666 = vector.broadcast %cst_244 : f32 to vector<16x128xf32>
      %c0_245 = arith.constant 0 : index
      %c0_246 = arith.constant 0 : index
      %667 = vector.load %arg14[%c0_245, %c0_246] : memref<16x128xf32, #tpu.memory_space<vmem>>, vector<16x128xf32>
      tpu.vector_store %arg14[%c0_245, %c0_246], %666 {strides = array<i32>} : memref<16x128xf32, #tpu.memory_space<vmem>>, vector<16x128xf32>,
      %cst_247 = arith.constant 0.000000e+00 : f32
      %668 = vector.broadcast %cst_247 : f32 to vector<16x128xf32>
      %c0_248 = arith.constant 0 : index
      %c0_249 = arith.constant 0 : index
      %669 = vector.load %arg15[%c0_248, %c0_249] : memref<16x128xf32, #tpu.memory_space<vmem>>, vector<16x128xf32>
      tpu.vector_store %arg15[%c0_248, %c0_249], %668 {strides = array<i32>} : memref<16x128xf32, #tpu.memory_space<vmem>>, vector<16x128xf32>,
    } else {
    }
    %c0 = arith.constant 0 : index
    %c0_1 = arith.constant 0 : index
    %c0_2 = arith.constant 0 : index
    %c0_3 = arith.constant 0 : index
    %3 = vector.load %arg2[%c0, %c0_1, %c0_2, %c0_3] : memref<1x1x128x32xbf16, #tpu.memory_space<vmem>>, vector<1x1x128x32xbf16>
    %4 = vector.shape_cast %3 : vector<1x1x128x32xbf16> to vector<128x32xbf16>
    %c0_4 = arith.constant 0 : index
    %c0_5 = arith.constant 0 : index
    %5 = vector.load %arg3[%c0_4, %c0_5] : memref<32x512xbf16, #tpu.memory_space<vmem>>, vector<32x512xbf16>
    %cst = arith.constant dense<0.000000e+00> : vector<128x512xf32>
    %6 = tpu.matmul %4, %5, %cst {dimension_numbers = #tpu.dot_dimension_numbers<[1], [0], [0], [1], [0, 0, 1, 1], [], []>} : vector<128x32xbf16>, vector<32x512xbf16>, vector<128x512xf32> -> vector<128x512xf32>
    %7 = arith.truncf %6 : vector<128x512xf32> to vector<128x512xbf16>
    %c0_6 = arith.constant 0 : index
    %c0_7 = arith.constant 0 : index
    %8 = vector.load %arg11[%c0_6, %c0_7] : memref<128x512xbf16, #tpu.memory_space<vmem>>, vector<128x512xbf16>
    tpu.vector_store %arg11[%c0_6, %c0_7], %7 {strides = array<i32>} : memref<128x512xbf16, #tpu.memory_space<vmem>>, vector<128x512xbf16>,
    %c0_8 = arith.constant 0 : index
    %c0_9 = arith.constant 0 : index
    %9 = vector.load %arg5[%c0_8, %c0_9] : memref<1x512xf32, #tpu.memory_space<vmem>>, vector<1x512xf32>
    %c0_10 = arith.constant 0 : index
    %c0_11 = arith.constant 0 : index
    %10 = vector.load %arg7[%c0_10, %c0_11] : memref<1x512xf32, #tpu.memory_space<vmem>>, vector<1x512xf32>
    %c0_12 = arith.constant 0 : index
    %c0_13 = arith.constant 0 : index
    %11 = vector.load %arg12[%c0_12, %c0_13] : memref<16x128xf32, #tpu.memory_space<vmem>>, vector<16x128xf32>
    %c0_14 = arith.constant 0 : index
    %c0_15 = arith.constant 0 : index
    %12 = vector.load %arg13[%c0_14, %c0_15] : memref<16x128xf32, #tpu.memory_space<vmem>>, vector<16x128xf32>
    %c0_16 = arith.constant 0 : index
    %c0_17 = arith.constant 0 : index
    %13 = vector.load %arg14[%c0_16, %c0_17] : memref<16x128xf32, #tpu.memory_space<vmem>>, vector<16x128xf32>
    %c0_18 = arith.constant 0 : index
    %c0_19 = arith.constant 0 : index
    %14 = vector.load %arg15[%c0_18, %c0_19] : memref<16x128xf32, #tpu.memory_space<vmem>>, vector<16x128xf32>
    %c0_i32_20 = arith.constant 0 : i32
    %c16_i32 = arith.constant 16 : i32
    %15 = arith.muli %c0_i32_20, %c16_i32 : i32
    %16 = tpu.assume_multiple %15, 16 : i32
    %17 = arith.index_cast %16 : i32 to index
    %c0_21 = arith.constant 0 : index
    %18 = vector.load %arg11[%17, %c0_21] : memref<128x512xbf16, #tpu.memory_space<vmem>>, vector<16x512xbf16>
    %19 = arith.extf %18 : vector<16x512xbf16> to vector<16x512xf32>
    %20 = vector.broadcast %9 : vector<1x512xf32> to vector<16x512xf32>
    %21 = arith.addf %19, %20 : vector<16x512xf32>
    %22 = arith.truncf %11 : vector<16x128xf32> to vector<16x128xbf16>
    %c0_22 = arith.constant 0 : index
    %c0_23 = arith.constant 0 : index
    %23 = vector.load %arg4[%c0_22, %c0_23] : memref<128x512xbf16, #tpu.memory_space<vmem>>, vector<128x512xbf16>
    %cst_24 = arith.constant dense<0.000000e+00> : vector<16x512xf32>
    %24 = tpu.matmul %22, %23, %cst_24 {dimension_numbers = #tpu.dot_dimension_numbers<[1], [0], [0], [1], [0, 0, 1, 1], [], []>} : vector<16x128xbf16>, vector<128x512xbf16>, vector<16x512xf32> -> vector<16x512xf32>
    %25 = arith.addf %21, %24 : vector<16x512xf32>
    %26 = vector.extract_strided_slice %25 {offsets = [0, 0], sizes = [16, 128], strides = [1, 1]} : vector<16x512xf32> to vector<16x128xf32>
    %cst_25 = arith.constant 5.000000e-01 : f32
    %27 = vector.broadcast %cst_25 : f32 to vector<16x128xf32>
    %28 = arith.mulf %27, %26 : vector<16x128xf32>
    %29 = math.tanh %28 : vector<16x128xf32>
    %cst_26 = arith.constant 1.000000e+00 : f32
    %30 = vector.broadcast %cst_26 : f32 to vector<16x128xf32>
    %31 = arith.addf %29, %30 : vector<16x128xf32>
    %cst_27 = arith.constant 5.000000e-01 : f32
    %32 = vector.broadcast %cst_27 : f32 to vector<16x128xf32>
    %33 = arith.mulf %32, %31 : vector<16x128xf32>
    %34 = vector.extract_strided_slice %25 {offsets = [0, 128], sizes = [16, 128], strides = [1, 1]} : vector<16x512xf32> to vector<16x128xf32>
    %cst_28 = arith.constant 5.000000e-01 : f32
    %35 = vector.broadcast %cst_28 : f32 to vector<16x128xf32>
    %36 = arith.mulf %35, %34 : vector<16x128xf32>
    %37 = math.tanh %36 : vector<16x128xf32>
    %cst_29 = arith.constant 1.000000e+00 : f32
    %38 = vector.broadcast %cst_29 : f32 to vector<16x128xf32>
    %39 = arith.addf %37, %38 : vector<16x128xf32>
    %cst_30 = arith.constant 5.000000e-01 : f32
    %40 = vector.broadcast %cst_30 : f32 to vector<16x128xf32>
    %41 = arith.mulf %40, %39 : vector<16x128xf32>
    %42 = vector.extract_strided_slice %25 {offsets = [0, 256], sizes = [16, 128], strides = [1, 1]} : vector<16x512xf32> to vector<16x128xf32>
    %43 = math.tanh %42 : vector<16x128xf32>
    %44 = vector.extract_strided_slice %25 {offsets = [0, 384], sizes = [16, 128], strides = [1, 1]} : vector<16x512xf32> to vector<16x128xf32>
    %cst_31 = arith.constant 5.000000e-01 : f32
    %45 = vector.broadcast %cst_31 : f32 to vector<16x128xf32>
    %46 = arith.mulf %45, %44 : vector<16x128xf32>
    %47 = math.tanh %46 : vector<16x128xf32>
    %cst_32 = arith.constant 1.000000e+00 : f32
    %48 = vector.broadcast %cst_32 : f32 to vector<16x128xf32>
    %49 = arith.addf %47, %48 : vector<16x128xf32>
    %cst_33 = arith.constant 5.000000e-01 : f32
    %50 = vector.broadcast %cst_33 : f32 to vector<16x128xf32>
    %51 = arith.mulf %50, %49 : vector<16x128xf32>
    %52 = arith.mulf %41, %12 : vector<16x128xf32>
    %53 = arith.mulf %33, %43 : vector<16x128xf32>
    %54 = arith.addf %52, %53 : vector<16x128xf32>
    %55 = math.tanh %54 : vector<16x128xf32>
    %56 = arith.mulf %51, %55 : vector<16x128xf32>
    %57 = arith.truncf %56 : vector<16x128xf32> to vector<16x128xbf16>
    %58 = arith.truncf %13 : vector<16x128xf32> to vector<16x128xbf16>
    %59 = tpu.concatenate %57, %58 in 1 : vector<16x128xbf16>, vector<16x128xbf16> -> vector<16x256xbf16>
    %c0_34 = arith.constant 0 : index
    %c0_35 = arith.constant 0 : index
    %60 = vector.load %arg6[%c0_34, %c0_35] : memref<256x512xbf16, #tpu.memory_space<vmem>>, vector<256x512xbf16>
    %cst_36 = arith.constant dense<0.000000e+00> : vector<16x512xf32>
    %61 = tpu.matmul %59, %60, %cst_36 {dimension_numbers = #tpu.dot_dimension_numbers<[1], [0], [0], [1], [0, 0, 1, 1], [], []>} : vector<16x256xbf16>, vector<256x512xbf16>, vector<16x512xf32> -> vector<16x512xf32>
    %62 = vector.broadcast %10 : vector<1x512xf32> to vector<16x512xf32>
    %63 = arith.addf %61, %62 : vector<16x512xf32>
    %64 = vector.extract_strided_slice %63 {offsets = [0, 0], sizes = [16, 128], strides = [1, 1]} : vector<16x512xf32> to vector<16x128xf32>
    %cst_37 = arith.constant 5.000000e-01 : f32
    %65 = vector.broadcast %cst_37 : f32 to vector<16x128xf32>
    %66 = arith.mulf %65, %64 : vector<16x128xf32>
    %67 = math.tanh %66 : vector<16x128xf32>
    %cst_38 = arith.constant 1.000000e+00 : f32
    %68 = vector.broadcast %cst_38 : f32 to vector<16x128xf32>
    %69 = arith.addf %67, %68 : vector<16x128xf32>
    %cst_39 = arith.constant 5.000000e-01 : f32
    %70 = vector.broadcast %cst_39 : f32 to vector<16x128xf32>
    %71 = arith.mulf %70, %69 : vector<16x128xf32>
    %72 = vector.extract_strided_slice %63 {offsets = [0, 128], sizes = [16, 128], strides = [1, 1]} : vector<16x512xf32> to vector<16x128xf32>
    %cst_40 = arith.constant 5.000000e-01 : f32
    %73 = vector.broadcast %cst_40 : f32 to vector<16x128xf32>
    %74 = arith.mulf %73, %72 : vector<16x128xf32>
    %75 = math.tanh %74 : vector<16x128xf32>
    %cst_41 = arith.constant 1.000000e+00 : f32
    %76 = vector.broadcast %cst_41 : f32 to vector<16x128xf32>
    %77 = arith.addf %75, %76 : vector<16x128xf32>
    %cst_42 = arith.constant 5.000000e-01 : f32
    %78 = vector.broadcast %cst_42 : f32 to vector<16x128xf32>
    %79 = arith.mulf %78, %77 : vector<16x128xf32>
    %80 = vector.extract_strided_slice %63 {offsets = [0, 256], sizes = [16, 128], strides = [1, 1]} : vector<16x512xf32> to vector<16x128xf32>
    %81 = math.tanh %80 : vector<16x128xf32>
    %82 = vector.extract_strided_slice %63 {offsets = [0, 384], sizes = [16, 128], strides = [1, 1]} : vector<16x512xf32> to vector<16x128xf32>
    %cst_43 = arith.constant 5.000000e-01 : f32
    %83 = vector.broadcast %cst_43 : f32 to vector<16x128xf32>
    %84 = arith.mulf %83, %82 : vector<16x128xf32>
    %85 = math.tanh %84 : vector<16x128xf32>
    %cst_44 = arith.constant 1.000000e+00 : f32
    %86 = vector.broadcast %cst_44 : f32 to vector<16x128xf32>
    %87 = arith.addf %85, %86 : vector<16x128xf32>
    %cst_45 = arith.constant 5.000000e-01 : f32
    %88 = vector.broadcast %cst_45 : f32 to vector<16x128xf32>
    %89 = arith.mulf %88, %87 : vector<16x128xf32>
    %90 = arith.mulf %79, %14 : vector<16x128xf32>
    %91 = arith.mulf %71, %81 : vector<16x128xf32>
    %92 = arith.addf %90, %91 : vector<16x128xf32>
    %93 = math.tanh %92 : vector<16x128xf32>
    %94 = arith.mulf %89, %93 : vector<16x128xf32>
    %c1_i32 = arith.constant 1 : i32
    %c16_i32_46 = arith.constant 16 : i32
    %95 = arith.muli %c1_i32, %c16_i32_46 : i32
    %96 = tpu.assume_multiple %95, 16 : i32
    %97 = arith.index_cast %96 : i32 to index
    %c0_47 = arith.constant 0 : index
    %98 = vector.load %arg11[%97, %c0_47] : memref<128x512xbf16, #tpu.memory_space<vmem>>, vector<16x512xbf16>
    %99 = arith.extf %98 : vector<16x512xbf16> to vector<16x512xf32>
    %100 = vector.broadcast %9 : vector<1x512xf32> to vector<16x512xf32>
    %101 = arith.addf %99, %100 : vector<16x512xf32>
    %102 = arith.truncf %56 : vector<16x128xf32> to vector<16x128xbf16>
    %c0_48 = arith.constant 0 : index
    %c0_49 = arith.constant 0 : index
    %103 = vector.load %arg4[%c0_48, %c0_49] : memref<128x512xbf16, #tpu.memory_space<vmem>>, vector<128x512xbf16>
    %cst_50 = arith.constant dense<0.000000e+00> : vector<16x512xf32>
    %104 = tpu.matmul %102, %103, %cst_50 {dimension_numbers = #tpu.dot_dimension_numbers<[1], [0], [0], [1], [0, 0, 1, 1], [], []>} : vector<16x128xbf16>, vector<128x512xbf16>, vector<16x512xf32> -> vector<16x512xf32>
    %105 = arith.addf %101, %104 : vector<16x512xf32>
    %106 = vector.extract_strided_slice %105 {offsets = [0, 0], sizes = [16, 128], strides = [1, 1]} : vector<16x512xf32> to vector<16x128xf32>
    %cst_51 = arith.constant 5.000000e-01 : f32
    %107 = vector.broadcast %cst_51 : f32 to vector<16x128xf32>
    %108 = arith.mulf %107, %106 : vector<16x128xf32>
    %109 = math.tanh %108 : vector<16x128xf32>
    %cst_52 = arith.constant 1.000000e+00 : f32
    %110 = vector.broadcast %cst_52 : f32 to vector<16x128xf32>
    %111 = arith.addf %109, %110 : vector<16x128xf32>
    %cst_53 = arith.constant 5.000000e-01 : f32
    %112 = vector.broadcast %cst_53 : f32 to vector<16x128xf32>
    %113 = arith.mulf %112, %111 : vector<16x128xf32>
    %114 = vector.extract_strided_slice %105 {offsets = [0, 128], sizes = [16, 128], strides = [1, 1]} : vector<16x512xf32> to vector<16x128xf32>
    %cst_54 = arith.constant 5.000000e-01 : f32
    %115 = vector.broadcast %cst_54 : f32 to vector<16x128xf32>
    %116 = arith.mulf %115, %114 : vector<16x128xf32>
    %117 = math.tanh %116 : vector<16x128xf32>
    %cst_55 = arith.constant 1.000000e+00 : f32
    %118 = vector.broadcast %cst_55 : f32 to vector<16x128xf32>
    %119 = arith.addf %117, %118 : vector<16x128xf32>
    %cst_56 = arith.constant 5.000000e-01 : f32
    %120 = vector.broadcast %cst_56 : f32 to vector<16x128xf32>
    %121 = arith.mulf %120, %119 : vector<16x128xf32>
    %122 = vector.extract_strided_slice %105 {offsets = [0, 256], sizes = [16, 128], strides = [1, 1]} : vector<16x512xf32> to vector<16x128xf32>
    %123 = math.tanh %122 : vector<16x128xf32>
    %124 = vector.extract_strided_slice %105 {offsets = [0, 384], sizes = [16, 128], strides = [1, 1]} : vector<16x512xf32> to vector<16x128xf32>
    %cst_57 = arith.constant 5.000000e-01 : f32
    %125 = vector.broadcast %cst_57 : f32 to vector<16x128xf32>
    %126 = arith.mulf %125, %124 : vector<16x128xf32>
    %127 = math.tanh %126 : vector<16x128xf32>
    %cst_58 = arith.constant 1.000000e+00 : f32
    %128 = vector.broadcast %cst_58 : f32 to vector<16x128xf32>
    %129 = arith.addf %127, %128 : vector<16x128xf32>
    %cst_59 = arith.constant 5.000000e-01 : f32
    %130 = vector.broadcast %cst_59 : f32 to vector<16x128xf32>
    %131 = arith.mulf %130, %129 : vector<16x128xf32>
    %132 = arith.mulf %121, %54 : vector<16x128xf32>
    %133 = arith.mulf %113, %123 : vector<16x128xf32>
    %134 = arith.addf %132, %133 : vector<16x128xf32>
    %135 = math.tanh %134 : vector<16x128xf32>
    %136 = arith.mulf %131, %135 : vector<16x128xf32>
    %137 = arith.truncf %136 : vector<16x128xf32> to vector<16x128xbf16>
    %138 = arith.truncf %94 : vector<16x128xf32> to vector<16x128xbf16>
    %139 = tpu.concatenate %137, %138 in 1 : vector<16x128xbf16>, vector<16x128xbf16> -> vector<16x256xbf16>
    %c0_60 = arith.constant 0 : index
    %c0_61 = arith.constant 0 : index
    %140 = vector.load %arg6[%c0_60, %c0_61] : memref<256x512xbf16, #tpu.memory_space<vmem>>, vector<256x512xbf16>
    %cst_62 = arith.constant dense<0.000000e+00> : vector<16x512xf32>
    %141 = tpu.matmul %139, %140, %cst_62 {dimension_numbers = #tpu.dot_dimension_numbers<[1], [0], [0], [1], [0, 0, 1, 1], [], []>} : vector<16x256xbf16>, vector<256x512xbf16>, vector<16x512xf32> -> vector<16x512xf32>
    %142 = vector.broadcast %10 : vector<1x512xf32> to vector<16x512xf32>
    %143 = arith.addf %141, %142 : vector<16x512xf32>
    %144 = vector.extract_strided_slice %143 {offsets = [0, 0], sizes = [16, 128], strides = [1, 1]} : vector<16x512xf32> to vector<16x128xf32>
    %cst_63 = arith.constant 5.000000e-01 : f32
    %145 = vector.broadcast %cst_63 : f32 to vector<16x128xf32>
    %146 = arith.mulf %145, %144 : vector<16x128xf32>
    %147 = math.tanh %146 : vector<16x128xf32>
    %cst_64 = arith.constant 1.000000e+00 : f32
    %148 = vector.broadcast %cst_64 : f32 to vector<16x128xf32>
    %149 = arith.addf %147, %148 : vector<16x128xf32>
    %cst_65 = arith.constant 5.000000e-01 : f32
    %150 = vector.broadcast %cst_65 : f32 to vector<16x128xf32>
    %151 = arith.mulf %150, %149 : vector<16x128xf32>
    %152 = vector.extract_strided_slice %143 {offsets = [0, 128], sizes = [16, 128], strides = [1, 1]} : vector<16x512xf32> to vector<16x128xf32>
    %cst_66 = arith.constant 5.000000e-01 : f32
    %153 = vector.broadcast %cst_66 : f32 to vector<16x128xf32>
    %154 = arith.mulf %153, %152 : vector<16x128xf32>
    %155 = math.tanh %154 : vector<16x128xf32>
    %cst_67 = arith.constant 1.000000e+00 : f32
    %156 = vector.broadcast %cst_67 : f32 to vector<16x128xf32>
    %157 = arith.addf %155, %156 : vector<16x128xf32>
    %cst_68 = arith.constant 5.000000e-01 : f32
    %158 = vector.broadcast %cst_68 : f32 to vector<16x128xf32>
    %159 = arith.mulf %158, %157 : vector<16x128xf32>
    %160 = vector.extract_strided_slice %143 {offsets = [0, 256], sizes = [16, 128], strides = [1, 1]} : vector<16x512xf32> to vector<16x128xf32>
    %161 = math.tanh %160 : vector<16x128xf32>
    %162 = vector.extract_strided_slice %143 {offsets = [0, 384], sizes = [16, 128], strides = [1, 1]} : vector<16x512xf32> to vector<16x128xf32>
    %cst_69 = arith.constant 5.000000e-01 : f32
    %163 = vector.broadcast %cst_69 : f32 to vector<16x128xf32>
    %164 = arith.mulf %163, %162 : vector<16x128xf32>
    %165 = math.tanh %164 : vector<16x128xf32>
    %cst_70 = arith.constant 1.000000e+00 : f32
    %166 = vector.broadcast %cst_70 : f32 to vector<16x128xf32>
    %167 = arith.addf %165, %166 : vector<16x128xf32>
    %cst_71 = arith.constant 5.000000e-01 : f32
    %168 = vector.broadcast %cst_71 : f32 to vector<16x128xf32>
    %169 = arith.mulf %168, %167 : vector<16x128xf32>
    %170 = arith.mulf %159, %92 : vector<16x128xf32>
    %171 = arith.mulf %151, %161 : vector<16x128xf32>
    %172 = arith.addf %170, %171 : vector<16x128xf32>
    %173 = math.tanh %172 : vector<16x128xf32>
    %174 = arith.mulf %169, %173 : vector<16x128xf32>
    %c2_i32 = arith.constant 2 : i32
    %c16_i32_72 = arith.constant 16 : i32
    %175 = arith.muli %c2_i32, %c16_i32_72 : i32
    %176 = tpu.assume_multiple %175, 16 : i32
    %177 = arith.index_cast %176 : i32 to index
    %c0_73 = arith.constant 0 : index
    %178 = vector.load %arg11[%177, %c0_73] : memref<128x512xbf16, #tpu.memory_space<vmem>>, vector<16x512xbf16>
    %179 = arith.extf %178 : vector<16x512xbf16> to vector<16x512xf32>
    %180 = vector.broadcast %9 : vector<1x512xf32> to vector<16x512xf32>
    %181 = arith.addf %179, %180 : vector<16x512xf32>
    %182 = arith.truncf %136 : vector<16x128xf32> to vector<16x128xbf16>
    %c0_74 = arith.constant 0 : index
    %c0_75 = arith.constant 0 : index
    %183 = vector.load %arg4[%c0_74, %c0_75] : memref<128x512xbf16, #tpu.memory_space<vmem>>, vector<128x512xbf16>
    %cst_76 = arith.constant dense<0.000000e+00> : vector<16x512xf32>
    %184 = tpu.matmul %182, %183, %cst_76 {dimension_numbers = #tpu.dot_dimension_numbers<[1], [0], [0], [1], [0, 0, 1, 1], [], []>} : vector<16x128xbf16>, vector<128x512xbf16>, vector<16x512xf32> -> vector<16x512xf32>
    %185 = arith.addf %181, %184 : vector<16x512xf32>
    %186 = vector.extract_strided_slice %185 {offsets = [0, 0], sizes = [16, 128], strides = [1, 1]} : vector<16x512xf32> to vector<16x128xf32>
    %cst_77 = arith.constant 5.000000e-01 : f32
    %187 = vector.broadcast %cst_77 : f32 to vector<16x128xf32>
    %188 = arith.mulf %187, %186 : vector<16x128xf32>
    %189 = math.tanh %188 : vector<16x128xf32>
    %cst_78 = arith.constant 1.000000e+00 : f32
    %190 = vector.broadcast %cst_78 : f32 to vector<16x128xf32>
    %191 = arith.addf %189, %190 : vector<16x128xf32>
    %cst_79 = arith.constant 5.000000e-01 : f32
    %192 = vector.broadcast %cst_79 : f32 to vector<16x128xf32>
    %193 = arith.mulf %192, %191 : vector<16x128xf32>
    %194 = vector.extract_strided_slice %185 {offsets = [0, 128], sizes = [16, 128], strides = [1, 1]} : vector<16x512xf32> to vector<16x128xf32>
    %cst_80 = arith.constant 5.000000e-01 : f32
    %195 = vector.broadcast %cst_80 : f32 to vector<16x128xf32>
    %196 = arith.mulf %195, %194 : vector<16x128xf32>
    %197 = math.tanh %196 : vector<16x128xf32>
    %cst_81 = arith.constant 1.000000e+00 : f32
    %198 = vector.broadcast %cst_81 : f32 to vector<16x128xf32>
    %199 = arith.addf %197, %198 : vector<16x128xf32>
    %cst_82 = arith.constant 5.000000e-01 : f32
    %200 = vector.broadcast %cst_82 : f32 to vector<16x128xf32>
    %201 = arith.mulf %200, %199 : vector<16x128xf32>
    %202 = vector.extract_strided_slice %185 {offsets = [0, 256], sizes = [16, 128], strides = [1, 1]} : vector<16x512xf32> to vector<16x128xf32>
    %203 = math.tanh %202 : vector<16x128xf32>
    %204 = vector.extract_strided_slice %185 {offsets = [0, 384], sizes = [16, 128], strides = [1, 1]} : vector<16x512xf32> to vector<16x128xf32>
    %cst_83 = arith.constant 5.000000e-01 : f32
    %205 = vector.broadcast %cst_83 : f32 to vector<16x128xf32>
    %206 = arith.mulf %205, %204 : vector<16x128xf32>
    %207 = math.tanh %206 : vector<16x128xf32>
    %cst_84 = arith.constant 1.000000e+00 : f32
    %208 = vector.broadcast %cst_84 : f32 to vector<16x128xf32>
    %209 = arith.addf %207, %208 : vector<16x128xf32>
    %cst_85 = arith.constant 5.000000e-01 : f32
    %210 = vector.broadcast %cst_85 : f32 to vector<16x128xf32>
    %211 = arith.mulf %210, %209 : vector<16x128xf32>
    %212 = arith.mulf %201, %134 : vector<16x128xf32>
    %213 = arith.mulf %193, %203 : vector<16x128xf32>
    %214 = arith.addf %212, %213 : vector<16x128xf32>
    %215 = math.tanh %214 : vector<16x128xf32>
    %216 = arith.mulf %211, %215 : vector<16x128xf32>
    %217 = arith.truncf %216 : vector<16x128xf32> to vector<16x128xbf16>
    %218 = arith.truncf %174 : vector<16x128xf32> to vector<16x128xbf16>
    %219 = tpu.concatenate %217, %218 in 1 : vector<16x128xbf16>, vector<16x128xbf16> -> vector<16x256xbf16>
    %c0_86 = arith.constant 0 : index
    %c0_87 = arith.constant 0 : index
    %220 = vector.load %arg6[%c0_86, %c0_87] : memref<256x512xbf16, #tpu.memory_space<vmem>>, vector<256x512xbf16>
    %cst_88 = arith.constant dense<0.000000e+00> : vector<16x512xf32>
    %221 = tpu.matmul %219, %220, %cst_88 {dimension_numbers = #tpu.dot_dimension_numbers<[1], [0], [0], [1], [0, 0, 1, 1], [], []>} : vector<16x256xbf16>, vector<256x512xbf16>, vector<16x512xf32> -> vector<16x512xf32>
    %222 = vector.broadcast %10 : vector<1x512xf32> to vector<16x512xf32>
    %223 = arith.addf %221, %222 : vector<16x512xf32>
    %224 = vector.extract_strided_slice %223 {offsets = [0, 0], sizes = [16, 128], strides = [1, 1]} : vector<16x512xf32> to vector<16x128xf32>
    %cst_89 = arith.constant 5.000000e-01 : f32
    %225 = vector.broadcast %cst_89 : f32 to vector<16x128xf32>
    %226 = arith.mulf %225, %224 : vector<16x128xf32>
    %227 = math.tanh %226 : vector<16x128xf32>
    %cst_90 = arith.constant 1.000000e+00 : f32
    %228 = vector.broadcast %cst_90 : f32 to vector<16x128xf32>
    %229 = arith.addf %227, %228 : vector<16x128xf32>
    %cst_91 = arith.constant 5.000000e-01 : f32
    %230 = vector.broadcast %cst_91 : f32 to vector<16x128xf32>
    %231 = arith.mulf %230, %229 : vector<16x128xf32>
    %232 = vector.extract_strided_slice %223 {offsets = [0, 128], sizes = [16, 128], strides = [1, 1]} : vector<16x512xf32> to vector<16x128xf32>
    %cst_92 = arith.constant 5.000000e-01 : f32
    %233 = vector.broadcast %cst_92 : f32 to vector<16x128xf32>
    %234 = arith.mulf %233, %232 : vector<16x128xf32>
    %235 = math.tanh %234 : vector<16x128xf32>
    %cst_93 = arith.constant 1.000000e+00 : f32
    %236 = vector.broadcast %cst_93 : f32 to vector<16x128xf32>
    %237 = arith.addf %235, %236 : vector<16x128xf32>
    %cst_94 = arith.constant 5.000000e-01 : f32
    %238 = vector.broadcast %cst_94 : f32 to vector<16x128xf32>
    %239 = arith.mulf %238, %237 : vector<16x128xf32>
    %240 = vector.extract_strided_slice %223 {offsets = [0, 256], sizes = [16, 128], strides = [1, 1]} : vector<16x512xf32> to vector<16x128xf32>
    %241 = math.tanh %240 : vector<16x128xf32>
    %242 = vector.extract_strided_slice %223 {offsets = [0, 384], sizes = [16, 128], strides = [1, 1]} : vector<16x512xf32> to vector<16x128xf32>
    %cst_95 = arith.constant 5.000000e-01 : f32
    %243 = vector.broadcast %cst_95 : f32 to vector<16x128xf32>
    %244 = arith.mulf %243, %242 : vector<16x128xf32>
    %245 = math.tanh %244 : vector<16x128xf32>
    %cst_96 = arith.constant 1.000000e+00 : f32
    %246 = vector.broadcast %cst_96 : f32 to vector<16x128xf32>
    %247 = arith.addf %245, %246 : vector<16x128xf32>
    %cst_97 = arith.constant 5.000000e-01 : f32
    %248 = vector.broadcast %cst_97 : f32 to vector<16x128xf32>
    %249 = arith.mulf %248, %247 : vector<16x128xf32>
    %250 = arith.mulf %239, %172 : vector<16x128xf32>
    %251 = arith.mulf %231, %241 : vector<16x128xf32>
    %252 = arith.addf %250, %251 : vector<16x128xf32>
    %253 = math.tanh %252 : vector<16x128xf32>
    %254 = arith.mulf %249, %253 : vector<16x128xf32>
    %c3_i32 = arith.constant 3 : i32
    %c16_i32_98 = arith.constant 16 : i32
    %255 = arith.muli %c3_i32, %c16_i32_98 : i32
    %256 = tpu.assume_multiple %255, 16 : i32
    %257 = arith.index_cast %256 : i32 to index
    %c0_99 = arith.constant 0 : index
    %258 = vector.load %arg11[%257, %c0_99] : memref<128x512xbf16, #tpu.memory_space<vmem>>, vector<16x512xbf16>
    %259 = arith.extf %258 : vector<16x512xbf16> to vector<16x512xf32>
    %260 = vector.broadcast %9 : vector<1x512xf32> to vector<16x512xf32>
    %261 = arith.addf %259, %260 : vector<16x512xf32>
    %262 = arith.truncf %216 : vector<16x128xf32> to vector<16x128xbf16>
    %c0_100 = arith.constant 0 : index
    %c0_101 = arith.constant 0 : index
    %263 = vector.load %arg4[%c0_100, %c0_101] : memref<128x512xbf16, #tpu.memory_space<vmem>>, vector<128x512xbf16>
    %cst_102 = arith.constant dense<0.000000e+00> : vector<16x512xf32>
    %264 = tpu.matmul %262, %263, %cst_102 {dimension_numbers = #tpu.dot_dimension_numbers<[1], [0], [0], [1], [0, 0, 1, 1], [], []>} : vector<16x128xbf16>, vector<128x512xbf16>, vector<16x512xf32> -> vector<16x512xf32>
    %265 = arith.addf %261, %264 : vector<16x512xf32>
    %266 = vector.extract_strided_slice %265 {offsets = [0, 0], sizes = [16, 128], strides = [1, 1]} : vector<16x512xf32> to vector<16x128xf32>
    %cst_103 = arith.constant 5.000000e-01 : f32
    %267 = vector.broadcast %cst_103 : f32 to vector<16x128xf32>
    %268 = arith.mulf %267, %266 : vector<16x128xf32>
    %269 = math.tanh %268 : vector<16x128xf32>
    %cst_104 = arith.constant 1.000000e+00 : f32
    %270 = vector.broadcast %cst_104 : f32 to vector<16x128xf32>
    %271 = arith.addf %269, %270 : vector<16x128xf32>
    %cst_105 = arith.constant 5.000000e-01 : f32
    %272 = vector.broadcast %cst_105 : f32 to vector<16x128xf32>
    %273 = arith.mulf %272, %271 : vector<16x128xf32>
    %274 = vector.extract_strided_slice %265 {offsets = [0, 128], sizes = [16, 128], strides = [1, 1]} : vector<16x512xf32> to vector<16x128xf32>
    %cst_106 = arith.constant 5.000000e-01 : f32
    %275 = vector.broadcast %cst_106 : f32 to vector<16x128xf32>
    %276 = arith.mulf %275, %274 : vector<16x128xf32>
    %277 = math.tanh %276 : vector<16x128xf32>
    %cst_107 = arith.constant 1.000000e+00 : f32
    %278 = vector.broadcast %cst_107 : f32 to vector<16x128xf32>
    %279 = arith.addf %277, %278 : vector<16x128xf32>
    %cst_108 = arith.constant 5.000000e-01 : f32
    %280 = vector.broadcast %cst_108 : f32 to vector<16x128xf32>
    %281 = arith.mulf %280, %279 : vector<16x128xf32>
    %282 = vector.extract_strided_slice %265 {offsets = [0, 256], sizes = [16, 128], strides = [1, 1]} : vector<16x512xf32> to vector<16x128xf32>
    %283 = math.tanh %282 : vector<16x128xf32>
    %284 = vector.extract_strided_slice %265 {offsets = [0, 384], sizes = [16, 128], strides = [1, 1]} : vector<16x512xf32> to vector<16x128xf32>
    %cst_109 = arith.constant 5.000000e-01 : f32
    %285 = vector.broadcast %cst_109 : f32 to vector<16x128xf32>
    %286 = arith.mulf %285, %284 : vector<16x128xf32>
    %287 = math.tanh %286 : vector<16x128xf32>
    %cst_110 = arith.constant 1.000000e+00 : f32
    %288 = vector.broadcast %cst_110 : f32 to vector<16x128xf32>
    %289 = arith.addf %287, %288 : vector<16x128xf32>
    %cst_111 = arith.constant 5.000000e-01 : f32
    %290 = vector.broadcast %cst_111 : f32 to vector<16x128xf32>
    %291 = arith.mulf %290, %289 : vector<16x128xf32>
    %292 = arith.mulf %281, %214 : vector<16x128xf32>
    %293 = arith.mulf %273, %283 : vector<16x128xf32>
    %294 = arith.addf %292, %293 : vector<16x128xf32>
    %295 = math.tanh %294 : vector<16x128xf32>
    %296 = arith.mulf %291, %295 : vector<16x128xf32>
    %297 = arith.truncf %296 : vector<16x128xf32> to vector<16x128xbf16>
    %298 = arith.truncf %254 : vector<16x128xf32> to vector<16x128xbf16>
    %299 = tpu.concatenate %297, %298 in 1 : vector<16x128xbf16>, vector<16x128xbf16> -> vector<16x256xbf16>
    %c0_112 = arith.constant 0 : index
    %c0_113 = arith.constant 0 : index
    %300 = vector.load %arg6[%c0_112, %c0_113] : memref<256x512xbf16, #tpu.memory_space<vmem>>, vector<256x512xbf16>
    %cst_114 = arith.constant dense<0.000000e+00> : vector<16x512xf32>
    %301 = tpu.matmul %299, %300, %cst_114 {dimension_numbers = #tpu.dot_dimension_numbers<[1], [0], [0], [1], [0, 0, 1, 1], [], []>} : vector<16x256xbf16>, vector<256x512xbf16>, vector<16x512xf32> -> vector<16x512xf32>
    %302 = vector.broadcast %10 : vector<1x512xf32> to vector<16x512xf32>
    %303 = arith.addf %301, %302 : vector<16x512xf32>
    %304 = vector.extract_strided_slice %303 {offsets = [0, 0], sizes = [16, 128], strides = [1, 1]} : vector<16x512xf32> to vector<16x128xf32>
    %cst_115 = arith.constant 5.000000e-01 : f32
    %305 = vector.broadcast %cst_115 : f32 to vector<16x128xf32>
    %306 = arith.mulf %305, %304 : vector<16x128xf32>
    %307 = math.tanh %306 : vector<16x128xf32>
    %cst_116 = arith.constant 1.000000e+00 : f32
    %308 = vector.broadcast %cst_116 : f32 to vector<16x128xf32>
    %309 = arith.addf %307, %308 : vector<16x128xf32>
    %cst_117 = arith.constant 5.000000e-01 : f32
    %310 = vector.broadcast %cst_117 : f32 to vector<16x128xf32>
    %311 = arith.mulf %310, %309 : vector<16x128xf32>
    %312 = vector.extract_strided_slice %303 {offsets = [0, 128], sizes = [16, 128], strides = [1, 1]} : vector<16x512xf32> to vector<16x128xf32>
    %cst_118 = arith.constant 5.000000e-01 : f32
    %313 = vector.broadcast %cst_118 : f32 to vector<16x128xf32>
    %314 = arith.mulf %313, %312 : vector<16x128xf32>
    %315 = math.tanh %314 : vector<16x128xf32>
    %cst_119 = arith.constant 1.000000e+00 : f32
    %316 = vector.broadcast %cst_119 : f32 to vector<16x128xf32>
    %317 = arith.addf %315, %316 : vector<16x128xf32>
    %cst_120 = arith.constant 5.000000e-01 : f32
    %318 = vector.broadcast %cst_120 : f32 to vector<16x128xf32>
    %319 = arith.mulf %318, %317 : vector<16x128xf32>
    %320 = vector.extract_strided_slice %303 {offsets = [0, 256], sizes = [16, 128], strides = [1, 1]} : vector<16x512xf32> to vector<16x128xf32>
    %321 = math.tanh %320 : vector<16x128xf32>
    %322 = vector.extract_strided_slice %303 {offsets = [0, 384], sizes = [16, 128], strides = [1, 1]} : vector<16x512xf32> to vector<16x128xf32>
    %cst_121 = arith.constant 5.000000e-01 : f32
    %323 = vector.broadcast %cst_121 : f32 to vector<16x128xf32>
    %324 = arith.mulf %323, %322 : vector<16x128xf32>
    %325 = math.tanh %324 : vector<16x128xf32>
    %cst_122 = arith.constant 1.000000e+00 : f32
    %326 = vector.broadcast %cst_122 : f32 to vector<16x128xf32>
    %327 = arith.addf %325, %326 : vector<16x128xf32>
    %cst_123 = arith.constant 5.000000e-01 : f32
    %328 = vector.broadcast %cst_123 : f32 to vector<16x128xf32>
    %329 = arith.mulf %328, %327 : vector<16x128xf32>
    %330 = arith.mulf %319, %252 : vector<16x128xf32>
    %331 = arith.mulf %311, %321 : vector<16x128xf32>
    %332 = arith.addf %330, %331 : vector<16x128xf32>
    %333 = math.tanh %332 : vector<16x128xf32>
    %334 = arith.mulf %329, %333 : vector<16x128xf32>
    %c4_i32 = arith.constant 4 : i32
    %c16_i32_124 = arith.constant 16 : i32
    %335 = arith.muli %c4_i32, %c16_i32_124 : i32
    %336 = tpu.assume_multiple %335, 16 : i32
    %337 = arith.index_cast %336 : i32 to index
    %c0_125 = arith.constant 0 : index
    %338 = vector.load %arg11[%337, %c0_125] : memref<128x512xbf16, #tpu.memory_space<vmem>>, vector<16x512xbf16>
    %339 = arith.extf %338 : vector<16x512xbf16> to vector<16x512xf32>
    %340 = vector.broadcast %9 : vector<1x512xf32> to vector<16x512xf32>
    %341 = arith.addf %339, %340 : vector<16x512xf32>
    %342 = arith.truncf %296 : vector<16x128xf32> to vector<16x128xbf16>
    %c0_126 = arith.constant 0 : index
    %c0_127 = arith.constant 0 : index
    %343 = vector.load %arg4[%c0_126, %c0_127] : memref<128x512xbf16, #tpu.memory_space<vmem>>, vector<128x512xbf16>
    %cst_128 = arith.constant dense<0.000000e+00> : vector<16x512xf32>
    %344 = tpu.matmul %342, %343, %cst_128 {dimension_numbers = #tpu.dot_dimension_numbers<[1], [0], [0], [1], [0, 0, 1, 1], [], []>} : vector<16x128xbf16>, vector<128x512xbf16>, vector<16x512xf32> -> vector<16x512xf32>
    %345 = arith.addf %341, %344 : vector<16x512xf32>
    %346 = vector.extract_strided_slice %345 {offsets = [0, 0], sizes = [16, 128], strides = [1, 1]} : vector<16x512xf32> to vector<16x128xf32>
    %cst_129 = arith.constant 5.000000e-01 : f32
    %347 = vector.broadcast %cst_129 : f32 to vector<16x128xf32>
    %348 = arith.mulf %347, %346 : vector<16x128xf32>
    %349 = math.tanh %348 : vector<16x128xf32>
    %cst_130 = arith.constant 1.000000e+00 : f32
    %350 = vector.broadcast %cst_130 : f32 to vector<16x128xf32>
    %351 = arith.addf %349, %350 : vector<16x128xf32>
    %cst_131 = arith.constant 5.000000e-01 : f32
    %352 = vector.broadcast %cst_131 : f32 to vector<16x128xf32>
    %353 = arith.mulf %352, %351 : vector<16x128xf32>
    %354 = vector.extract_strided_slice %345 {offsets = [0, 128], sizes = [16, 128], strides = [1, 1]} : vector<16x512xf32> to vector<16x128xf32>
    %cst_132 = arith.constant 5.000000e-01 : f32
    %355 = vector.broadcast %cst_132 : f32 to vector<16x128xf32>
    %356 = arith.mulf %355, %354 : vector<16x128xf32>
    %357 = math.tanh %356 : vector<16x128xf32>
    %cst_133 = arith.constant 1.000000e+00 : f32
    %358 = vector.broadcast %cst_133 : f32 to vector<16x128xf32>
    %359 = arith.addf %357, %358 : vector<16x128xf32>
    %cst_134 = arith.constant 5.000000e-01 : f32
    %360 = vector.broadcast %cst_134 : f32 to vector<16x128xf32>
    %361 = arith.mulf %360, %359 : vector<16x128xf32>
    %362 = vector.extract_strided_slice %345 {offsets = [0, 256], sizes = [16, 128], strides = [1, 1]} : vector<16x512xf32> to vector<16x128xf32>
    %363 = math.tanh %362 : vector<16x128xf32>
    %364 = vector.extract_strided_slice %345 {offsets = [0, 384], sizes = [16, 128], strides = [1, 1]} : vector<16x512xf32> to vector<16x128xf32>
    %cst_135 = arith.constant 5.000000e-01 : f32
    %365 = vector.broadcast %cst_135 : f32 to vector<16x128xf32>
    %366 = arith.mulf %365, %364 : vector<16x128xf32>
    %367 = math.tanh %366 : vector<16x128xf32>
    %cst_136 = arith.constant 1.000000e+00 : f32
    %368 = vector.broadcast %cst_136 : f32 to vector<16x128xf32>
    %369 = arith.addf %367, %368 : vector<16x128xf32>
    %cst_137 = arith.constant 5.000000e-01 : f32
    %370 = vector.broadcast %cst_137 : f32 to vector<16x128xf32>
    %371 = arith.mulf %370, %369 : vector<16x128xf32>
    %372 = arith.mulf %361, %294 : vector<16x128xf32>
    %373 = arith.mulf %353, %363 : vector<16x128xf32>
    %374 = arith.addf %372, %373 : vector<16x128xf32>
    %375 = math.tanh %374 : vector<16x128xf32>
    %376 = arith.mulf %371, %375 : vector<16x128xf32>
    %377 = arith.truncf %376 : vector<16x128xf32> to vector<16x128xbf16>
    %378 = arith.truncf %334 : vector<16x128xf32> to vector<16x128xbf16>
    %379 = tpu.concatenate %377, %378 in 1 : vector<16x128xbf16>, vector<16x128xbf16> -> vector<16x256xbf16>
    %c0_138 = arith.constant 0 : index
    %c0_139 = arith.constant 0 : index
    %380 = vector.load %arg6[%c0_138, %c0_139] : memref<256x512xbf16, #tpu.memory_space<vmem>>, vector<256x512xbf16>
    %cst_140 = arith.constant dense<0.000000e+00> : vector<16x512xf32>
    %381 = tpu.matmul %379, %380, %cst_140 {dimension_numbers = #tpu.dot_dimension_numbers<[1], [0], [0], [1], [0, 0, 1, 1], [], []>} : vector<16x256xbf16>, vector<256x512xbf16>, vector<16x512xf32> -> vector<16x512xf32>
    %382 = vector.broadcast %10 : vector<1x512xf32> to vector<16x512xf32>
    %383 = arith.addf %381, %382 : vector<16x512xf32>
    %384 = vector.extract_strided_slice %383 {offsets = [0, 0], sizes = [16, 128], strides = [1, 1]} : vector<16x512xf32> to vector<16x128xf32>
    %cst_141 = arith.constant 5.000000e-01 : f32
    %385 = vector.broadcast %cst_141 : f32 to vector<16x128xf32>
    %386 = arith.mulf %385, %384 : vector<16x128xf32>
    %387 = math.tanh %386 : vector<16x128xf32>
    %cst_142 = arith.constant 1.000000e+00 : f32
    %388 = vector.broadcast %cst_142 : f32 to vector<16x128xf32>
    %389 = arith.addf %387, %388 : vector<16x128xf32>
    %cst_143 = arith.constant 5.000000e-01 : f32
    %390 = vector.broadcast %cst_143 : f32 to vector<16x128xf32>
    %391 = arith.mulf %390, %389 : vector<16x128xf32>
    %392 = vector.extract_strided_slice %383 {offsets = [0, 128], sizes = [16, 128], strides = [1, 1]} : vector<16x512xf32> to vector<16x128xf32>
    %cst_144 = arith.constant 5.000000e-01 : f32
    %393 = vector.broadcast %cst_144 : f32 to vector<16x128xf32>
    %394 = arith.mulf %393, %392 : vector<16x128xf32>
    %395 = math.tanh %394 : vector<16x128xf32>
    %cst_145 = arith.constant 1.000000e+00 : f32
    %396 = vector.broadcast %cst_145 : f32 to vector<16x128xf32>
    %397 = arith.addf %395, %396 : vector<16x128xf32>
    %cst_146 = arith.constant 5.000000e-01 : f32
    %398 = vector.broadcast %cst_146 : f32 to vector<16x128xf32>
    %399 = arith.mulf %398, %397 : vector<16x128xf32>
    %400 = vector.extract_strided_slice %383 {offsets = [0, 256], sizes = [16, 128], strides = [1, 1]} : vector<16x512xf32> to vector<16x128xf32>
    %401 = math.tanh %400 : vector<16x128xf32>
    %402 = vector.extract_strided_slice %383 {offsets = [0, 384], sizes = [16, 128], strides = [1, 1]} : vector<16x512xf32> to vector<16x128xf32>
    %cst_147 = arith.constant 5.000000e-01 : f32
    %403 = vector.broadcast %cst_147 : f32 to vector<16x128xf32>
    %404 = arith.mulf %403, %402 : vector<16x128xf32>
    %405 = math.tanh %404 : vector<16x128xf32>
    %cst_148 = arith.constant 1.000000e+00 : f32
    %406 = vector.broadcast %cst_148 : f32 to vector<16x128xf32>
    %407 = arith.addf %405, %406 : vector<16x128xf32>
    %cst_149 = arith.constant 5.000000e-01 : f32
    %408 = vector.broadcast %cst_149 : f32 to vector<16x128xf32>
    %409 = arith.mulf %408, %407 : vector<16x128xf32>
    %410 = arith.mulf %399, %332 : vector<16x128xf32>
    %411 = arith.mulf %391, %401 : vector<16x128xf32>
    %412 = arith.addf %410, %411 : vector<16x128xf32>
    %413 = math.tanh %412 : vector<16x128xf32>
    %414 = arith.mulf %409, %413 : vector<16x128xf32>
    %c5_i32 = arith.constant 5 : i32
    %c16_i32_150 = arith.constant 16 : i32
    %415 = arith.muli %c5_i32, %c16_i32_150 : i32
    %416 = tpu.assume_multiple %415, 16 : i32
    %417 = arith.index_cast %416 : i32 to index
    %c0_151 = arith.constant 0 : index
    %418 = vector.load %arg11[%417, %c0_151] : memref<128x512xbf16, #tpu.memory_space<vmem>>, vector<16x512xbf16>
    %419 = arith.extf %418 : vector<16x512xbf16> to vector<16x512xf32>
    %420 = vector.broadcast %9 : vector<1x512xf32> to vector<16x512xf32>
    %421 = arith.addf %419, %420 : vector<16x512xf32>
    %422 = arith.truncf %376 : vector<16x128xf32> to vector<16x128xbf16>
    %c0_152 = arith.constant 0 : index
    %c0_153 = arith.constant 0 : index
    %423 = vector.load %arg4[%c0_152, %c0_153] : memref<128x512xbf16, #tpu.memory_space<vmem>>, vector<128x512xbf16>
    %cst_154 = arith.constant dense<0.000000e+00> : vector<16x512xf32>
    %424 = tpu.matmul %422, %423, %cst_154 {dimension_numbers = #tpu.dot_dimension_numbers<[1], [0], [0], [1], [0, 0, 1, 1], [], []>} : vector<16x128xbf16>, vector<128x512xbf16>, vector<16x512xf32> -> vector<16x512xf32>
    %425 = arith.addf %421, %424 : vector<16x512xf32>
    %426 = vector.extract_strided_slice %425 {offsets = [0, 0], sizes = [16, 128], strides = [1, 1]} : vector<16x512xf32> to vector<16x128xf32>
    %cst_155 = arith.constant 5.000000e-01 : f32
    %427 = vector.broadcast %cst_155 : f32 to vector<16x128xf32>
    %428 = arith.mulf %427, %426 : vector<16x128xf32>
    %429 = math.tanh %428 : vector<16x128xf32>
    %cst_156 = arith.constant 1.000000e+00 : f32
    %430 = vector.broadcast %cst_156 : f32 to vector<16x128xf32>
    %431 = arith.addf %429, %430 : vector<16x128xf32>
    %cst_157 = arith.constant 5.000000e-01 : f32
    %432 = vector.broadcast %cst_157 : f32 to vector<16x128xf32>
    %433 = arith.mulf %432, %431 : vector<16x128xf32>
    %434 = vector.extract_strided_slice %425 {offsets = [0, 128], sizes = [16, 128], strides = [1, 1]} : vector<16x512xf32> to vector<16x128xf32>
    %cst_158 = arith.constant 5.000000e-01 : f32
    %435 = vector.broadcast %cst_158 : f32 to vector<16x128xf32>
    %436 = arith.mulf %435, %434 : vector<16x128xf32>
    %437 = math.tanh %436 : vector<16x128xf32>
    %cst_159 = arith.constant 1.000000e+00 : f32
    %438 = vector.broadcast %cst_159 : f32 to vector<16x128xf32>
    %439 = arith.addf %437, %438 : vector<16x128xf32>
    %cst_160 = arith.constant 5.000000e-01 : f32
    %440 = vector.broadcast %cst_160 : f32 to vector<16x128xf32>
    %441 = arith.mulf %440, %439 : vector<16x128xf32>
    %442 = vector.extract_strided_slice %425 {offsets = [0, 256], sizes = [16, 128], strides = [1, 1]} : vector<16x512xf32> to vector<16x128xf32>
    %443 = math.tanh %442 : vector<16x128xf32>
    %444 = vector.extract_strided_slice %425 {offsets = [0, 384], sizes = [16, 128], strides = [1, 1]} : vector<16x512xf32> to vector<16x128xf32>
    %cst_161 = arith.constant 5.000000e-01 : f32
    %445 = vector.broadcast %cst_161 : f32 to vector<16x128xf32>
    %446 = arith.mulf %445, %444 : vector<16x128xf32>
    %447 = math.tanh %446 : vector<16x128xf32>
    %cst_162 = arith.constant 1.000000e+00 : f32
    %448 = vector.broadcast %cst_162 : f32 to vector<16x128xf32>
    %449 = arith.addf %447, %448 : vector<16x128xf32>
    %cst_163 = arith.constant 5.000000e-01 : f32
    %450 = vector.broadcast %cst_163 : f32 to vector<16x128xf32>
    %451 = arith.mulf %450, %449 : vector<16x128xf32>
    %452 = arith.mulf %441, %374 : vector<16x128xf32>
    %453 = arith.mulf %433, %443 : vector<16x128xf32>
    %454 = arith.addf %452, %453 : vector<16x128xf32>
    %455 = math.tanh %454 : vector<16x128xf32>
    %456 = arith.mulf %451, %455 : vector<16x128xf32>
    %457 = arith.truncf %456 : vector<16x128xf32> to vector<16x128xbf16>
    %458 = arith.truncf %414 : vector<16x128xf32> to vector<16x128xbf16>
    %459 = tpu.concatenate %457, %458 in 1 : vector<16x128xbf16>, vector<16x128xbf16> -> vector<16x256xbf16>
    %c0_164 = arith.constant 0 : index
    %c0_165 = arith.constant 0 : index
    %460 = vector.load %arg6[%c0_164, %c0_165] : memref<256x512xbf16, #tpu.memory_space<vmem>>, vector<256x512xbf16>
    %cst_166 = arith.constant dense<0.000000e+00> : vector<16x512xf32>
    %461 = tpu.matmul %459, %460, %cst_166 {dimension_numbers = #tpu.dot_dimension_numbers<[1], [0], [0], [1], [0, 0, 1, 1], [], []>} : vector<16x256xbf16>, vector<256x512xbf16>, vector<16x512xf32> -> vector<16x512xf32>
    %462 = vector.broadcast %10 : vector<1x512xf32> to vector<16x512xf32>
    %463 = arith.addf %461, %462 : vector<16x512xf32>
    %464 = vector.extract_strided_slice %463 {offsets = [0, 0], sizes = [16, 128], strides = [1, 1]} : vector<16x512xf32> to vector<16x128xf32>
    %cst_167 = arith.constant 5.000000e-01 : f32
    %465 = vector.broadcast %cst_167 : f32 to vector<16x128xf32>
    %466 = arith.mulf %465, %464 : vector<16x128xf32>
    %467 = math.tanh %466 : vector<16x128xf32>
    %cst_168 = arith.constant 1.000000e+00 : f32
    %468 = vector.broadcast %cst_168 : f32 to vector<16x128xf32>
    %469 = arith.addf %467, %468 : vector<16x128xf32>
    %cst_169 = arith.constant 5.000000e-01 : f32
    %470 = vector.broadcast %cst_169 : f32 to vector<16x128xf32>
    %471 = arith.mulf %470, %469 : vector<16x128xf32>
    %472 = vector.extract_strided_slice %463 {offsets = [0, 128], sizes = [16, 128], strides = [1, 1]} : vector<16x512xf32> to vector<16x128xf32>
    %cst_170 = arith.constant 5.000000e-01 : f32
    %473 = vector.broadcast %cst_170 : f32 to vector<16x128xf32>
    %474 = arith.mulf %473, %472 : vector<16x128xf32>
    %475 = math.tanh %474 : vector<16x128xf32>
    %cst_171 = arith.constant 1.000000e+00 : f32
    %476 = vector.broadcast %cst_171 : f32 to vector<16x128xf32>
    %477 = arith.addf %475, %476 : vector<16x128xf32>
    %cst_172 = arith.constant 5.000000e-01 : f32
    %478 = vector.broadcast %cst_172 : f32 to vector<16x128xf32>
    %479 = arith.mulf %478, %477 : vector<16x128xf32>
    %480 = vector.extract_strided_slice %463 {offsets = [0, 256], sizes = [16, 128], strides = [1, 1]} : vector<16x512xf32> to vector<16x128xf32>
    %481 = math.tanh %480 : vector<16x128xf32>
    %482 = vector.extract_strided_slice %463 {offsets = [0, 384], sizes = [16, 128], strides = [1, 1]} : vector<16x512xf32> to vector<16x128xf32>
    %cst_173 = arith.constant 5.000000e-01 : f32
    %483 = vector.broadcast %cst_173 : f32 to vector<16x128xf32>
    %484 = arith.mulf %483, %482 : vector<16x128xf32>
    %485 = math.tanh %484 : vector<16x128xf32>
    %cst_174 = arith.constant 1.000000e+00 : f32
    %486 = vector.broadcast %cst_174 : f32 to vector<16x128xf32>
    %487 = arith.addf %485, %486 : vector<16x128xf32>
    %cst_175 = arith.constant 5.000000e-01 : f32
    %488 = vector.broadcast %cst_175 : f32 to vector<16x128xf32>
    %489 = arith.mulf %488, %487 : vector<16x128xf32>
    %490 = arith.mulf %479, %412 : vector<16x128xf32>
    %491 = arith.mulf %471, %481 : vector<16x128xf32>
    %492 = arith.addf %490, %491 : vector<16x128xf32>
    %493 = math.tanh %492 : vector<16x128xf32>
    %494 = arith.mulf %489, %493 : vector<16x128xf32>
    %c6_i32 = arith.constant 6 : i32
    %c16_i32_176 = arith.constant 16 : i32
    %495 = arith.muli %c6_i32, %c16_i32_176 : i32
    %496 = tpu.assume_multiple %495, 16 : i32
    %497 = arith.index_cast %496 : i32 to index
    %c0_177 = arith.constant 0 : index
    %498 = vector.load %arg11[%497, %c0_177] : memref<128x512xbf16, #tpu.memory_space<vmem>>, vector<16x512xbf16>
    %499 = arith.extf %498 : vector<16x512xbf16> to vector<16x512xf32>
    %500 = vector.broadcast %9 : vector<1x512xf32> to vector<16x512xf32>
    %501 = arith.addf %499, %500 : vector<16x512xf32>
    %502 = arith.truncf %456 : vector<16x128xf32> to vector<16x128xbf16>
    %c0_178 = arith.constant 0 : index
    %c0_179 = arith.constant 0 : index
    %503 = vector.load %arg4[%c0_178, %c0_179] : memref<128x512xbf16, #tpu.memory_space<vmem>>, vector<128x512xbf16>
    %cst_180 = arith.constant dense<0.000000e+00> : vector<16x512xf32>
    %504 = tpu.matmul %502, %503, %cst_180 {dimension_numbers = #tpu.dot_dimension_numbers<[1], [0], [0], [1], [0, 0, 1, 1], [], []>} : vector<16x128xbf16>, vector<128x512xbf16>, vector<16x512xf32> -> vector<16x512xf32>
    %505 = arith.addf %501, %504 : vector<16x512xf32>
    %506 = vector.extract_strided_slice %505 {offsets = [0, 0], sizes = [16, 128], strides = [1, 1]} : vector<16x512xf32> to vector<16x128xf32>
    %cst_181 = arith.constant 5.000000e-01 : f32
    %507 = vector.broadcast %cst_181 : f32 to vector<16x128xf32>
    %508 = arith.mulf %507, %506 : vector<16x128xf32>
    %509 = math.tanh %508 : vector<16x128xf32>
    %cst_182 = arith.constant 1.000000e+00 : f32
    %510 = vector.broadcast %cst_182 : f32 to vector<16x128xf32>
    %511 = arith.addf %509, %510 : vector<16x128xf32>
    %cst_183 = arith.constant 5.000000e-01 : f32
    %512 = vector.broadcast %cst_183 : f32 to vector<16x128xf32>
    %513 = arith.mulf %512, %511 : vector<16x128xf32>
    %514 = vector.extract_strided_slice %505 {offsets = [0, 128], sizes = [16, 128], strides = [1, 1]} : vector<16x512xf32> to vector<16x128xf32>
    %cst_184 = arith.constant 5.000000e-01 : f32
    %515 = vector.broadcast %cst_184 : f32 to vector<16x128xf32>
    %516 = arith.mulf %515, %514 : vector<16x128xf32>
    %517 = math.tanh %516 : vector<16x128xf32>
    %cst_185 = arith.constant 1.000000e+00 : f32
    %518 = vector.broadcast %cst_185 : f32 to vector<16x128xf32>
    %519 = arith.addf %517, %518 : vector<16x128xf32>
    %cst_186 = arith.constant 5.000000e-01 : f32
    %520 = vector.broadcast %cst_186 : f32 to vector<16x128xf32>
    %521 = arith.mulf %520, %519 : vector<16x128xf32>
    %522 = vector.extract_strided_slice %505 {offsets = [0, 256], sizes = [16, 128], strides = [1, 1]} : vector<16x512xf32> to vector<16x128xf32>
    %523 = math.tanh %522 : vector<16x128xf32>
    %524 = vector.extract_strided_slice %505 {offsets = [0, 384], sizes = [16, 128], strides = [1, 1]} : vector<16x512xf32> to vector<16x128xf32>
    %cst_187 = arith.constant 5.000000e-01 : f32
    %525 = vector.broadcast %cst_187 : f32 to vector<16x128xf32>
    %526 = arith.mulf %525, %524 : vector<16x128xf32>
    %527 = math.tanh %526 : vector<16x128xf32>
    %cst_188 = arith.constant 1.000000e+00 : f32
    %528 = vector.broadcast %cst_188 : f32 to vector<16x128xf32>
    %529 = arith.addf %527, %528 : vector<16x128xf32>
    %cst_189 = arith.constant 5.000000e-01 : f32
    %530 = vector.broadcast %cst_189 : f32 to vector<16x128xf32>
    %531 = arith.mulf %530, %529 : vector<16x128xf32>
    %532 = arith.mulf %521, %454 : vector<16x128xf32>
    %533 = arith.mulf %513, %523 : vector<16x128xf32>
    %534 = arith.addf %532, %533 : vector<16x128xf32>
    %535 = math.tanh %534 : vector<16x128xf32>
    %536 = arith.mulf %531, %535 : vector<16x128xf32>
    %537 = arith.truncf %536 : vector<16x128xf32> to vector<16x128xbf16>
    %538 = arith.truncf %494 : vector<16x128xf32> to vector<16x128xbf16>
    %539 = tpu.concatenate %537, %538 in 1 : vector<16x128xbf16>, vector<16x128xbf16> -> vector<16x256xbf16>
    %c0_190 = arith.constant 0 : index
    %c0_191 = arith.constant 0 : index
    %540 = vector.load %arg6[%c0_190, %c0_191] : memref<256x512xbf16, #tpu.memory_space<vmem>>, vector<256x512xbf16>
    %cst_192 = arith.constant dense<0.000000e+00> : vector<16x512xf32>
    %541 = tpu.matmul %539, %540, %cst_192 {dimension_numbers = #tpu.dot_dimension_numbers<[1], [0], [0], [1], [0, 0, 1, 1], [], []>} : vector<16x256xbf16>, vector<256x512xbf16>, vector<16x512xf32> -> vector<16x512xf32>
    %542 = vector.broadcast %10 : vector<1x512xf32> to vector<16x512xf32>
    %543 = arith.addf %541, %542 : vector<16x512xf32>
    %544 = vector.extract_strided_slice %543 {offsets = [0, 0], sizes = [16, 128], strides = [1, 1]} : vector<16x512xf32> to vector<16x128xf32>
    %cst_193 = arith.constant 5.000000e-01 : f32
    %545 = vector.broadcast %cst_193 : f32 to vector<16x128xf32>
    %546 = arith.mulf %545, %544 : vector<16x128xf32>
    %547 = math.tanh %546 : vector<16x128xf32>
    %cst_194 = arith.constant 1.000000e+00 : f32
    %548 = vector.broadcast %cst_194 : f32 to vector<16x128xf32>
    %549 = arith.addf %547, %548 : vector<16x128xf32>
    %cst_195 = arith.constant 5.000000e-01 : f32
    %550 = vector.broadcast %cst_195 : f32 to vector<16x128xf32>
    %551 = arith.mulf %550, %549 : vector<16x128xf32>
    %552 = vector.extract_strided_slice %543 {offsets = [0, 128], sizes = [16, 128], strides = [1, 1]} : vector<16x512xf32> to vector<16x128xf32>
    %cst_196 = arith.constant 5.000000e-01 : f32
    %553 = vector.broadcast %cst_196 : f32 to vector<16x128xf32>
    %554 = arith.mulf %553, %552 : vector<16x128xf32>
    %555 = math.tanh %554 : vector<16x128xf32>
    %cst_197 = arith.constant 1.000000e+00 : f32
    %556 = vector.broadcast %cst_197 : f32 to vector<16x128xf32>
    %557 = arith.addf %555, %556 : vector<16x128xf32>
    %cst_198 = arith.constant 5.000000e-01 : f32
    %558 = vector.broadcast %cst_198 : f32 to vector<16x128xf32>
    %559 = arith.mulf %558, %557 : vector<16x128xf32>
    %560 = vector.extract_strided_slice %543 {offsets = [0, 256], sizes = [16, 128], strides = [1, 1]} : vector<16x512xf32> to vector<16x128xf32>
    %561 = math.tanh %560 : vector<16x128xf32>
    %562 = vector.extract_strided_slice %543 {offsets = [0, 384], sizes = [16, 128], strides = [1, 1]} : vector<16x512xf32> to vector<16x128xf32>
    %cst_199 = arith.constant 5.000000e-01 : f32
    %563 = vector.broadcast %cst_199 : f32 to vector<16x128xf32>
    %564 = arith.mulf %563, %562 : vector<16x128xf32>
    %565 = math.tanh %564 : vector<16x128xf32>
    %cst_200 = arith.constant 1.000000e+00 : f32
    %566 = vector.broadcast %cst_200 : f32 to vector<16x128xf32>
    %567 = arith.addf %565, %566 : vector<16x128xf32>
    %cst_201 = arith.constant 5.000000e-01 : f32
    %568 = vector.broadcast %cst_201 : f32 to vector<16x128xf32>
    %569 = arith.mulf %568, %567 : vector<16x128xf32>
    %570 = arith.mulf %559, %492 : vector<16x128xf32>
    %571 = arith.mulf %551, %561 : vector<16x128xf32>
    %572 = arith.addf %570, %571 : vector<16x128xf32>
    %573 = math.tanh %572 : vector<16x128xf32>
    %574 = arith.mulf %569, %573 : vector<16x128xf32>
    %c7_i32 = arith.constant 7 : i32
    %c16_i32_202 = arith.constant 16 : i32
    %575 = arith.muli %c7_i32, %c16_i32_202 : i32
    %576 = tpu.assume_multiple %575, 16 : i32
    %577 = arith.index_cast %576 : i32 to index
    %c0_203 = arith.constant 0 : index
    %578 = vector.load %arg11[%577, %c0_203] : memref<128x512xbf16, #tpu.memory_space<vmem>>, vector<16x512xbf16>
    %579 = arith.extf %578 : vector<16x512xbf16> to vector<16x512xf32>
    %580 = vector.broadcast %9 : vector<1x512xf32> to vector<16x512xf32>
    %581 = arith.addf %579, %580 : vector<16x512xf32>
    %582 = arith.truncf %536 : vector<16x128xf32> to vector<16x128xbf16>
    %c0_204 = arith.constant 0 : index
    %c0_205 = arith.constant 0 : index
    %583 = vector.load %arg4[%c0_204, %c0_205] : memref<128x512xbf16, #tpu.memory_space<vmem>>, vector<128x512xbf16>
    %cst_206 = arith.constant dense<0.000000e+00> : vector<16x512xf32>
    %584 = tpu.matmul %582, %583, %cst_206 {dimension_numbers = #tpu.dot_dimension_numbers<[1], [0], [0], [1], [0, 0, 1, 1], [], []>} : vector<16x128xbf16>, vector<128x512xbf16>, vector<16x512xf32> -> vector<16x512xf32>
    %585 = arith.addf %581, %584 : vector<16x512xf32>
    %586 = vector.extract_strided_slice %585 {offsets = [0, 0], sizes = [16, 128], strides = [1, 1]} : vector<16x512xf32> to vector<16x128xf32>
    %cst_207 = arith.constant 5.000000e-01 : f32
    %587 = vector.broadcast %cst_207 : f32 to vector<16x128xf32>
    %588 = arith.mulf %587, %586 : vector<16x128xf32>
    %589 = math.tanh %588 : vector<16x128xf32>
    %cst_208 = arith.constant 1.000000e+00 : f32
    %590 = vector.broadcast %cst_208 : f32 to vector<16x128xf32>
    %591 = arith.addf %589, %590 : vector<16x128xf32>
    %cst_209 = arith.constant 5.000000e-01 : f32
    %592 = vector.broadcast %cst_209 : f32 to vector<16x128xf32>
    %593 = arith.mulf %592, %591 : vector<16x128xf32>
    %594 = vector.extract_strided_slice %585 {offsets = [0, 128], sizes = [16, 128], strides = [1, 1]} : vector<16x512xf32> to vector<16x128xf32>
    %cst_210 = arith.constant 5.000000e-01 : f32
    %595 = vector.broadcast %cst_210 : f32 to vector<16x128xf32>
    %596 = arith.mulf %595, %594 : vector<16x128xf32>
    %597 = math.tanh %596 : vector<16x128xf32>
    %cst_211 = arith.constant 1.000000e+00 : f32
    %598 = vector.broadcast %cst_211 : f32 to vector<16x128xf32>
    %599 = arith.addf %597, %598 : vector<16x128xf32>
    %cst_212 = arith.constant 5.000000e-01 : f32
    %600 = vector.broadcast %cst_212 : f32 to vector<16x128xf32>
    %601 = arith.mulf %600, %599 : vector<16x128xf32>
    %602 = vector.extract_strided_slice %585 {offsets = [0, 256], sizes = [16, 128], strides = [1, 1]} : vector<16x512xf32> to vector<16x128xf32>
    %603 = math.tanh %602 : vector<16x128xf32>
    %604 = vector.extract_strided_slice %585 {offsets = [0, 384], sizes = [16, 128], strides = [1, 1]} : vector<16x512xf32> to vector<16x128xf32>
    %cst_213 = arith.constant 5.000000e-01 : f32
    %605 = vector.broadcast %cst_213 : f32 to vector<16x128xf32>
    %606 = arith.mulf %605, %604 : vector<16x128xf32>
    %607 = math.tanh %606 : vector<16x128xf32>
    %cst_214 = arith.constant 1.000000e+00 : f32
    %608 = vector.broadcast %cst_214 : f32 to vector<16x128xf32>
    %609 = arith.addf %607, %608 : vector<16x128xf32>
    %cst_215 = arith.constant 5.000000e-01 : f32
    %610 = vector.broadcast %cst_215 : f32 to vector<16x128xf32>
    %611 = arith.mulf %610, %609 : vector<16x128xf32>
    %612 = arith.mulf %601, %534 : vector<16x128xf32>
    %613 = arith.mulf %593, %603 : vector<16x128xf32>
    %614 = arith.addf %612, %613 : vector<16x128xf32>
    %615 = math.tanh %614 : vector<16x128xf32>
    %616 = arith.mulf %611, %615 : vector<16x128xf32>
    %617 = arith.truncf %616 : vector<16x128xf32> to vector<16x128xbf16>
    %618 = arith.truncf %574 : vector<16x128xf32> to vector<16x128xbf16>
    %619 = tpu.concatenate %617, %618 in 1 : vector<16x128xbf16>, vector<16x128xbf16> -> vector<16x256xbf16>
    %c0_216 = arith.constant 0 : index
    %c0_217 = arith.constant 0 : index
    %620 = vector.load %arg6[%c0_216, %c0_217] : memref<256x512xbf16, #tpu.memory_space<vmem>>, vector<256x512xbf16>
    %cst_218 = arith.constant dense<0.000000e+00> : vector<16x512xf32>
    %621 = tpu.matmul %619, %620, %cst_218 {dimension_numbers = #tpu.dot_dimension_numbers<[1], [0], [0], [1], [0, 0, 1, 1], [], []>} : vector<16x256xbf16>, vector<256x512xbf16>, vector<16x512xf32> -> vector<16x512xf32>
    %622 = vector.broadcast %10 : vector<1x512xf32> to vector<16x512xf32>
    %623 = arith.addf %621, %622 : vector<16x512xf32>
    %624 = vector.extract_strided_slice %623 {offsets = [0, 0], sizes = [16, 128], strides = [1, 1]} : vector<16x512xf32> to vector<16x128xf32>
    %cst_219 = arith.constant 5.000000e-01 : f32
    %625 = vector.broadcast %cst_219 : f32 to vector<16x128xf32>
    %626 = arith.mulf %625, %624 : vector<16x128xf32>
    %627 = math.tanh %626 : vector<16x128xf32>
    %cst_220 = arith.constant 1.000000e+00 : f32
    %628 = vector.broadcast %cst_220 : f32 to vector<16x128xf32>
    %629 = arith.addf %627, %628 : vector<16x128xf32>
    %cst_221 = arith.constant 5.000000e-01 : f32
    %630 = vector.broadcast %cst_221 : f32 to vector<16x128xf32>
    %631 = arith.mulf %630, %629 : vector<16x128xf32>
    %632 = vector.extract_strided_slice %623 {offsets = [0, 128], sizes = [16, 128], strides = [1, 1]} : vector<16x512xf32> to vector<16x128xf32>
    %cst_222 = arith.constant 5.000000e-01 : f32
    %633 = vector.broadcast %cst_222 : f32 to vector<16x128xf32>
    %634 = arith.mulf %633, %632 : vector<16x128xf32>
    %635 = math.tanh %634 : vector<16x128xf32>
    %cst_223 = arith.constant 1.000000e+00 : f32
    %636 = vector.broadcast %cst_223 : f32 to vector<16x128xf32>
    %637 = arith.addf %635, %636 : vector<16x128xf32>
    %cst_224 = arith.constant 5.000000e-01 : f32
    %638 = vector.broadcast %cst_224 : f32 to vector<16x128xf32>
    %639 = arith.mulf %638, %637 : vector<16x128xf32>
    %640 = vector.extract_strided_slice %623 {offsets = [0, 256], sizes = [16, 128], strides = [1, 1]} : vector<16x512xf32> to vector<16x128xf32>
    %641 = math.tanh %640 : vector<16x128xf32>
    %642 = vector.extract_strided_slice %623 {offsets = [0, 384], sizes = [16, 128], strides = [1, 1]} : vector<16x512xf32> to vector<16x128xf32>
    %cst_225 = arith.constant 5.000000e-01 : f32
    %643 = vector.broadcast %cst_225 : f32 to vector<16x128xf32>
    %644 = arith.mulf %643, %642 : vector<16x128xf32>
    %645 = math.tanh %644 : vector<16x128xf32>
    %cst_226 = arith.constant 1.000000e+00 : f32
    %646 = vector.broadcast %cst_226 : f32 to vector<16x128xf32>
    %647 = arith.addf %645, %646 : vector<16x128xf32>
    %cst_227 = arith.constant 5.000000e-01 : f32
    %648 = vector.broadcast %cst_227 : f32 to vector<16x128xf32>
    %649 = arith.mulf %648, %647 : vector<16x128xf32>
    %650 = arith.mulf %639, %572 : vector<16x128xf32>
    %651 = arith.mulf %631, %641 : vector<16x128xf32>
    %652 = arith.addf %650, %651 : vector<16x128xf32>
    %653 = math.tanh %652 : vector<16x128xf32>
    %654 = arith.mulf %649, %653 : vector<16x128xf32>
    %c8_i32 = arith.constant 8 : i32
    %c0_228 = arith.constant 0 : index
    %c0_229 = arith.constant 0 : index
    %655 = vector.load %arg12[%c0_228, %c0_229] : memref<16x128xf32, #tpu.memory_space<vmem>>, vector<16x128xf32>
    tpu.vector_store %arg12[%c0_228, %c0_229], %616 {strides = array<i32>} : memref<16x128xf32, #tpu.memory_space<vmem>>, vector<16x128xf32>,
    %c0_230 = arith.constant 0 : index
    %c0_231 = arith.constant 0 : index
    %656 = vector.load %arg13[%c0_230, %c0_231] : memref<16x128xf32, #tpu.memory_space<vmem>>, vector<16x128xf32>
    tpu.vector_store %arg13[%c0_230, %c0_231], %614 {strides = array<i32>} : memref<16x128xf32, #tpu.memory_space<vmem>>, vector<16x128xf32>,
    %c0_232 = arith.constant 0 : index
    %c0_233 = arith.constant 0 : index
    %657 = vector.load %arg14[%c0_232, %c0_233] : memref<16x128xf32, #tpu.memory_space<vmem>>, vector<16x128xf32>
    tpu.vector_store %arg14[%c0_232, %c0_233], %654 {strides = array<i32>} : memref<16x128xf32, #tpu.memory_space<vmem>>, vector<16x128xf32>,
    %c0_234 = arith.constant 0 : index
    %c0_235 = arith.constant 0 : index
    %658 = vector.load %arg15[%c0_234, %c0_235] : memref<16x128xf32, #tpu.memory_space<vmem>>, vector<16x128xf32>
    tpu.vector_store %arg15[%c0_234, %c0_235], %652 {strides = array<i32>} : memref<16x128xf32, #tpu.memory_space<vmem>>, vector<16x128xf32>,
    %c0_i32_236 = arith.constant 0 : i32
    %659 = arith.cmpi eq, %arg1, %c0_i32_236 : i32
    %660 = arith.extui %659 : i1 to i32
    %c0_i32_237 = arith.constant 0 : i32
    %661 = arith.cmpi ne, %660, %c0_i32_237 : i32
    scf.if %661 {
      %c0_238 = arith.constant 0 : index
      %c0_239 = arith.constant 0 : index
      %662 = vector.load %arg8[%c0_238, %c0_239] : memref<1x128xf32, #tpu.memory_space<vmem>>, vector<1x128xf32>
      %cst_240 = arith.constant dense<0.000000e+00> : vector<1x16xf32>
      %663 = tpu.matmul %662, %654, %cst_240 {dimension_numbers = #tpu.dot_dimension_numbers<[1], [1], [0], [0], [0, 0, 1, 0], [], []>} : vector<1x128xf32>, vector<16x128xf32>, vector<1x16xf32> -> vector<1x16xf32>
      %c0_241 = arith.constant 0 : index
      %c0_242 = arith.constant 0 : index
      %664 = vector.load %arg9[%c0_241, %c0_242] : memref<1x1xf32, #tpu.memory_space<vmem>>, vector<1x1xf32>
      %665 = vector.broadcast %664 : vector<1x1xf32> to vector<1x16xf32>
      %666 = arith.addf %663, %665 : vector<1x16xf32>
      %c0_243 = arith.constant 0 : index
      %c0_244 = arith.constant 0 : index
      %c0_245 = arith.constant 0 : index
      %667 = vector.load %arg10[%c0_243, %c0_244, %c0_245] : memref<1x1x16xf32, #tpu.memory_space<vmem>>, vector<1x1x16xf32>
      %668 = vector.shape_cast %667 : vector<1x1x16xf32> to vector<1x16xf32>
      %669 = vector.shape_cast %666 : vector<1x16xf32> to vector<1x1x16xf32>
      tpu.vector_store %arg10[%c0_243, %c0_244, %c0_245], %669 {strides = array<i32>} : memref<1x1x16xf32, #tpu.memory_space<vmem>>, vector<1x1x16xf32>,
    } else {
    }
    return
  }
  func.func @transform_0(%arg0: i32, %arg1: i32) -> (i32, i32, i32, i32) {
    %c0_i32 = arith.constant 0 : i32
    %c0_i32_0 = arith.constant 0 : i32
    %c0_i32_1 = arith.constant 0 : i32
    return %arg0, %arg1, %c0_i32, %c0_i32_0 : i32, i32, i32, i32
  }
  func.func @transform_1(%arg0: i32, %arg1: i32) -> (i32, i32) {
    %c0_i32 = arith.constant 0 : i32
    %c0_i32_0 = arith.constant 0 : i32
    %c0_i32_1 = arith.constant 0 : i32
    return %c0_i32, %c0_i32_0 : i32, i32
  }
  func.func @transform_2(%arg0: i32, %arg1: i32) -> (i32, i32) {
    %c0_i32 = arith.constant 0 : i32
    %c0_i32_0 = arith.constant 0 : i32
    %c0_i32_1 = arith.constant 0 : i32
    return %c0_i32, %c0_i32_0 : i32, i32
  }
  func.func @transform_3(%arg0: i32, %arg1: i32) -> (i32, i32) {
    %c0_i32 = arith.constant 0 : i32
    %c0_i32_0 = arith.constant 0 : i32
    %c0_i32_1 = arith.constant 0 : i32
    return %c0_i32, %c0_i32_0 : i32, i32
  }
  func.func @transform_4(%arg0: i32, %arg1: i32) -> (i32, i32) {
    %c0_i32 = arith.constant 0 : i32
    %c0_i32_0 = arith.constant 0 : i32
    %c0_i32_1 = arith.constant 0 : i32
    return %c0_i32, %c0_i32_0 : i32, i32
  }
  func.func @transform_5(%arg0: i32, %arg1: i32) -> (i32, i32) {
    %c0_i32 = arith.constant 0 : i32
    %c0_i32_0 = arith.constant 0 : i32
    %c0_i32_1 = arith.constant 0 : i32
    return %c0_i32, %c0_i32_0 : i32, i32
  }
  func.func @transform_6(%arg0: i32, %arg1: i32) -> (i32, i32) {
    %c0_i32 = arith.constant 0 : i32
    %c0_i32_0 = arith.constant 0 : i32
    %c0_i32_1 = arith.constant 0 : i32
    return %c0_i32, %c0_i32_0 : i32, i32
  }
  func.func @transform_7(%arg0: i32, %arg1: i32) -> (i32, i32) {
    %c0_i32 = arith.constant 0 : i32
    %c0_i32_0 = arith.constant 0 : i32
    %c0_i32_1 = arith.constant 0 : i32
    return %c0_i32, %c0_i32_0 : i32, i32
  }
  func.func @transform_8(%arg0: i32, %arg1: i32) -> (i32, i32, i32) {
    %c0_i32 = arith.constant 0 : i32
    %c0_i32_0 = arith.constant 0 : i32
    %c0_i32_1 = arith.constant 0 : i32
    return %arg0, %c0_i32, %c0_i32_0 : i32, i32, i32
  }
}

</mosaic_0001>

<llo_original>
// kernel: tpu_custom_call.1
$region0: #{tpu_custom_call.1}
  #allocation0 [shape = 'u32[]', space=smem, size = 0x4, offset = 0x4, fixed_abs, tag = 'smem constant byte address 0x4 - core index']
  #allocation1 [shape = 'u32[72,128]{1,0:T(1,128)}', space=vmem, size = 0x9000, scoped, tag = 'internal scratch']
  #allocation2 [shape = 'bf16[128,512]{1,0:T(8,128)(2,1)}', space=vmem, size = 0x20000, scoped, tag = 'scratch operand']
  #allocation3 [shape = 'f32[16,128]{1,0:T(8,128)}', space=vmem, size = 0x2000, scoped, tag = 'scratch operand']
  #allocation4 [shape = 'f32[16,128]{1,0:T(8,128)}', space=vmem, size = 0x2000, scoped, tag = 'scratch operand']
  #allocation5 [shape = 'f32[16,128]{1,0:T(8,128)}', space=vmem, size = 0x2000, scoped, tag = 'scratch operand']
  #allocation6 [shape = 'f32[16,128]{1,0:T(8,128)}', space=vmem, size = 0x2000, scoped, tag = 'scratch operand']
  #allocation7 [shape = 'f32[1,1]{1,0:T(1,128)S(1)}', space=vmem, size = 0x200, scoped, tag = 'scoped memory for tpu_custom_call.1']
  %s0 = inlined_call_operand.vmem [shape: bf16[1,1,128,32], index: 0, kind: input, shape index: {}]
  %s1 = inlined_call_operand.vmem [shape: bf16[32,512], index: 1, kind: input, shape index: {}]
  %s2 = inlined_call_operand.hbm [shape: bf16[128,512], index: 2, kind: input, shape index: {}]
  %s3 = inlined_call_operand.vmem [shape: f32[1,512], index: 3, kind: input, shape index: {}]
  %s4 = inlined_call_operand.hbm [shape: bf16[256,512], index: 4, kind: input, shape index: {}]
  %s5 = inlined_call_operand.vmem [shape: f32[1,512], index: 5, kind: input, shape index: {}]
  %s6 = inlined_call_operand.vmem [shape: f32[1,128], index: 6, kind: input, shape index: {}]
  %s7 = inlined_call_operand.<no memory space> [shape: f32[1,1], index: 7, kind: input, shape index: {}]
  %s8 = inlined_call_operand.hbm [shape: f32[1,1,16], index: 8, kind: output, shape index: {}]
  %s9 = sld [smem:[#allocation0]]
  $region58: #{tpu_custom_call.1} parent=0
    _
  %s11 = ssub.s32 1, %s9
  %s12 = scalar_select 0, %s11, %s9
  %v13 = vstv %s7
  %14 = vst [vmem:[#allocation7] sm:$0x1] %v13
  $region1: #{tpu_custom_call.1} parent=0
    #allocation8 [shape = 'u8[131072]{0}', space=vmem, size = 0x20000, scoped, tag = 'input window, operand 2, single buffered']
    #allocation9 [shape = 's32[1]{0}', space=sflag, size = 0x4, scoped, tag = 'scoped memory for tpu_custom_call.1']
    #allocation10 [shape = 's32[1]{0}', space=sflag, size = 0x4, scoped, tag = 'scoped memory for tpu_custom_call.1']
    #allocation11 [shape = 'u8[262144]{0}', space=vmem, size = 0x40000, scoped, tag = 'input window, operand 4, single buffered']
    #allocation12 [shape = 's32[1]{0}', space=sflag, size = 0x4, scoped, tag = 'scoped memory for tpu_custom_call.1']
    #allocation13 [shape = 'u8[512]{0}', space=vmem, size = 0x400, scoped, tag = 'output window, operand 0, single buffered']
    %15 = vsyncpa [#allocation9], 0
    %16 = vsyncpa [#allocation12], 0
    %17 = vsyncpa [#allocation10], 0
    // Predicated region
    $region2: #{tpu_custom_call.1} parent=1 // pred_check
      _
    $region3: #{tpu_custom_call.1} parent=1 // pred_check_branch
      %19 = sbr.rel (0) target = $region5
    $region4: #{tpu_custom_call.1} parent=1 // pred_region
      _
    $region5: #{tpu_custom_call.1} parent=1 // pred_fallthru
      _
    // Predicated region
    $region6: #{tpu_custom_call.1} parent=1 // pred_check
      _
    $region7: #{tpu_custom_call.1} parent=1 // pred_check_branch
      %21 = sbr.rel (0) target = $region9
    $region8: #{tpu_custom_call.1} parent=1 // pred_region
      _
    $region9: #{tpu_custom_call.1} parent=1 // pred_fallthru
      _
    // Predicated region
    $region10: #{tpu_custom_call.1} parent=1 // pred_check
      _
    $region11: #{tpu_custom_call.1} parent=1 // pred_check_branch
      %23 = sbr.rel (0) target = $region13
    $region12: #{tpu_custom_call.1} parent=1 // pred_region
      %25 = vsyncadd [#allocation9], 0
      %s26 = sshll.u32 %s2, 4
      %s27 = int_to_ptr.hbm [resolvable:$true] %s26
      %s28 = sshll.u32 [#allocation8], 4
      %s29 = int_to_ptr.vmem [resolvable:$true] %s28
      %34 = dma.hbm_to_vmem [thread:$0]  %s27, 4096, %s29, [#allocation9], 256, 256, 16
    $region13: #{tpu_custom_call.1} parent=1 // pred_fallthru
      _
    // Predicated region
    $region14: #{tpu_custom_call.1} parent=1 // pred_check
      _
    $region15: #{tpu_custom_call.1} parent=1 // pred_check_branch
      %36 = sbr.rel (0) target = $region17
    $region16: #{tpu_custom_call.1} parent=1 // pred_region
      _
    $region17: #{tpu_custom_call.1} parent=1 // pred_fallthru
      _
    // Predicated region
    $region18: #{tpu_custom_call.1} parent=1 // pred_check
      _
    $region19: #{tpu_custom_call.1} parent=1 // pred_check_branch
      %38 = sbr.rel (0) target = $region21
    $region20: #{tpu_custom_call.1} parent=1 // pred_region
      %40 = vsyncadd [#allocation12], 0
      %s41 = sshll.u32 %s4, 4
      %s42 = int_to_ptr.hbm [resolvable:$true] %s41
      %s43 = sshll.u32 [#allocation11], 4
      %s44 = int_to_ptr.vmem [resolvable:$true] %s43
      %49 = dma.hbm_to_vmem [thread:$0]  %s42, 8192, %s44, [#allocation12], 256, 256, 16
    $region21: #{tpu_custom_call.1} parent=1 // pred_fallthru
      _
    // Predicated region
    $region22: #{tpu_custom_call.1} parent=1 // pred_check
      _
    $region23: #{tpu_custom_call.1} parent=1 // pred_check_branch
      %51 = sbr.rel (0) target = $region25
    $region24: #{tpu_custom_call.1} parent=1 // pred_region
      _
    $region25: #{tpu_custom_call.1} parent=1 // pred_fallthru
      _
    // Predicated region
    $region26: #{tpu_custom_call.1} parent=1 // pred_check
      _
    $region27: #{tpu_custom_call.1} parent=1 // pred_check_branch
      %53 = sbr.rel (0) target = $region29
    $region28: #{tpu_custom_call.1} parent=1 // pred_region
      _
    $region29: #{tpu_custom_call.1} parent=1 // pred_fallthru
      _
    // Predicated region
    $region30: #{tpu_custom_call.1} parent=1 // pred_check
      _
    $region31: #{tpu_custom_call.1} parent=1 // pred_check_branch
      %55 = sbr.rel (0) target = $region33
    $region32: #{tpu_custom_call.1} parent=1 // pred_region
      _
    $region33: #{tpu_custom_call.1} parent=1 // pred_fallthru
      _
    // Predicated region
    $region34: #{tpu_custom_call.1} parent=1 // pred_check
      _
    $region35: #{tpu_custom_call.1} parent=1 // pred_check_branch
      %57 = sbr.rel (0) target = $region37
    $region36: #{tpu_custom_call.1} parent=1 // pred_region
      %59 = dma.done [#allocation9], 4096
    $region37: #{tpu_custom_call.1} parent=1 // pred_fallthru
      _
    // Predicated region
    $region38: #{tpu_custom_call.1} parent=1 // pred_check
      _
    $region39: #{tpu_custom_call.1} parent=1 // pred_check_branch
      %61 = sbr.rel (0) target = $region41
    $region40: #{tpu_custom_call.1} parent=1 // pred_region
      %63 = dma.done [#allocation12], 8192
    $region41: #{tpu_custom_call.1} parent=1 // pred_fallthru
      _
    %p65 = scmp.eq.s32.totalorder 0, 0
    // Predicated region
    $region42: #{tpu_custom_call.1} parent=1 // pred_check
      %p66 = pneg %p65
    $region43: #{tpu_custom_call.1} parent=1 // pred_check_branch
      %68 = sbr.rel (%p66) target = $region45
    $region44: #{tpu_custom_call.1} parent=1 // pred_region
      %69 = vst [vmem:[#allocation3] sm:$0xff] 0.0
      %70 = vst [vmem:[#allocation3 + $0x8] sm:$0xff] 0.0
      %71 = vst [vmem:[#allocation4] sm:$0xff] 0.0
      %72 = vst [vmem:[#allocation4 + $0x8] sm:$0xff] 0.0
      %73 = vst [vmem:[#allocation5] sm:$0xff] 0.0
      %74 = vst [vmem:[#allocation5 + $0x8] sm:$0xff] 0.0
      %75 = vst [vmem:[#allocation6] sm:$0xff] 0.0
      %76 = vst [vmem:[#allocation6 + $0x8] sm:$0xff] 0.0
    $region45: #{tpu_custom_call.1} parent=1 // pred_fallthru
      _
    %v77 = vld [vmem:[%s0] sm:$0xf]
    %v78 = vld [vmem:[%s0 + $0x4] sm:$0xf]
    %v79 = vld [vmem:[%s0 + $0x8] sm:$0xf]
    %v80 = vld [vmem:[%s0 + $0xc] sm:$0xf]
    %v81 = vld [vmem:[%s0 + $0x10] sm:$0xf]
    %v82 = vld [vmem:[%s0 + $0x14] sm:$0xf]
    %v83 = vld [vmem:[%s0 + $0x18] sm:$0xf]
    %v84 = vld [vmem:[%s0 + $0x1c] sm:$0xf]
    %v85 = vld [vmem:[%s0 + $0x20] sm:$0xf]
    %v86 = vld [vmem:[%s0 + $0x24] sm:$0xf]
    %v87 = vld [vmem:[%s0 + $0x28] sm:$0xf]
    %v88 = vld [vmem:[%s0 + $0x2c] sm:$0xf]
    %v89 = vld [vmem:[%s0 + $0x30] sm:$0xf]
    %v90 = vld [vmem:[%s0 + $0x34] sm:$0xf]
    %v91 = vld [vmem:[%s0 + $0x38] sm:$0xf]
    %v92 = vld [vmem:[%s0 + $0x3c] sm:$0xf]
    %v93 = vld [vmem:[%s1] sm:$0xff]
    %v94 = vld [vmem:[%s1 + $0x8] sm:$0xff]
    %v95 = vld [vmem:[%s1 + $0x10] sm:$0xff]
    %v96 = vld [vmem:[%s1 + $0x18] sm:$0xff]
    %v97 = vld [vmem:[%s1 + $0x20] sm:$0xff]
    %v98 = vld [vmem:[%s1 + $0x28] sm:$0xff]
    %v99 = vld [vmem:[%s1 + $0x30] sm:$0xff]
    %v100 = vld [vmem:[%s1 + $0x38] sm:$0xff]
    %v117 = vunpack.c.l.b16 %v77
    %v118 = vunpack.c.l.b16 %v78
    %v119 = vunpack.c.l.b16 %v79
    %v120 = vunpack.c.l.b16 %v80
    %v121 = vunpack.c.l.b16 %v81
    %v122 = vunpack.c.l.b16 %v82
    %v123 = vunpack.c.l.b16 %v83
    %v124 = vunpack.c.l.b16 %v84
    %v125 = vunpack.c.l.b16 %v85
    %v126 = vunpack.c.l.b16 %v86
    %v127 = vunpack.c.l.b16 %v87
    %v128 = vunpack.c.l.b16 %v88
    %v129 = vunpack.c.l.b16 %v89
    %v130 = vunpack.c.l.b16 %v90
    %v131 = vunpack.c.l.b16 %v91
    %v132 = vunpack.c.l.b16 %v92
    %v133 = vpack.c.b16 %v118, %v117
    %v134 = vpack.c.b16 %v120, %v119
    %v135 = vpack.c.b16 %v122, %v121
    %v136 = vpack.c.b16 %v124, %v123
    %v137 = vpack.c.b16 %v126, %v125
    %v138 = vpack.c.b16 %v128, %v127
    %v139 = vpack.c.b16 %v130, %v129
    %v140 = vpack.c.b16 %v132, %v131
    %v149 = vunpack.c.l.b16 %v93
    %v150 = vunpack.c.h.b16 %v93
    %v151 = vunpack.c.l.b16 %v94
    %v152 = vunpack.c.h.b16 %v94
    %v153 = vunpack.c.l.b16 %v95
    %v154 = vunpack.c.h.b16 %v95
    %v155 = vunpack.c.l.b16 %v96
    %v156 = vunpack.c.h.b16 %v96
    %v157 = vunpack.c.l.b16 %v97
    %v158 = vunpack.c.h.b16 %v97
    %v159 = vunpack.c.l.b16 %v98
    %v160 = vunpack.c.h.b16 %v98
    %v161 = vunpack.c.l.b16 %v99
    %v162 = vunpack.c.h.b16 %v99
    %v163 = vunpack.c.l.b16 %v100
    %v164 = vunpack.c.h.b16 %v100
    %v165 = vpack.c.b16 %v153, %v149
    %v166 = vpack.c.b16 %v154, %v150
    %v167 = vpack.c.b16 %v155, %v151
    %v168 = vpack.c.b16 %v156, %v152
    %v169 = vpack.c.b16 %v161, %v157
    %v170 = vpack.c.b16 %v162, %v158
    %v171 = vpack.c.b16 %v163, %v159
    %v172 = vpack.c.b16 %v164, %v160
    %vm181 = vcmask 261120
    %v183 = vsel %vm181, %v133, 0
    %v186 = vsel %vm181, %v134, 0
    %v189 = vsel %vm181, %v135, 0
    %v192 = vsel %vm181, %v136, 0
    %v195 = vsel %vm181, %v137, 0
    %v198 = vsel %vm181, %v138, 0
    %v201 = vsel %vm181, %v139, 0
    %v204 = vsel %vm181, %v140, 0
    %206 = vmatpush.bf16.msra.mxu0 0
    %207 = vmatpush.bf16.msra.mxu0 0
    %208 = vmatpush.bf16.msra.mxu0 0
    %209 = vmatpush.bf16.msra.mxu0 0
    %210 = vmatpush.bf16.msra.mxu0 0
    %211 = vmatpush.bf16.msra.mxu0 0
    %212 = vmatpush.bf16.msra.mxu0 %v169
    %213 = vmatpush.bf16.msra.mxu0 %v165
    %214 = vmatmul.bf16.gmra.mxu0 %v183
    %v215 = vpop.f32.mrf.mxu0
    %v216 = vadd.f32 0.0, %v215
    %v217 = vpop.f32.mrf.mxu0
    %v218 = vadd.f32 0.0, %v217
    %219 = vmatmul.bf16.gmra.mxu0 %v186
    %v220 = vpop.f32.mrf.mxu0
    %v221 = vadd.f32 0.0, %v220
    %v222 = vpop.f32.mrf.mxu0
    %v223 = vadd.f32 0.0, %v222
    %224 = vmatmul.bf16.gmra.mxu0 %v189
    %v225 = vpop.f32.mrf.mxu0
    %v226 = vadd.f32 0.0, %v225
    %v227 = vpop.f32.mrf.mxu0
    %v228 = vadd.f32 0.0, %v227
    %229 = vmatmul.bf16.gmra.mxu0 %v192
    %v230 = vpop.f32.mrf.mxu0
    %v231 = vadd.f32 0.0, %v230
    %v232 = vpop.f32.mrf.mxu0
    %v233 = vadd.f32 0.0, %v232
    %234 = vmatmul.bf16.gmra.mxu0 %v195
    %v235 = vpop.f32.mrf.mxu0
    %v236 = vadd.f32 0.0, %v235
    %v237 = vpop.f32.mrf.mxu0
    %v238 = vadd.f32 0.0, %v237
    %239 = vmatmul.bf16.gmra.mxu0 %v198
    %v240 = vpop.f32.mrf.mxu0
    %v241 = vadd.f32 0.0, %v240
    %v242 = vpop.f32.mrf.mxu0
    %v243 = vadd.f32 0.0, %v242
    %244 = vmatmul.bf16.gmra.mxu0 %v201
    %v245 = vpop.f32.mrf.mxu0
    %v246 = vadd.f32 0.0, %v245
    %v247 = vpop.f32.mrf.mxu0
    %v248 = vadd.f32 0.0, %v247
    %249 = vmatmul.bf16.gmra.mxu0 %v204
    %v250 = vpop.f32.mrf.mxu0
    %v251 = vadd.f32 0.0, %v250
    %v252 = vpop.f32.mrf.mxu0
    %v253 = vadd.f32 0.0, %v252
    %254 = vdwg.mxu0
    %255 = vmatpush.bf16.msra.mxu0 0
    %256 = vmatpush.bf16.msra.mxu0 0
    %257 = vmatpush.bf16.msra.mxu0 0
    %258 = vmatpush.bf16.msra.mxu0 0
    %259 = vmatpush.bf16.msra.mxu0 0
    %260 = vmatpush.bf16.msra.mxu0 0
    %261 = vmatpush.bf16.msra.mxu0 %v170
    %262 = vmatpush.bf16.msra.mxu0 %v166
    %263 = vmatmul.bf16.gmra.mxu0 %v183
    %v264 = vpop.f32.mrf.mxu0
    %v265 = vadd.f32 0.0, %v264
    %v266 = vpop.f32.mrf.mxu0
    %v267 = vadd.f32 0.0, %v266
    %268 = vmatmul.bf16.gmra.mxu0 %v186
    %v269 = vpop.f32.mrf.mxu0
    %v270 = vadd.f32 0.0, %v269
    %v271 = vpop.f32.mrf.mxu0
    %v272 = vadd.f32 0.0, %v271
    %273 = vmatmul.bf16.gmra.mxu0 %v189
    %v274 = vpop.f32.mrf.mxu0
    %v275 = vadd.f32 0.0, %v274
    %v276 = vpop.f32.mrf.mxu0
    %v277 = vadd.f32 0.0, %v276
    %278 = vmatmul.bf16.gmra.mxu0 %v192
    %v279 = vpop.f32.mrf.mxu0
    %v280 = vadd.f32 0.0, %v279
    %v281 = vpop.f32.mrf.mxu0
    %v282 = vadd.f32 0.0, %v281
    %283 = vmatmul.bf16.gmra.mxu0 %v195
    %v284 = vpop.f32.mrf.mxu0
    %v285 = vadd.f32 0.0, %v284
    %v286 = vpop.f32.mrf.mxu0
    %v287 = vadd.f32 0.0, %v286
    %288 = vmatmul.bf16.gmra.mxu0 %v198
    %v289 = vpop.f32.mrf.mxu0
    %v290 = vadd.f32 0.0, %v289
    %v291 = vpop.f32.mrf.mxu0
    %v292 = vadd.f32 0.0, %v291
    %293 = vmatmul.bf16.gmra.mxu0 %v201
    %v294 = vpop.f32.mrf.mxu0
    %v295 = vadd.f32 0.0, %v294
    %v296 = vpop.f32.mrf.mxu0
    %v297 = vadd.f32 0.0, %v296
    %298 = vmatmul.bf16.gmra.mxu0 %v204
    %v299 = vpop.f32.mrf.mxu0
    %v300 = vadd.f32 0.0, %v299
    %v301 = vpop.f32.mrf.mxu0
    %v302 = vadd.f32 0.0, %v301
    %303 = vdwg.mxu0
    %304 = vmatpush.bf16.msra.mxu0 0
    %305 = vmatpush.bf16.msra.mxu0 0
    %306 = vmatpush.bf16.msra.mxu0 0
    %307 = vmatpush.bf16.msra.mxu0 0
    %308 = vmatpush.bf16.msra.mxu0 0
    %309 = vmatpush.bf16.msra.mxu0 0
    %310 = vmatpush.bf16.msra.mxu0 %v171
    %311 = vmatpush.bf16.msra.mxu0 %v167
    %312 = vmatmul.bf16.gmra.mxu0 %v183
    %v313 = vpop.f32.mrf.mxu0
    %v314 = vadd.f32 0.0, %v313
    %v315 = vpop.f32.mrf.mxu0
    %v316 = vadd.f32 0.0, %v315
    %317 = vmatmul.bf16.gmra.mxu0 %v186
    %v318 = vpop.f32.mrf.mxu0
    %v319 = vadd.f32 0.0, %v318
    %v320 = vpop.f32.mrf.mxu0
    %v321 = vadd.f32 0.0, %v320
    %322 = vmatmul.bf16.gmra.mxu0 %v189
    %v323 = vpop.f32.mrf.mxu0
    %v324 = vadd.f32 0.0, %v323
    %v325 = vpop.f32.mrf.mxu0
    %v326 = vadd.f32 0.0, %v325
    %327 = vmatmul.bf16.gmra.mxu0 %v192
    %v328 = vpop.f32.mrf.mxu0
    %v329 = vadd.f32 0.0, %v328
    %v330 = vpop.f32.mrf.mxu0
    %v331 = vadd.f32 0.0, %v330
    %332 = vmatmul.bf16.gmra.mxu0 %v195
    %v333 = vpop.f32.mrf.mxu0
    %v334 = vadd.f32 0.0, %v333
    %v335 = vpop.f32.mrf.mxu0
    %v336 = vadd.f32 0.0, %v335
    %337 = vmatmul.bf16.gmra.mxu0 %v198
    %v338 = vpop.f32.mrf.mxu0
    %v339 = vadd.f32 0.0, %v338
    %v340 = vpop.f32.mrf.mxu0
    %v341 = vadd.f32 0.0, %v340
    %342 = vmatmul.bf16.gmra.mxu0 %v201
    %v343 = vpop.f32.mrf.mxu0
    %v344 = vadd.f32 0.0, %v343
    %v345 = vpop.f32.mrf.mxu0
    %v346 = vadd.f32 0.0, %v345
    %347 = vmatmul.bf16.gmra.mxu0 %v204
    %v348 = vpop.f32.mrf.mxu0
    %v349 = vadd.f32 0.0, %v348
    %v350 = vpop.f32.mrf.mxu0
    %v351 = vadd.f32 0.0, %v350
    %352 = vdwg.mxu0
    %353 = vmatpush.bf16.msra.mxu0 0
    %354 = vmatpush.bf16.msra.mxu0 0
    %355 = vmatpush.bf16.msra.mxu0 0
    %356 = vmatpush.bf16.msra.mxu0 0
    %357 = vmatpush.bf16.msra.mxu0 0
    %358 = vmatpush.bf16.msra.mxu0 0
    %359 = vmatpush.bf16.msra.mxu0 %v172
    %360 = vmatpush.bf16.msra.mxu0 %v168
    %361 = vmatmul.bf16.gmra.mxu0 %v183
    %v362 = vpop.f32.mrf.mxu0
    %v363 = vadd.f32 0.0, %v362
    %v364 = vpop.f32.mrf.mxu0
    %v365 = vadd.f32 0.0, %v364
    %366 = vmatmul.bf16.gmra.mxu0 %v186
    %v367 = vpop.f32.mrf.mxu0
    %v368 = vadd.f32 0.0, %v367
    %v369 = vpop.f32.mrf.mxu0
    %v370 = vadd.f32 0.0, %v369
    %371 = vmatmul.bf16.gmra.mxu0 %v189
    %v372 = vpop.f32.mrf.mxu0
    %v373 = vadd.f32 0.0, %v372
    %v374 = vpop.f32.mrf.mxu0
    %v375 = vadd.f32 0.0, %v374
    %376 = vmatmul.bf16.gmra.mxu0 %v192
    %v377 = vpop.f32.mrf.mxu0
    %v378 = vadd.f32 0.0, %v377
    %v379 = vpop.f32.mrf.mxu0
    %v380 = vadd.f32 0.0, %v379
    %381 = vmatmul.bf16.gmra.mxu0 %v195
    %v382 = vpop.f32.mrf.mxu0
    %v383 = vadd.f32 0.0, %v382
    %v384 = vpop.f32.mrf.mxu0
    %v385 = vadd.f32 0.0, %v384
    %386 = vmatmul.bf16.gmra.mxu0 %v198
    %v387 = vpop.f32.mrf.mxu0
    %v388 = vadd.f32 0.0, %v387
    %v389 = vpop.f32.mrf.mxu0
    %v390 = vadd.f32 0.0, %v389
    %391 = vmatmul.bf16.gmra.mxu0 %v201
    %v392 = vpop.f32.mrf.mxu0
    %v393 = vadd.f32 0.0, %v392
    %v394 = vpop.f32.mrf.mxu0
    %v395 = vadd.f32 0.0, %v394
    %396 = vmatmul.bf16.gmra.mxu0 %v204
    %v397 = vpop.f32.mrf.mxu0
    %v398 = vadd.f32 0.0, %v397
    %v399 = vpop.f32.mrf.mxu0
    %v400 = vadd.f32 0.0, %v399
    %401 = vdwg.mxu0
    %v402 = vpack.c.bf16 %v265, %v216
    %v403 = vpack.c.bf16 %v363, %v314
    %v404 = vpack.c.bf16 %v267, %v218
    %v405 = vpack.c.bf16 %v365, %v316
    %v406 = vpack.c.bf16 %v270, %v221
    %v407 = vpack.c.bf16 %v368, %v319
    %v408 = vpack.c.bf16 %v272, %v223
    %v409 = vpack.c.bf16 %v370, %v321
    %v410 = vpack.c.bf16 %v275, %v226
    %v411 = vpack.c.bf16 %v373, %v324
    %v412 = vpack.c.bf16 %v277, %v228
    %v413 = vpack.c.bf16 %v375, %v326
    %v414 = vpack.c.bf16 %v280, %v231
    %v415 = vpack.c.bf16 %v378, %v329
    %v416 = vpack.c.bf16 %v282, %v233
    %v417 = vpack.c.bf16 %v380, %v331
    %v418 = vpack.c.bf16 %v285, %v236
    %v419 = vpack.c.bf16 %v383, %v334
    %v420 = vpack.c.bf16 %v287, %v238
    %v421 = vpack.c.bf16 %v385, %v336
    %v422 = vpack.c.bf16 %v290, %v241
    %v423 = vpack.c.bf16 %v388, %v339
    %v424 = vpack.c.bf16 %v292, %v243
    %v425 = vpack.c.bf16 %v390, %v341
    %v426 = vpack.c.bf16 %v295, %v246
    %v427 = vpack.c.bf16 %v393, %v344
    %v428 = vpack.c.bf16 %v297, %v248
    %v429 = vpack.c.bf16 %v395, %v346
    %v430 = vpack.c.bf16 %v300, %v251
    %v431 = vpack.c.bf16 %v398, %v349
    %v432 = vpack.c.bf16 %v302, %v253
    %v433 = vpack.c.bf16 %v400, %v351
    %434 = vst [vmem:[#allocation2] sm:$0xff] %v402
    %435 = vst [vmem:[#allocation2 + $0x8] sm:$0xff] %v403
    %436 = vst [vmem:[#allocation2 + $0x10] sm:$0xff] %v404
    %437 = vst [vmem:[#allocation2 + $0x18] sm:$0xff] %v405
    %438 = vst [vmem:[#allocation2 + $0x20] sm:$0xff] %v406
    %439 = vst [vmem:[#allocation2 + $0x28] sm:$0xff] %v407
    %440 = vst [vmem:[#allocation2 + $0x30] sm:$0xff] %v408
    %441 = vst [vmem:[#allocation2 + $0x38] sm:$0xff] %v409
    %442 = vst [vmem:[#allocation2 + $0x40] sm:$0xff] %v410
    %443 = vst [vmem:[#allocation2 + $0x48] sm:$0xff] %v411
    %444 = vst [vmem:[#allocation2 + $0x50] sm:$0xff] %v412
    %445 = vst [vmem:[#allocation2 + $0x58] sm:$0xff] %v413
    %446 = vst [vmem:[#allocation2 + $0x60] sm:$0xff] %v414
    %447 = vst [vmem:[#allocation2 + $0x68] sm:$0xff] %v415
    %448 = vst [vmem:[#allocation2 + $0x70] sm:$0xff] %v416
    %449 = vst [vmem:[#allocation2 + $0x78] sm:$0xff] %v417
    %450 = vst [vmem:[#allocation2 + $0x80] sm:$0xff] %v418
    %451 = vst [vmem:[#allocation2 + $0x88] sm:$0xff] %v419
    %452 = vst [vmem:[#allocation2 + $0x90] sm:$0xff] %v420
    %453 = vst [vmem:[#allocation2 + $0x98] sm:$0xff] %v421
    %454 = vst [vmem:[#allocation2 + $0xa0] sm:$0xff] %v422
    %455 = vst [vmem:[#allocation2 + $0xa8] sm:$0xff] %v423
    %456 = vst [vmem:[#allocation2 + $0xb0] sm:$0xff] %v424
    %457 = vst [vmem:[#allocation2 + $0xb8] sm:$0xff] %v425
    %458 = vst [vmem:[#allocation2 + $0xc0] sm:$0xff] %v426
    %459 = vst [vmem:[#allocation2 + $0xc8] sm:$0xff] %v427
    %460 = vst [vmem:[#allocation2 + $0xd0] sm:$0xff] %v428
    %461 = vst [vmem:[#allocation2 + $0xd8] sm:$0xff] %v429
    %462 = vst [vmem:[#allocation2 + $0xe0] sm:$0xff] %v430
    %463 = vst [vmem:[#allocation2 + $0xe8] sm:$0xff] %v431
    %464 = vst [vmem:[#allocation2 + $0xf0] sm:$0xff] %v432
    %465 = vst [vmem:[#allocation2 + $0xf8] sm:$0xff] %v433
    %v466 = vld [vmem:[%s3] sm:$0xf]
    %v467 = vld [vmem:[%s5] sm:$0xf]
    %v468 = vld [vmem:[#allocation3] sm:$0xff]
    %v469 = vld [vmem:[#allocation3 + $0x8] sm:$0xff]
    %v470 = vld [vmem:[#allocation4] sm:$0xff]
    %v471 = vld [vmem:[#allocation4 + $0x8] sm:$0xff]
    %v472 = vld [vmem:[#allocation5] sm:$0xff]
    %v473 = vld [vmem:[#allocation5 + $0x8] sm:$0xff]
    %v474 = vld [vmem:[#allocation6] sm:$0xff]
    %v475 = vld [vmem:[#allocation6 + $0x8] sm:$0xff]
    %s476 = smul.u32 0, 4
    %s477 = smul.addr %s476, 4
    %s478 = scalar_lea.vmem [#allocation2], %s477
    %v479 = vld [vmem:[%s478] sm:$0xff]
    %v480 = vld [vmem:[%s478 + $0x8] sm:$0xff]
    %v481 = vld [vmem:[%s478 + $0x10] sm:$0xff]
    %v482 = vld [vmem:[%s478 + $0x18] sm:$0xff]
    %v483 = vunpack.c.l.bf16 %v479
    %v484 = vunpack.c.h.bf16 %v479
    %v485 = vunpack.c.l.bf16 %v480
    %v486 = vunpack.c.h.bf16 %v480
    %v487 = vunpack.c.l.bf16 %v481
    %v488 = vunpack.c.h.bf16 %v481
    %v489 = vunpack.c.l.bf16 %v482
    %v490 = vunpack.c.h.bf16 %v482
    %v492 = vperm.slane %v466, 0
    %v493 = vperm.slane %v466, 1
    %v494 = vperm.slane %v466, 2
    %v495 = vperm.slane %v466, 3
    %v500 = vadd.f32 %v483, %v492
    %v501 = vadd.f32 %v484, %v493
    %v502 = vadd.f32 %v485, %v494
    %v503 = vadd.f32 %v486, %v495
    %v504 = vadd.f32 %v487, %v492
    %v505 = vadd.f32 %v488, %v493
    %v506 = vadd.f32 %v489, %v494
    %v507 = vadd.f32 %v490, %v495
    %v508 = vpack.c.bf16 %v469, %v468
    %v509 = vld [vmem:[#allocation8] sm:$0xff]
    %v510 = vld [vmem:[#allocation8 + $0x8] sm:$0xff]
    %v511 = vld [vmem:[#allocation8 + $0x10] sm:$0xff]
    %v512 = vld [vmem:[#allocation8 + $0x18] sm:$0xff]
    %v513 = vld [vmem:[#allocation8 + $0x20] sm:$0xff]
    %v514 = vld [vmem:[#allocation8 + $0x28] sm:$0xff]
    %v515 = vld [vmem:[#allocation8 + $0x30] sm:$0xff]
    %v516 = vld [vmem:[#allocation8 + $0x38] sm:$0xff]
    %v517 = vld [vmem:[#allocation8 + $0x40] sm:$0xff]
    %v518 = vld [vmem:[#allocation8 + $0x48] sm:$0xff]
    %v519 = vld [vmem:[#allocation8 + $0x50] sm:$0xff]
    %v520 = vld [vmem:[#allocation8 + $0x58] sm:$0xff]
    %v521 = vld [vmem:[#allocation8 + $0x60] sm:$0xff]
    %v522 = vld [vmem:[#allocation8 + $0x68] sm:$0xff]
    %v523 = vld [vmem:[#allocation8 + $0x70] sm:$0xff]
    %v524 = vld [vmem:[#allocation8 + $0x78] sm:$0xff]
    %v525 = vld [vmem:[#allocation8 + $0x80] sm:$0xff]
    %v526 = vld [vmem:[#allocation8 + $0x88] sm:$0xff]
    %v527 = vld [vmem:[#allocation8 + $0x90] sm:$0xff]
    %v528 = vld [vmem:[#allocation8 + $0x98] sm:$0xff]
    %v529 = vld [vmem:[#allocation8 + $0xa0] sm:$0xff]
    %v530 = vld [vmem:[#allocation8 + $0xa8] sm:$0xff]
    %v531 = vld [vmem:[#allocation8 + $0xb0] sm:$0xff]
    %v532 = vld [vmem:[#allocation8 + $0xb8] sm:$0xff]
    %v533 = vld [vmem:[#allocation8 + $0xc0] sm:$0xff]
    %v534 = vld [vmem:[#allocation8 + $0xc8] sm:$0xff]
    %v535 = vld [vmem:[#allocation8 + $0xd0] sm:$0xff]
    %v536 = vld [vmem:[#allocation8 + $0xd8] sm:$0xff]
    %v537 = vld [vmem:[#allocation8 + $0xe0] sm:$0xff]
    %v538 = vld [vmem:[#allocation8 + $0xe8] sm:$0xff]
    %v539 = vld [vmem:[#allocation8 + $0xf0] sm:$0xff]
    %v540 = vld [vmem:[#allocation8 + $0xf8] sm:$0xff]
    %v573 = vunpack.c.l.b16 %v509
    %v574 = vunpack.c.h.b16 %v509
    %v575 = vunpack.c.l.b16 %v510
    %v576 = vunpack.c.h.b16 %v510
    %v577 = vunpack.c.l.b16 %v511
    %v578 = vunpack.c.h.b16 %v511
    %v579 = vunpack.c.l.b16 %v512
    %v580 = vunpack.c.h.b16 %v512
    %v581 = vunpack.c.l.b16 %v513
    %v582 = vunpack.c.h.b16 %v513
    %v583 = vunpack.c.l.b16 %v514
    %v584 = vunpack.c.h.b16 %v514
    %v585 = vunpack.c.l.b16 %v515
    %v586 = vunpack.c.h.b16 %v515
    %v587 = vunpack.c.l.b16 %v516
    %v588 = vunpack.c.h.b16 %v516
    %v589 = vunpack.c.l.b16 %v517
    %v590 = vunpack.c.h.b16 %v517
    %v591 = vunpack.c.l.b16 %v518
    %v592 = vunpack.c.h.b16 %v518
    %v593 = vunpack.c.l.b16 %v519
    %v594 = vunpack.c.h.b16 %v519
    %v595 = vunpack.c.l.b16 %v520
    %v596 = vunpack.c.h.b16 %v520
    %v597 = vunpack.c.l.b16 %v521
    %v598 = vunpack.c.h.b16 %v521
    %v599 = vunpack.c.l.b16 %v522
    %v600 = vunpack.c.h.b16 %v522
    %v601 = vunpack.c.l.b16 %v523
    %v602 = vunpack.c.h.b16 %v523
    %v603 = vunpack.c.l.b16 %v524
    %v604 = vunpack.c.h.b16 %v524
    %v605 = vunpack.c.l.b16 %v525
    %v606 = vunpack.c.h.b16 %v525
    %v607 = vunpack.c.l.b16 %v526
    %v608 = vunpack.c.h.b16 %v526
    %v609 = vunpack.c.l.b16 %v527
    %v610 = vunpack.c.h.b16 %v527
    %v611 = vunpack.c.l.b16 %v528
    %v612 = vunpack.c.h.b16 %v528
    %v613 = vunpack.c.l.b16 %v529
    %v614 = vunpack.c.h.b16 %v529
    %v615 = vunpack.c.l.b16 %v530
    %v616 = vunpack.c.h.b16 %v530
    %v617 = vunpack.c.l.b16 %v531
    %v618 = vunpack.c.h.b16 %v531
    %v619 = vunpack.c.l.b16 %v532
    %v620 = vunpack.c.h.b16 %v532
    %v621 = vunpack.c.l.b16 %v533
    %v622 = vunpack.c.h.b16 %v533
    %v623 = vunpack.c.l.b16 %v534
    %v624 = vunpack.c.h.b16 %v534
    %v625 = vunpack.c.l.b16 %v535
    %v626 = vunpack.c.h.b16 %v535
    %v627 = vunpack.c.l.b16 %v536
    %v628 = vunpack.c.h.b16 %v536
    %v629 = vunpack.c.l.b16 %v537
    %v630 = vunpack.c.h.b16 %v537
    %v631 = vunpack.c.l.b16 %v538
    %v632 = vunpack.c.h.b16 %v538
    %v633 = vunpack.c.l.b16 %v539
    %v634 = vunpack.c.h.b16 %v539
    %v635 = vunpack.c.l.b16 %v540
    %v636 = vunpack.c.h.b16 %v540
    %v637 = vpack.c.b16 %v577, %v573
    %v638 = vpack.c.b16 %v578, %v574
    %v639 = vpack.c.b16 %v579, %v575
    %v640 = vpack.c.b16 %v580, %v576
    %v641 = vpack.c.b16 %v585, %v581
    %v642 = vpack.c.b16 %v586, %v582
    %v643 = vpack.c.b16 %v587, %v583
    %v644 = vpack.c.b16 %v588, %v584
    %v645 = vpack.c.b16 %v593, %v589
    %v646 = vpack.c.b16 %v594, %v590
    %v647 = vpack.c.b16 %v595, %v591
    %v648 = vpack.c.b16 %v596, %v592
    %v649 = vpack.c.b16 %v601, %v597
    %v650 = vpack.c.b16 %v602, %v598
    %v651 = vpack.c.b16 %v603, %v599
    %v652 = vpack.c.b16 %v604, %v600
    %v653 = vpack.c.b16 %v609, %v605
    %v654 = vpack.c.b16 %v610, %v606
    %v655 = vpack.c.b16 %v611, %v607
    %v656 = vpack.c.b16 %v612, %v608
    %v657 = vpack.c.b16 %v617, %v613
    %v658 = vpack.c.b16 %v618, %v614
    %v659 = vpack.c.b16 %v619, %v615
    %v660 = vpack.c.b16 %v620, %v616
    %v661 = vpack.c.b16 %v625, %v621
    %v662 = vpack.c.b16 %v626, %v622
    %v663 = vpack.c.b16 %v627, %v623
    %v664 = vpack.c.b16 %v628, %v624
    %v665 = vpack.c.b16 %v633, %v629
    %v666 = vpack.c.b16 %v634, %v630
    %v667 = vpack.c.b16 %v635, %v631
    %v668 = vpack.c.b16 %v636, %v632
    %701 = vmatpush.bf16.msra.mxu0 %v665
    %702 = vmatpush.bf16.msra.mxu0 %v661
    %703 = vmatpush.bf16.msra.mxu0 %v657
    %704 = vmatpush.bf16.msra.mxu0 %v653
    %705 = vmatpush.bf16.msra.mxu0 %v649
    %706 = vmatpush.bf16.msra.mxu0 %v645
    %707 = vmatpush.bf16.msra.mxu0 %v641
    %708 = vmatpush.bf16.msra.mxu0 %v637
    %709 = vmatmul.bf16.gmra.mxu0 %v508
    %v710 = vpop.f32.mrf.mxu0
    %v711 = vadd.f32 0.0, %v710
    %v712 = vpop.f32.mrf.mxu0
    %v713 = vadd.f32 0.0, %v712
    %714 = vdwg.mxu0
    %715 = vmatpush.bf16.msra.mxu0 %v666
    %716 = vmatpush.bf16.msra.mxu0 %v662
    %717 = vmatpush.bf16.msra.mxu0 %v658
    %718 = vmatpush.bf16.msra.mxu0 %v654
    %719 = vmatpush.bf16.msra.mxu0 %v650
    %720 = vmatpush.bf16.msra.mxu0 %v646
    %721 = vmatpush.bf16.msra.mxu0 %v642
    %722 = vmatpush.bf16.msra.mxu0 %v638
    %723 = vmatmul.bf16.gmra.mxu0 %v508
    %v724 = vpop.f32.mrf.mxu0
    %v725 = vadd.f32 0.0, %v724
    %v726 = vpop.f32.mrf.mxu0
    %v727 = vadd.f32 0.0, %v726
    %728 = vdwg.mxu0
    %729 = vmatpush.bf16.msra.mxu0 %v667
    %730 = vmatpush.bf16.msra.mxu0 %v663
    %731 = vmatpush.bf16.msra.mxu0 %v659
    %732 = vmatpush.bf16.msra.mxu0 %v655
    %733 = vmatpush.bf16.msra.mxu0 %v651
    %734 = vmatpush.bf16.msra.mxu0 %v647
    %735 = vmatpush.bf16.msra.mxu0 %v643
    %736 = vmatpush.bf16.msra.mxu0 %v639
    %737 = vmatmul.bf16.gmra.mxu0 %v508
    %v738 = vpop.f32.mrf.mxu0
    %v739 = vadd.f32 0.0, %v738
    %v740 = vpop.f32.mrf.mxu0
    %v741 = vadd.f32 0.0, %v740
    %742 = vdwg.mxu0
    %743 = vmatpush.bf16.msra.mxu0 %v668
    %744 = vmatpush.bf16.msra.mxu0 %v664
    %745 = vmatpush.bf16.msra.mxu0 %v660
    %746 = vmatpush.bf16.msra.mxu0 %v656
    %747 = vmatpush.bf16.msra.mxu0 %v652
    %748 = vmatpush.bf16.msra.mxu0 %v648
    %749 = vmatpush.bf16.msra.mxu0 %v644
    %750 = vmatpush.bf16.msra.mxu0 %v640
    %751 = vmatmul.bf16.gmra.mxu0 %v508
    %v752 = vpop.f32.mrf.mxu0
    %v753 = vadd.f32 0.0, %v752
    %v754 = vpop.f32.mrf.mxu0
    %v755 = vadd.f32 0.0, %v754
    %756 = vdwg.mxu0
    %v757 = vadd.f32 %v500, %v711
    %v758 = vadd.f32 %v501, %v725
    %v759 = vadd.f32 %v502, %v739
    %v760 = vadd.f32 %v503, %v753
    %v761 = vadd.f32 %v504, %v713
    %v762 = vadd.f32 %v505, %v727
    %v763 = vadd.f32 %v506, %v741
    %v764 = vadd.f32 %v507, %v755
    %v765 = vmul.f32 %v757, 0.5
    %v766 = vmul.f32 %v761, 0.5
    %v767 = vtanh.pop %v765
    %v768 = vtanh.pop %v766
    %v769 = vadd.f32 %v767, 1.0
    %v770 = vadd.f32 %v768, 1.0
    %v771 = vmul.f32 %v769, 0.5
    %v772 = vmul.f32 %v770, 0.5
    %v773 = vmul.f32 %v758, 0.5
    %v774 = vmul.f32 %v762, 0.5
    %v775 = vtanh.pop %v773
    %v776 = vtanh.pop %v774
    %v777 = vadd.f32 %v775, 1.0
    %v778 = vadd.f32 %v776, 1.0
    %v779 = vmul.f32 %v777, 0.5
    %v780 = vmul.f32 %v778, 0.5
    %v781 = vtanh.pop %v759
    %v782 = vtanh.pop %v763
    %v783 = vmul.f32 %v760, 0.5
    %v784 = vmul.f32 %v764, 0.5
    %v785 = vtanh.pop %v783
    %v786 = vtanh.pop %v784
    %v787 = vadd.f32 %v785, 1.0
    %v788 = vadd.f32 %v786, 1.0
    %v789 = vmul.f32 %v787, 0.5
    %v790 = vmul.f32 %v788, 0.5
    %v791 = vmul.f32 %v779, %v470
    %v792 = vmul.f32 %v780, %v471
    %v793 = vmul.f32 %v771, %v781
    %v794 = vmul.f32 %v772, %v782
    %v795 = vadd.f32 %v791, %v793
    %v796 = vadd.f32 %v792, %v794
    %v797 = vtanh.pop %v795
    %v798 = vtanh.pop %v796
    %v799 = vmul.f32 %v789, %v797
    %v800 = vmul.f32 %v790, %v798
    %v801 = vpack.c.bf16 %v799, %v799
    %v802 = vpack.c.bf16 %v800, %v800
    %v803 = vpack.c.bf16 %v472, %v472
    %v804 = vpack.c.bf16 %v473, %v473
    %v807 = vunpack.c.l.b16 %v801
    %v808 = vunpack.c.l.b16 %v802
    %v809 = vpack.c.b16 %v808, %v807
    %v813 = vunpack.c.l.b16 %v803
    %v814 = vunpack.c.l.b16 %v804
    %v815 = vpack.c.b16 %v814, %v813
    %v817 = vld [vmem:[#allocation11] sm:$0xff]
    %v818 = vld [vmem:[#allocation11 + $0x8] sm:$0xff]
    %v819 = vld [vmem:[#allocation11 + $0x10] sm:$0xff]
    %v820 = vld [vmem:[#allocation11 + $0x18] sm:$0xff]
    %v821 = vld [vmem:[#allocation11 + $0x20] sm:$0xff]
    %v822 = vld [vmem:[#allocation11 + $0x28] sm:$0xff]
    %v823 = vld [vmem:[#allocation11 + $0x30] sm:$0xff]
    %v824 = vld [vmem:[#allocation11 + $0x38] sm:$0xff]
    %v825 = vld [vmem:[#allocation11 + $0x40] sm:$0xff]
    %v826 = vld [vmem:[#allocation11 + $0x48] sm:$0xff]
    %v827 = vld [vmem:[#allocation11 + $0x50] sm:$0xff]
    %v828 = vld [vmem:[#allocation11 + $0x58] sm:$0xff]
    %v829 = vld [vmem:[#allocation11 + $0x60] sm:$0xff]
    %v830 = vld [vmem:[#allocation11 + $0x68] sm:$0xff]
    %v831 = vld [vmem:[#allocation11 + $0x70] sm:$0xff]
    %v832 = vld [vmem:[#allocation11 + $0x78] sm:$0xff]
    %v833 = vld [vmem:[#allocation11 + $0x80] sm:$0xff]
    %v834 = vld [vmem:[#allocation11 + $0x88] sm:$0xff]
    %v835 = vld [vmem:[#allocation11 + $0x90] sm:$0xff]
    %v836 = vld [vmem:[#allocation11 + $0x98] sm:$0xff]
    %v837 = vld [vmem:[#allocation11 + $0xa0] sm:$0xff]
    %v838 = vld [vmem:[#allocation11 + $0xa8] sm:$0xff]
    %v839 = vld [vmem:[#allocation11 + $0xb0] sm:$0xff]
    %v840 = vld [vmem:[#allocation11 + $0xb8] sm:$0xff]
    %v841 = vld [vmem:[#allocation11 + $0xc0] sm:$0xff]
    %v842 = vld [vmem:[#allocation11 + $0xc8] sm:$0xff]
    %v843 = vld [vmem:[#allocation11 + $0xd0] sm:$0xff]
    %v844 = vld [vmem:[#allocation11 + $0xd8] sm:$0xff]
    %v845 = vld [vmem:[#allocation11 + $0xe0] sm:$0xff]
    %v846 = vld [vmem:[#allocation11 + $0xe8] sm:$0xff]
    %v847 = vld [vmem:[#allocation11 + $0xf0] sm:$0xff]
    %v848 = vld [vmem:[#allocation11 + $0xf8] sm:$0xff]
    %v849 = vld [vmem:[#allocation11 + $0x100] sm:$0xff]
    %v850 = vld [vmem:[#allocation11 + $0x108] sm:$0xff]
    %v851 = vld [vmem:[#allocation11 + $0x110] sm:$0xff]
    %v852 = vld [vmem:[#allocation11 + $0x118] sm:$0xff]
    %v853 = vld [vmem:[#allocation11 + $0x120] sm:$0xff]
    %v854 = vld [vmem:[#allocation11 + $0x128] sm:$0xff]
    %v855 = vld [vmem:[#allocation11 + $0x130] sm:$0xff]
    %v856 = vld [vmem:[#allocation11 + $0x138] sm:$0xff]
    %v857 = vld [vmem:[#allocation11 + $0x140] sm:$0xff]
    %v858 = vld [vmem:[#allocation11 + $0x148] sm:$0xff]
    %v859 = vld [vmem:[#allocation11 + $0x150] sm:$0xff]
    %v860 = vld [vmem:[#allocation11 + $0x158] sm:$0xff]
    %v861 = vld [vmem:[#allocation11 + $0x160] sm:$0xff]
    %v862 = vld [vmem:[#allocation11 + $0x168] sm:$0xff]
    %v863 = vld [vmem:[#allocation11 + $0x170] sm:$0xff]
    %v864 = vld [vmem:[#allocation11 + $0x178] sm:$0xff]
    %v865 = vld [vmem:[#allocation11 + $0x180] sm:$0xff]
    %v866 = vld [vmem:[#allocation11 + $0x188] sm:$0xff]
    %v867 = vld [vmem:[#allocation11 + $0x190] sm:$0xff]
    %v868 = vld [vmem:[#allocation11 + $0x198] sm:$0xff]
    %v869 = vld [vmem:[#allocation11 + $0x1a0] sm:$0xff]
    %v870 = vld [vmem:[#allocation11 + $0x1a8] sm:$0xff]
    %v871 = vld [vmem:[#allocation11 + $0x1b0] sm:$0xff]
    %v872 = vld [vmem:[#allocation11 + $0x1b8] sm:$0xff]
    %v873 = vld [vmem:[#allocation11 + $0x1c0] sm:$0xff]
    %v874 = vld [vmem:[#allocation11 + $0x1c8] sm:$0xff]
    %v875 = vld [vmem:[#allocation11 + $0x1d0] sm:$0xff]
    %v876 = vld [vmem:[#allocation11 + $0x1d8] sm:$0xff]
    %v877 = vld [vmem:[#allocation11 + $0x1e0] sm:$0xff]
    %v878 = vld [vmem:[#allocation11 + $0x1e8] sm:$0xff]
    %v879 = vld [vmem:[#allocation11 + $0x1f0] sm:$0xff]
    %v880 = vld [vmem:[#allocation11 + $0x1f8] sm:$0xff]
    %v882 = vperm.slane %v467, 0
    %v883 = vperm.slane %v467, 1
    %v884 = vperm.slane %v467, 2
    %v885 = vperm.slane %v467, 3
    %v954 = vunpack.c.l.b16 %v817
    %v955 = vunpack.c.h.b16 %v817
    %v956 = vunpack.c.l.b16 %v818
    %v957 = vunpack.c.h.b16 %v818
    %v958 = vunpack.c.l.b16 %v819
    %v959 = vunpack.c.h.b16 %v819
    %v960 = vunpack.c.l.b16 %v820
    %v961 = vunpack.c.h.b16 %v820
    %v962 = vunpack.c.l.b16 %v821
    %v963 = vunpack.c.h.b16 %v821
    %v964 = vunpack.c.l.b16 %v822
    %v965 = vunpack.c.h.b16 %v822
    %v966 = vunpack.c.l.b16 %v823
    %v967 = vunpack.c.h.b16 %v823
    %v968 = vunpack.c.l.b16 %v824
    %v969 = vunpack.c.h.b16 %v824
    %v970 = vunpack.c.l.b16 %v825
    %v971 = vunpack.c.h.b16 %v825
    %v972 = vunpack.c.l.b16 %v826
    %v973 = vunpack.c.h.b16 %v826
    %v974 = vunpack.c.l.b16 %v827
    %v975 = vunpack.c.h.b16 %v827
    %v976 = vunpack.c.l.b16 %v828
    %v977 = vunpack.c.h.b16 %v828
    %v978 = vunpack.c.l.b16 %v829
    %v979 = vunpack.c.h.b16 %v829
    %v980 = vunpack.c.l.b16 %v830
    %v981 = vunpack.c.h.b16 %v830
    %v982 = vunpack.c.l.b16 %v831
    %v983 = vunpack.c.h.b16 %v831
    %v984 = vunpack.c.l.b16 %v832
    %v985 = vunpack.c.h.b16 %v832
    %v986 = vunpack.c.l.b16 %v833
    %v987 = vunpack.c.h.b16 %v833
    %v988 = vunpack.c.l.b16 %v834
    %v989 = vunpack.c.h.b16 %v834
    %v990 = vunpack.c.l.b16 %v835
    %v991 = vunpack.c.h.b16 %v835
    %v992 = vunpack.c.l.b16 %v836
    %v993 = vunpack.c.h.b16 %v836
    %v994 = vunpack.c.l.b16 %v837
    %v995 = vunpack.c.h.b16 %v837
    %v996 = vunpack.c.l.b16 %v838
    %v997 = vunpack.c.h.b16 %v838
    %v998 = vunpack.c.l.b16 %v839
    %v999 = vunpack.c.h.b16 %v839
    %v1000 = vunpack.c.l.b16 %v840
    %v1001 = vunpack.c.h.b16 %v840
    %v1002 = vunpack.c.l.b16 %v841
    %v1003 = vunpack.c.h.b16 %v841
    %v1004 = vunpack.c.l.b16 %v842
    %v1005 = vunpack.c.h.b16 %v842
    %v1006 = vunpack.c.l.b16 %v843
    %v1007 = vunpack.c.h.b16 %v843
    %v1008 = vunpack.c.l.b16 %v844
    %v1009 = vunpack.c.h.b16 %v844
    %v1010 = vunpack.c.l.b16 %v845
    %v1011 = vunpack.c.h.b16 %v845
    %v1012 = vunpack.c.l.b16 %v846
    %v1013 = vunpack.c.h.b16 %v846
    %v1014 = vunpack.c.l.b16 %v847
    %v1015 = vunpack.c.h.b16 %v847
    %v1016 = vunpack.c.l.b16 %v848
    %v1017 = vunpack.c.h.b16 %v848
    %v1018 = vunpack.c.l.b16 %v849
    %v1019 = vunpack.c.h.b16 %v849
    %v1020 = vunpack.c.l.b16 %v850
    %v1021 = vunpack.c.h.b16 %v850
    %v1022 = vunpack.c.l.b16 %v851
    %v1023 = vunpack.c.h.b16 %v851
    %v1024 = vunpack.c.l.b16 %v852
    %v1025 = vunpack.c.h.b16 %v852
    %v1026 = vunpack.c.l.b16 %v853
    %v1027 = vunpack.c.h.b16 %v853
    %v1028 = vunpack.c.l.b16 %v854
    %v1029 = vunpack.c.h.b16 %v854
    %v1030 = vunpack.c.l.b16 %v855
    %v1031 = vunpack.c.h.b16 %v855
    %v1032 = vunpack.c.l.b16 %v856
    %v1033 = vunpack.c.h.b16 %v856
    %v1034 = vunpack.c.l.b16 %v857
    %v1035 = vunpack.c.h.b16 %v857
    %v1036 = vunpack.c.l.b16 %v858
    %v1037 = vunpack.c.h.b16 %v858
    %v1038 = vunpack.c.l.b16 %v859
    %v1039 = vunpack.c.h.b16 %v859
    %v1040 = vunpack.c.l.b16 %v860
    %v1041 = vunpack.c.h.b16 %v860
    %v1042 = vunpack.c.l.b16 %v861
    %v1043 = vunpack.c.h.b16 %v861
    %v1044 = vunpack.c.l.b16 %v862
    %v1045 = vunpack.c.h.b16 %v862
    %v1046 = vunpack.c.l.b16 %v863
    %v1047 = vunpack.c.h.b16 %v863
    %v1048 = vunpack.c.l.b16 %v864
    %v1049 = vunpack.c.h.b16 %v864
    %v1050 = vunpack.c.l.b16 %v865
    %v1051 = vunpack.c.h.b16 %v865
    %v1052 = vunpack.c.l.b16 %v866
    %v1053 = vunpack.c.h.b16 %v866
    %v1054 = vunpack.c.l.b16 %v867
    %v1055 = vunpack.c.h.b16 %v867
    %v1056 = vunpack.c.l.b16 %v868
    %v1057 = vunpack.c.h.b16 %v868
    %v1058 = vunpack.c.l.b16 %v869
    %v1059 = vunpack.c.h.b16 %v869
    %v1060 = vunpack.c.l.b16 %v870
    %v1061 = vunpack.c.h.b16 %v870
    %v1062 = vunpack.c.l.b16 %v871
    %v1063 = vunpack.c.h.b16 %v871
    %v1064 = vunpack.c.l.b16 %v872
    %v1065 = vunpack.c.h.b16 %v872
    %v1066 = vunpack.c.l.b16 %v873
    %v1067 = vunpack.c.h.b16 %v873
    %v1068 = vunpack.c.l.b16 %v874
    %v1069 = vunpack.c.h.b16 %v874
    %v1070 = vunpack.c.l.b16 %v875
    %v1071 = vunpack.c.h.b16 %v875
    %v1072 = vunpack.c.l.b16 %v876
    %v1073 = vunpack.c.h.b16 %v876
    %v1074 = vunpack.c.l.b16 %v877
    %v1075 = vunpack.c.h.b16 %v877
    %v1076 = vunpack.c.l.b16 %v878
    %v1077 = vunpack.c.h.b16 %v878
    %v1078 = vunpack.c.l.b16 %v879
    %v1079 = vunpack.c.h.b16 %v879
    %v1080 = vunpack.c.l.b16 %v880
    %v1081 = vunpack.c.h.b16 %v880
    %v1082 = vpack.c.b16 %v958, %v954
    %v1083 = vpack.c.b16 %v959, %v955
    %v1084 = vpack.c.b16 %v960, %v956
    %v1085 = vpack.c.b16 %v961, %v957
    %v1086 = vpack.c.b16 %v966, %v962
    %v1087 = vpack.c.b16 %v967, %v963
    %v1088 = vpack.c.b16 %v968, %v964
    %v1089 = vpack.c.b16 %v969, %v965
    %v1090 = vpack.c.b16 %v974, %v970
    %v1091 = vpack.c.b16 %v975, %v971
    %v1092 = vpack.c.b16 %v976, %v972
    %v1093 = vpack.c.b16 %v977, %v973
    %v1094 = vpack.c.b16 %v982, %v978
    %v1095 = vpack.c.b16 %v983, %v979
    %v1096 = vpack.c.b16 %v984, %v980
    %v1097 = vpack.c.b16 %v985, %v981
    %v1098 = vpack.c.b16 %v990, %v986
    %v1099 = vpack.c.b16 %v991, %v987
    %v1100 = vpack.c.b16 %v992, %v988
    %v1101 = vpack.c.b16 %v993, %v989
    %v1102 = vpack.c.b16 %v998, %v994
    %v1103 = vpack.c.b16 %v999, %v995
    %v1104 = vpack.c.b16 %v1000, %v996
    %v1105 = vpack.c.b16 %v1001, %v997
    %v1106 = vpack.c.b16 %v1006, %v1002
    %v1107 = vpack.c.b16 %v1007, %v1003
    %v1108 = vpack.c.b16 %v1008, %v1004
    %v1109 = vpack.c.b16 %v1009, %v1005
    %v1110 = vpack.c.b16 %v1014, %v1010
    %v1111 = vpack.c.b16 %v1015, %v1011
    %v1112 = vpack.c.b16 %v1016, %v1012
    %v1113 = vpack.c.b16 %v1017, %v1013
    %v1114 = vpack.c.b16 %v1022, %v1018
    %v1115 = vpack.c.b16 %v1023, %v1019
    %v1116 = vpack.c.b16 %v1024, %v1020
    %v1117 = vpack.c.b16 %v1025, %v1021
    %v1118 = vpack.c.b16 %v1030, %v1026
    %v1119 = vpack.c.b16 %v1031, %v1027
    %v1120 = vpack.c.b16 %v1032, %v1028
    %v1121 = vpack.c.b16 %v1033, %v1029
    %v1122 = vpack.c.b16 %v1038, %v1034
    %v1123 = vpack.c.b16 %v1039, %v1035
    %v1124 = vpack.c.b16 %v1040, %v1036
    %v1125 = vpack.c.b16 %v1041, %v1037
    %v1126 = vpack.c.b16 %v1046, %v1042
    %v1127 = vpack.c.b16 %v1047, %v1043
    %v1128 = vpack.c.b16 %v1048, %v1044
    %v1129 = vpack.c.b16 %v1049, %v1045
    %v1130 = vpack.c.b16 %v1054, %v1050
    %v1131 = vpack.c.b16 %v1055, %v1051
    %v1132 = vpack.c.b16 %v1056, %v1052
    %v1133 = vpack.c.b16 %v1057, %v1053
    %v1134 = vpack.c.b16 %v1062, %v1058
    %v1135 = vpack.c.b16 %v1063, %v1059
    %v1136 = vpack.c.b16 %v1064, %v1060
    %v1137 = vpack.c.b16 %v1065, %v1061
    %v1138 = vpack.c.b16 %v1070, %v1066
    %v1139 = vpack.c.b16 %v1071, %v1067
    %v1140 = vpack.c.b16 %v1072, %v1068
    %v1141 = vpack.c.b16 %v1073, %v1069
    %v1142 = vpack.c.b16 %v1078, %v1074
    %v1143 = vpack.c.b16 %v1079, %v1075
    %v1144 = vpack.c.b16 %v1080, %v1076
    %v1145 = vpack.c.b16 %v1081, %v1077
    %1210 = vmatpush.bf16.msra.mxu0 %v1110
    %1211 = vmatpush.bf16.msra.mxu0 %v1106
    %1212 = vmatpush.bf16.msra.mxu0 %v1102
    %1213 = vmatpush.bf16.msra.mxu0 %v1098
    %1214 = vmatpush.bf16.msra.mxu0 %v1094
    %1215 = vmatpush.bf16.msra.mxu0 %v1090
    %1216 = vmatpush.bf16.msra.mxu0 %v1086
    %1217 = vmatpush.bf16.msra.mxu0 %v1082
    %1218 = vmatmul.bf16.gmra.mxu0 %v809
    %v1219 = vpop.f32.mrf.mxu0
    %v1220 = vadd.f32 %v882, %v1219
    %v1221 = vpop.f32.mrf.mxu0
    %v1222 = vadd.f32 %v882, %v1221
    %1223 = vdwg.mxu0
    %1224 = vmatpush.bf16.msra.mxu0 %v1142
    %1225 = vmatpush.bf16.msra.mxu0 %v1138
    %1226 = vmatpush.bf16.msra.mxu0 %v1134
    %1227 = vmatpush.bf16.msra.mxu0 %v1130
    %1228 = vmatpush.bf16.msra.mxu0 %v1126
    %1229 = vmatpush.bf16.msra.mxu0 %v1122
    %1230 = vmatpush.bf16.msra.mxu0 %v1118
    %1231 = vmatpush.bf16.msra.mxu0 %v1114
    %1232 = vmatmul.bf16.gmra.mxu0 %v815
    %v1233 = vpop.f32.mrf.mxu0
    %v1234 = vadd.f32 %v1220, %v1233
    %v1235 = vpop.f32.mrf.mxu0
    %v1236 = vadd.f32 %v1222, %v1235
    %1237 = vdwg.mxu0
    %1238 = vmatpush.bf16.msra.mxu0 %v1111
    %1239 = vmatpush.bf16.msra.mxu0 %v1107
    %1240 = vmatpush.bf16.msra.mxu0 %v1103
    %1241 = vmatpush.bf16.msra.mxu0 %v1099
    %1242 = vmatpush.bf16.msra.mxu0 %v1095
    %1243 = vmatpush.bf16.msra.mxu0 %v1091
    %1244 = vmatpush.bf16.msra.mxu0 %v1087
    %1245 = vmatpush.bf16.msra.mxu0 %v1083
    %1246 = vmatmul.bf16.gmra.mxu0 %v809
    %v1247 = vpop.f32.mrf.mxu0
    %v1248 = vadd.f32 %v883, %v1247
    %v1249 = vpop.f32.mrf.mxu0
    %v1250 = vadd.f32 %v883, %v1249
    %1251 = vdwg.mxu0
    %1252 = vmatpush.bf16.msra.mxu0 %v1143
    %1253 = vmatpush.bf16.msra.mxu0 %v1139
    %1254 = vmatpush.bf16.msra.mxu0 %v1135
    %1255 = vmatpush.bf16.msra.mxu0 %v1131
    %1256 = vmatpush.bf16.msra.mxu0 %v1127
    %1257 = vmatpush.bf16.msra.mxu0 %v1123
    %1258 = vmatpush.bf16.msra.mxu0 %v1119
    %1259 = vmatpush.bf16.msra.mxu0 %v1115
    %1260 = vmatmul.bf16.gmra.mxu0 %v815
    %v1261 = vpop.f32.mrf.mxu0
    %v1262 = vadd.f32 %v1248, %v1261
    %v1263 = vpop.f32.mrf.mxu0
    %v1264 = vadd.f32 %v1250, %v1263
    %1265 = vdwg.mxu0
    %1266 = vmatpush.bf16.msra.mxu0 %v1112
    %1267 = vmatpush.bf16.msra.mxu0 %v1108
    %1268 = vmatpush.bf16.msra.mxu0 %v1104
    %1269 = vmatpush.bf16.msra.mxu0 %v1100
    %1270 = vmatpush.bf16.msra.mxu0 %v1096
    %1271 = vmatpush.bf16.msra.mxu0 %v1092
    %1272 = vmatpush.bf16.msra.mxu0 %v1088
    %1273 = vmatpush.bf16.msra.mxu0 %v1084
    %1274 = vmatmul.bf16.gmra.mxu0 %v809
    %v1275 = vpop.f32.mrf.mxu0
    %v1276 = vadd.f32 %v884, %v1275
    %v1277 = vpop.f32.mrf.mxu0
    %v1278 = vadd.f32 %v884, %v1277
    %1279 = vdwg.mxu0
    %1280 = vmatpush.bf16.msra.mxu0 %v1144
    %1281 = vmatpush.bf16.msra.mxu0 %v1140
    %1282 = vmatpush.bf16.msra.mxu0 %v1136
    %1283 = vmatpush.bf16.msra.mxu0 %v1132
    %1284 = vmatpush.bf16.msra.mxu0 %v1128
    %1285 = vmatpush.bf16.msra.mxu0 %v1124
    %1286 = vmatpush.bf16.msra.mxu0 %v1120
    %1287 = vmatpush.bf16.msra.mxu0 %v1116
    %1288 = vmatmul.bf16.gmra.mxu0 %v815
    %v1289 = vpop.f32.mrf.mxu0
    %v1290 = vadd.f32 %v1276, %v1289
    %v1291 = vpop.f32.mrf.mxu0
    %v1292 = vadd.f32 %v1278, %v1291
    %1293 = vdwg.mxu0
    %1294 = vmatpush.bf16.msra.mxu0 %v1113
    %1295 = vmatpush.bf16.msra.mxu0 %v1109
    %1296 = vmatpush.bf16.msra.mxu0 %v1105
    %1297 = vmatpush.bf16.msra.mxu0 %v1101
    %1298 = vmatpush.bf16.msra.mxu0 %v1097
    %1299 = vmatpush.bf16.msra.mxu0 %v1093
    %1300 = vmatpush.bf16.msra.mxu0 %v1089
    %1301 = vmatpush.bf16.msra.mxu0 %v1085
    %1302 = vmatmul.bf16.gmra.mxu0 %v809
    %v1303 = vpop.f32.mrf.mxu0
    %v1304 = vadd.f32 %v885, %v1303
    %v1305 = vpop.f32.mrf.mxu0
    %v1306 = vadd.f32 %v885, %v1305
    %1307 = vdwg.mxu0
    %1308 = vmatpush.bf16.msra.mxu0 %v1145
    %1309 = vmatpush.bf16.msra.mxu0 %v1141
    %1310 = vmatpush.bf16.msra.mxu0 %v1137
    %1311 = vmatpush.bf16.msra.mxu0 %v1133
    %1312 = vmatpush.bf16.msra.mxu0 %v1129
    %1313 = vmatpush.bf16.msra.mxu0 %v1125
    %1314 = vmatpush.bf16.msra.mxu0 %v1121
    %1315 = vmatpush.bf16.msra.mxu0 %v1117
    %1316 = vmatmul.bf16.gmra.mxu0 %v815
    %v1317 = vpop.f32.mrf.mxu0
    %v1318 = vadd.f32 %v1304, %v1317
    %v1319 = vpop.f32.mrf.mxu0
    %v1320 = vadd.f32 %v1306, %v1319
    %1321 = vdwg.mxu0
    %v1322 = vmul.f32 %v1234, 0.5
    %v1323 = vmul.f32 %v1236, 0.5
    %v1324 = vtanh.pop %v1322
    %v1325 = vtanh.pop %v1323
    %v1326 = vadd.f32 %v1324, 1.0
    %v1327 = vadd.f32 %v1325, 1.0
    %v1328 = vmul.f32 %v1326, 0.5
    %v1329 = vmul.f32 %v1327, 0.5
    %v1330 = vmul.f32 %v1262, 0.5
    %v1331 = vmul.f32 %v1264, 0.5
    %v1332 = vtanh.pop %v1330
    %v1333 = vtanh.pop %v1331
    %v1334 = vadd.f32 %v1332, 1.0
    %v1335 = vadd.f32 %v1333, 1.0
    %v1336 = vmul.f32 %v1334, 0.5
    %v1337 = vmul.f32 %v1335, 0.5
    %v1338 = vtanh.pop %v1290
    %v1339 = vtanh.pop %v1292
    %v1340 = vmul.f32 %v1318, 0.5
    %v1341 = vmul.f32 %v1320, 0.5
    %v1342 = vtanh.pop %v1340
    %v1343 = vtanh.pop %v1341
    %v1344 = vadd.f32 %v1342, 1.0
    %v1345 = vadd.f32 %v1343, 1.0
    %v1346 = vmul.f32 %v1344, 0.5
    %v1347 = vmul.f32 %v1345, 0.5
    %v1348 = vmul.f32 %v1336, %v474
    %v1349 = vmul.f32 %v1337, %v475
    %v1350 = vmul.f32 %v1328, %v1338
    %v1351 = vmul.f32 %v1329, %v1339
    %v1352 = vadd.f32 %v1348, %v1350
    %v1353 = vadd.f32 %v1349, %v1351
    %v1354 = vtanh.pop %v1352
    %v1355 = vtanh.pop %v1353
    %v1356 = vmul.f32 %v1346, %v1354
    %v1357 = vmul.f32 %v1347, %v1355
    %s1358 = smul.u32 2, 4
    %s1359 = smul.addr %s1358, 4
    %s1360 = scalar_lea.vmem [#allocation2], %s1359
    %v1361 = vld [vmem:[%s1360] sm:$0xff]
    %v1362 = vld [vmem:[%s1360 + $0x8] sm:$0xff]
    %v1363 = vld [vmem:[%s1360 + $0x10] sm:$0xff]
    %v1364 = vld [vmem:[%s1360 + $0x18] sm:$0xff]
    %v1365 = vunpack.c.l.bf16 %v1361
    %v1366 = vunpack.c.h.bf16 %v1361
    %v1367 = vunpack.c.l.bf16 %v1362
    %v1368 = vunpack.c.h.bf16 %v1362
    %v1369 = vunpack.c.l.bf16 %v1363
    %v1370 = vunpack.c.h.bf16 %v1363
    %v1371 = vunpack.c.l.bf16 %v1364
    %v1372 = vunpack.c.h.bf16 %v1364
    %v1373 = vadd.f32 %v1365, %v492
    %v1374 = vadd.f32 %v1366, %v493
    %v1375 = vadd.f32 %v1367, %v494
    %v1376 = vadd.f32 %v1368, %v495
    %v1377 = vadd.f32 %v1369, %v492
    %v1378 = vadd.f32 %v1370, %v493
    %v1379 = vadd.f32 %v1371, %v494
    %v1380 = vadd.f32 %v1372, %v495
    %1381 = vmatpush.bf16.msra.mxu0 %v665
    %1382 = vmatpush.bf16.msra.mxu0 %v661
    %1383 = vmatpush.bf16.msra.mxu0 %v657
    %1384 = vmatpush.bf16.msra.mxu0 %v653
    %1385 = vmatpush.bf16.msra.mxu0 %v649
    %1386 = vmatpush.bf16.msra.mxu0 %v645
    %1387 = vmatpush.bf16.msra.mxu0 %v641
    %1388 = vmatpush.bf16.msra.mxu0 %v637
    %1389 = vmatmul.bf16.gmra.mxu0 %v809
    %v1390 = vpop.f32.mrf.mxu0
    %v1391 = vadd.f32 0.0, %v1390
    %v1392 = vpop.f32.mrf.mxu0
    %v1393 = vadd.f32 0.0, %v1392
    %1394 = vdwg.mxu0
    %1395 = vmatpush.bf16.msra.mxu0 %v666
    %1396 = vmatpush.bf16.msra.mxu0 %v662
    %1397 = vmatpush.bf16.msra.mxu0 %v658
    %1398 = vmatpush.bf16.msra.mxu0 %v654
    %1399 = vmatpush.bf16.msra.mxu0 %v650
    %1400 = vmatpush.bf16.msra.mxu0 %v646
    %1401 = vmatpush.bf16.msra.mxu0 %v642
    %1402 = vmatpush.bf16.msra.mxu0 %v638
    %1403 = vmatmul.bf16.gmra.mxu0 %v809
    %v1404 = vpop.f32.mrf.mxu0
    %v1405 = vadd.f32 0.0, %v1404
    %v1406 = vpop.f32.mrf.mxu0
    %v1407 = vadd.f32 0.0, %v1406
    %1408 = vdwg.mxu0
    %1409 = vmatpush.bf16.msra.mxu0 %v667
    %1410 = vmatpush.bf16.msra.mxu0 %v663
    %1411 = vmatpush.bf16.msra.mxu0 %v659
    %1412 = vmatpush.bf16.msra.mxu0 %v655
    %1413 = vmatpush.bf16.msra.mxu0 %v651
    %1414 = vmatpush.bf16.msra.mxu0 %v647
    %1415 = vmatpush.bf16.msra.mxu0 %v643
    %1416 = vmatpush.bf16.msra.mxu0 %v639
    %1417 = vmatmul.bf16.gmra.mxu0 %v809
    %v1418 = vpop.f32.mrf.mxu0
    %v1419 = vadd.f32 0.0, %v1418
    %v1420 = vpop.f32.mrf.mxu0
    %v1421 = vadd.f32 0.0, %v1420
    %1422 = vdwg.mxu0
    %1423 = vmatpush.bf16.msra.mxu0 %v668
    %1424 = vmatpush.bf16.msra.mxu0 %v664
    %1425 = vmatpush.bf16.msra.mxu0 %v660
    %1426 = vmatpush.bf16.msra.mxu0 %v656
    %1427 = vmatpush.bf16.msra.mxu0 %v652
    %1428 = vmatpush.bf16.msra.mxu0 %v648
    %1429 = vmatpush.bf16.msra.mxu0 %v644
    %1430 = vmatpush.bf16.msra.mxu0 %v640
    %1431 = vmatmul.bf16.gmra.mxu0 %v809
    %v1432 = vpop.f32.mrf.mxu0
    %v1433 = vadd.f32 0.0, %v1432
    %v1434 = vpop.f32.mrf.mxu0
    %v1435 = vadd.f32 0.0, %v1434
    %1436 = vdwg.mxu0
    %v1437 = vadd.f32 %v1373, %v1391
    %v1438 = vadd.f32 %v1374, %v1405
    %v1439 = vadd.f32 %v1375, %v1419
    %v1440 = vadd.f32 %v1376, %v1433
    %v1441 = vadd.f32 %v1377, %v1393
    %v1442 = vadd.f32 %v1378, %v1407
    %v1443 = vadd.f32 %v1379, %v1421
    %v1444 = vadd.f32 %v1380, %v1435
    %v1445 = vmul.f32 %v1437, 0.5
    %v1446 = vmul.f32 %v1441, 0.5
    %v1447 = vtanh.pop %v1445
    %v1448 = vtanh.pop %v1446
    %v1449 = vadd.f32 %v1447, 1.0
    %v1450 = vadd.f32 %v1448, 1.0
    %v1451 = vmul.f32 %v1449, 0.5
    %v1452 = vmul.f32 %v1450, 0.5
    %v1453 = vmul.f32 %v1438, 0.5
    %v1454 = vmul.f32 %v1442, 0.5
    %v1455 = vtanh.pop %v1453
    %v1456 = vtanh.pop %v1454
    %v1457 = vadd.f32 %v1455, 1.0
    %v1458 = vadd.f32 %v1456, 1.0
    %v1459 = vmul.f32 %v1457, 0.5
    %v1460 = vmul.f32 %v1458, 0.5
    %v1461 = vtanh.pop %v1439
    %v1462 = vtanh.pop %v1443
    %v1463 = vmul.f32 %v1440, 0.5
    %v1464 = vmul.f32 %v1444, 0.5
    %v1465 = vtanh.pop %v1463
    %v1466 = vtanh.pop %v1464
    %v1467 = vadd.f32 %v1465, 1.0
    %v1468 = vadd.f32 %v1466, 1.0
    %v1469 = vmul.f32 %v1467, 0.5
    %v1470 = vmul.f32 %v1468, 0.5
    %v1471 = vmul.f32 %v1459, %v795
    %v1472 = vmul.f32 %v1460, %v796
    %v1473 = vmul.f32 %v1451, %v1461
    %v1474 = vmul.f32 %v1452, %v1462
    %v1475 = vadd.f32 %v1471, %v1473
    %v1476 = vadd.f32 %v1472, %v1474
    %v1477 = vtanh.pop %v1475
    %v1478 = vtanh.pop %v1476
    %v1479 = vmul.f32 %v1469, %v1477
    %v1480 = vmul.f32 %v1470, %v1478
    %v1481 = vpack.c.bf16 %v1479, %v1479
    %v1482 = vpack.c.bf16 %v1480, %v1480
    %v1483 = vpack.c.bf16 %v1356, %v1356
    %v1484 = vpack.c.bf16 %v1357, %v1357
    %v1487 = vunpack.c.l.b16 %v1481
    %v1488 = vunpack.c.l.b16 %v1482
    %v1489 = vpack.c.b16 %v1488, %v1487
    %v1493 = vunpack.c.l.b16 %v1483
    %v1494 = vunpack.c.l.b16 %v1484
    %v1495 = vpack.c.b16 %v1494, %v1493
    %1497 = vmatpush.bf16.msra.mxu0 %v1110
    %1498 = vmatpush.bf16.msra.mxu0 %v1106
    %1499 = vmatpush.bf16.msra.mxu0 %v1102
    %1500 = vmatpush.bf16.msra.mxu0 %v1098
    %1501 = vmatpush.bf16.msra.mxu0 %v1094
    %1502 = vmatpush.bf16.msra.mxu0 %v1090
    %1503 = vmatpush.bf16.msra.mxu0 %v1086
    %1504 = vmatpush.bf16.msra.mxu0 %v1082
    %1505 = vmatmul.bf16.gmra.mxu0 %v1489
    %v1506 = vpop.f32.mrf.mxu0
    %v1507 = vadd.f32 %v882, %v1506
    %v1508 = vpop.f32.mrf.mxu0
    %v1509 = vadd.f32 %v882, %v1508
    %1510 = vdwg.mxu0
    %1511 = vmatpush.bf16.msra.mxu0 %v1142
    %1512 = vmatpush.bf16.msra.mxu0 %v1138
    %1513 = vmatpush.bf16.msra.mxu0 %v1134
    %1514 = vmatpush.bf16.msra.mxu0 %v1130
    %1515 = vmatpush.bf16.msra.mxu0 %v1126
    %1516 = vmatpush.bf16.msra.mxu0 %v1122
    %1517 = vmatpush.bf16.msra.mxu0 %v1118
    %1518 = vmatpush.bf16.msra.mxu0 %v1114
    %1519 = vmatmul.bf16.gmra.mxu0 %v1495
    %v1520 = vpop.f32.mrf.mxu0
    %v1521 = vadd.f32 %v1507, %v1520
    %v1522 = vpop.f32.mrf.mxu0
    %v1523 = vadd.f32 %v1509, %v1522
    %1524 = vdwg.mxu0
    %1525 = vmatpush.bf16.msra.mxu0 %v1111
    %1526 = vmatpush.bf16.msra.mxu0 %v1107
    %1527 = vmatpush.bf16.msra.mxu0 %v1103
    %1528 = vmatpush.bf16.msra.mxu0 %v1099
    %1529 = vmatpush.bf16.msra.mxu0 %v1095
    %1530 = vmatpush.bf16.msra.mxu0 %v1091
    %1531 = vmatpush.bf16.msra.mxu0 %v1087
    %1532 = vmatpush.bf16.msra.mxu0 %v1083
    %1533 = vmatmul.bf16.gmra.mxu0 %v1489
    %v1534 = vpop.f32.mrf.mxu0
    %v1535 = vadd.f32 %v883, %v1534
    %v1536 = vpop.f32.mrf.mxu0
    %v1537 = vadd.f32 %v883, %v1536
    %1538 = vdwg.mxu0
    %1539 = vmatpush.bf16.msra.mxu0 %v1143
    %1540 = vmatpush.bf16.msra.mxu0 %v1139
    %1541 = vmatpush.bf16.msra.mxu0 %v1135
    %1542 = vmatpush.bf16.msra.mxu0 %v1131
    %1543 = vmatpush.bf16.msra.mxu0 %v1127
    %1544 = vmatpush.bf16.msra.mxu0 %v1123
    %1545 = vmatpush.bf16.msra.mxu0 %v1119
    %1546 = vmatpush.bf16.msra.mxu0 %v1115
    %1547 = vmatmul.bf16.gmra.mxu0 %v1495
    %v1548 = vpop.f32.mrf.mxu0
    %v1549 = vadd.f32 %v1535, %v1548
    %v1550 = vpop.f32.mrf.mxu0
    %v1551 = vadd.f32 %v1537, %v1550
    %1552 = vdwg.mxu0
    %1553 = vmatpush.bf16.msra.mxu0 %v1112
    %1554 = vmatpush.bf16.msra.mxu0 %v1108
    %1555 = vmatpush.bf16.msra.mxu0 %v1104
    %1556 = vmatpush.bf16.msra.mxu0 %v1100
    %1557 = vmatpush.bf16.msra.mxu0 %v1096
    %1558 = vmatpush.bf16.msra.mxu0 %v1092
    %1559 = vmatpush.bf16.msra.mxu0 %v1088
    %1560 = vmatpush.bf16.msra.mxu0 %v1084
    %1561 = vmatmul.bf16.gmra.mxu0 %v1489
    %v1562 = vpop.f32.mrf.mxu0
    %v1563 = vadd.f32 %v884, %v1562
    %v1564 = vpop.f32.mrf.mxu0
    %v1565 = vadd.f32 %v884, %v1564
    %1566 = vdwg.mxu0
    %1567 = vmatpush.bf16.msra.mxu0 %v1144
    %1568 = vmatpush.bf16.msra.mxu0 %v1140
    %1569 = vmatpush.bf16.msra.mxu0 %v1136
    %1570 = vmatpush.bf16.msra.mxu0 %v1132
    %1571 = vmatpush.bf16.msra.mxu0 %v1128
    %1572 = vmatpush.bf16.msra.mxu0 %v1124
    %1573 = vmatpush.bf16.msra.mxu0 %v1120
    %1574 = vmatpush.bf16.msra.mxu0 %v1116
    %1575 = vmatmul.bf16.gmra.mxu0 %v1495
    %v1576 = vpop.f32.mrf.mxu0
    %v1577 = vadd.f32 %v1563, %v1576
    %v1578 = vpop.f32.mrf.mxu0
    %v1579 = vadd.f32 %v1565, %v1578
    %1580 = vdwg.mxu0
    %1581 = vmatpush.bf16.msra.mxu0 %v1113
    %1582 = vmatpush.bf16.msra.mxu0 %v1109
    %1583 = vmatpush.bf16.msra.mxu0 %v1105
    %1584 = vmatpush.bf16.msra.mxu0 %v1101
    %1585 = vmatpush.bf16.msra.mxu0 %v1097
    %1586 = vmatpush.bf16.msra.mxu0 %v1093
    %1587 = vmatpush.bf16.msra.mxu0 %v1089
    %1588 = vmatpush.bf16.msra.mxu0 %v1085
    %1589 = vmatmul.bf16.gmra.mxu0 %v1489
    %v1590 = vpop.f32.mrf.mxu0
    %v1591 = vadd.f32 %v885, %v1590
    %v1592 = vpop.f32.mrf.mxu0
    %v1593 = vadd.f32 %v885, %v1592
    %1594 = vdwg.mxu0
    %1595 = vmatpush.bf16.msra.mxu0 %v1145
    %1596 = vmatpush.bf16.msra.mxu0 %v1141
    %1597 = vmatpush.bf16.msra.mxu0 %v1137
    %1598 = vmatpush.bf16.msra.mxu0 %v1133
    %1599 = vmatpush.bf16.msra.mxu0 %v1129
    %1600 = vmatpush.bf16.msra.mxu0 %v1125
    %1601 = vmatpush.bf16.msra.mxu0 %v1121
    %1602 = vmatpush.bf16.msra.mxu0 %v1117
    %1603 = vmatmul.bf16.gmra.mxu0 %v1495
    %v1604 = vpop.f32.mrf.mxu0
    %v1605 = vadd.f32 %v1591, %v1604
    %v1606 = vpop.f32.mrf.mxu0
    %v1607 = vadd.f32 %v1593, %v1606
    %1608 = vdwg.mxu0
    %v1609 = vmul.f32 %v1521, 0.5
    %v1610 = vmul.f32 %v1523, 0.5
    %v1611 = vtanh.pop %v1609
    %v1612 = vtanh.pop %v1610
    %v1613 = vadd.f32 %v1611, 1.0
    %v1614 = vadd.f32 %v1612, 1.0
    %v1615 = vmul.f32 %v1613, 0.5
    %v1616 = vmul.f32 %v1614, 0.5
    %v1617 = vmul.f32 %v1549, 0.5
    %v1618 = vmul.f32 %v1551, 0.5
    %v1619 = vtanh.pop %v1617
    %v1620 = vtanh.pop %v1618
    %v1621 = vadd.f32 %v1619, 1.0
    %v1622 = vadd.f32 %v1620, 1.0
    %v1623 = vmul.f32 %v1621, 0.5
    %v1624 = vmul.f32 %v1622, 0.5
    %v1625 = vtanh.pop %v1577
    %v1626 = vtanh.pop %v1579
    %v1627 = vmul.f32 %v1605, 0.5
    %v1628 = vmul.f32 %v1607, 0.5
    %v1629 = vtanh.pop %v1627
    %v1630 = vtanh.pop %v1628
    %v1631 = vadd.f32 %v1629, 1.0
    %v1632 = vadd.f32 %v1630, 1.0
    %v1633 = vmul.f32 %v1631, 0.5
    %v1634 = vmul.f32 %v1632, 0.5
    %v1635 = vmul.f32 %v1623, %v1352
    %v1636 = vmul.f32 %v1624, %v1353
    %v1637 = vmul.f32 %v1615, %v1625
    %v1638 = vmul.f32 %v1616, %v1626
    %v1639 = vadd.f32 %v1635, %v1637
    %v1640 = vadd.f32 %v1636, %v1638
    %v1641 = vtanh.pop %v1639
    %v1642 = vtanh.pop %v1640
    %v1643 = vmul.f32 %v1633, %v1641
    %v1644 = vmul.f32 %v1634, %v1642
    %s1645 = smul.u32 4, 4
    %s1646 = smul.addr %s1645, 4
    %s1647 = scalar_lea.vmem [#allocation2], %s1646
    %v1648 = vld [vmem:[%s1647] sm:$0xff]
    %v1649 = vld [vmem:[%s1647 + $0x8] sm:$0xff]
    %v1650 = vld [vmem:[%s1647 + $0x10] sm:$0xff]
    %v1651 = vld [vmem:[%s1647 + $0x18] sm:$0xff]
    %v1652 = vunpack.c.l.bf16 %v1648
    %v1653 = vunpack.c.h.bf16 %v1648
    %v1654 = vunpack.c.l.bf16 %v1649
    %v1655 = vunpack.c.h.bf16 %v1649
    %v1656 = vunpack.c.l.bf16 %v1650
    %v1657 = vunpack.c.h.bf16 %v1650
    %v1658 = vunpack.c.l.bf16 %v1651
    %v1659 = vunpack.c.h.bf16 %v1651
    %v1660 = vadd.f32 %v1652, %v492
    %v1661 = vadd.f32 %v1653, %v493
    %v1662 = vadd.f32 %v1654, %v494
    %v1663 = vadd.f32 %v1655, %v495
    %v1664 = vadd.f32 %v1656, %v492
    %v1665 = vadd.f32 %v1657, %v493
    %v1666 = vadd.f32 %v1658, %v494
    %v1667 = vadd.f32 %v1659, %v495
    %1668 = vmatpush.bf16.msra.mxu0 %v665
    %1669 = vmatpush.bf16.msra.mxu0 %v661
    %1670 = vmatpush.bf16.msra.mxu0 %v657
    %1671 = vmatpush.bf16.msra.mxu0 %v653
    %1672 = vmatpush.bf16.msra.mxu0 %v649
    %1673 = vmatpush.bf16.msra.mxu0 %v645
    %1674 = vmatpush.bf16.msra.mxu0 %v641
    %1675 = vmatpush.bf16.msra.mxu0 %v637
    %1676 = vmatmul.bf16.gmra.mxu0 %v1489
    %v1677 = vpop.f32.mrf.mxu0
    %v1678 = vadd.f32 0.0, %v1677
    %v1679 = vpop.f32.mrf.mxu0
    %v1680 = vadd.f32 0.0, %v1679
    %1681 = vdwg.mxu0
    %1682 = vmatpush.bf16.msra.mxu0 %v666
    %1683 = vmatpush.bf16.msra.mxu0 %v662
    %1684 = vmatpush.bf16.msra.mxu0 %v658
    %1685 = vmatpush.bf16.msra.mxu0 %v654
    %1686 = vmatpush.bf16.msra.mxu0 %v650
    %1687 = vmatpush.bf16.msra.mxu0 %v646
    %1688 = vmatpush.bf16.msra.mxu0 %v642
    %1689 = vmatpush.bf16.msra.mxu0 %v638
    %1690 = vmatmul.bf16.gmra.mxu0 %v1489
    %v1691 = vpop.f32.mrf.mxu0
    %v1692 = vadd.f32 0.0, %v1691
    %v1693 = vpop.f32.mrf.mxu0
    %v1694 = vadd.f32 0.0, %v1693
    %1695 = vdwg.mxu0
    %1696 = vmatpush.bf16.msra.mxu0 %v667
    %1697 = vmatpush.bf16.msra.mxu0 %v663
    %1698 = vmatpush.bf16.msra.mxu0 %v659
    %1699 = vmatpush.bf16.msra.mxu0 %v655
    %1700 = vmatpush.bf16.msra.mxu0 %v651
    %1701 = vmatpush.bf16.msra.mxu0 %v647
    %1702 = vmatpush.bf16.msra.mxu0 %v643
    %1703 = vmatpush.bf16.msra.mxu0 %v639
    %1704 = vmatmul.bf16.gmra.mxu0 %v1489
    %v1705 = vpop.f32.mrf.mxu0
    %v1706 = vadd.f32 0.0, %v1705
    %v1707 = vpop.f32.mrf.mxu0
    %v1708 = vadd.f32 0.0, %v1707
    %1709 = vdwg.mxu0
    %1710 = vmatpush.bf16.msra.mxu0 %v668
    %1711 = vmatpush.bf16.msra.mxu0 %v664
    %1712 = vmatpush.bf16.msra.mxu0 %v660
    %1713 = vmatpush.bf16.msra.mxu0 %v656
    %1714 = vmatpush.bf16.msra.mxu0 %v652
    %1715 = vmatpush.bf16.msra.mxu0 %v648
    %1716 = vmatpush.bf16.msra.mxu0 %v644
    %1717 = vmatpush.bf16.msra.mxu0 %v640
    %1718 = vmatmul.bf16.gmra.mxu0 %v1489
    %v1719 = vpop.f32.mrf.mxu0
    %v1720 = vadd.f32 0.0, %v1719
    %v1721 = vpop.f32.mrf.mxu0
    %v1722 = vadd.f32 0.0, %v1721
    %1723 = vdwg.mxu0
    %v1724 = vadd.f32 %v1660, %v1678
    %v1725 = vadd.f32 %v1661, %v1692
    %v1726 = vadd.f32 %v1662, %v1706
    %v1727 = vadd.f32 %v1663, %v1720
    %v1728 = vadd.f32 %v1664, %v1680
    %v1729 = vadd.f32 %v1665, %v1694
    %v1730 = vadd.f32 %v1666, %v1708
    %v1731 = vadd.f32 %v1667, %v1722
    %v1732 = vmul.f32 %v1724, 0.5
    %v1733 = vmul.f32 %v1728, 0.5
    %v1734 = vtanh.pop %v1732
    %v1735 = vtanh.pop %v1733
    %v1736 = vadd.f32 %v1734, 1.0
    %v1737 = vadd.f32 %v1735, 1.0
    %v1738 = vmul.f32 %v1736, 0.5
    %v1739 = vmul.f32 %v1737, 0.5
    %v1740 = vmul.f32 %v1725, 0.5
    %v1741 = vmul.f32 %v1729, 0.5
    %v1742 = vtanh.pop %v1740
    %v1743 = vtanh.pop %v1741
    %v1744 = vadd.f32 %v1742, 1.0
    %v1745 = vadd.f32 %v1743, 1.0
    %v1746 = vmul.f32 %v1744, 0.5
    %v1747 = vmul.f32 %v1745, 0.5
    %v1748 = vtanh.pop %v1726
    %v1749 = vtanh.pop %v1730
    %v1750 = vmul.f32 %v1727, 0.5
    %v1751 = vmul.f32 %v1731, 0.5
    %v1752 = vtanh.pop %v1750
    %v1753 = vtanh.pop %v1751
    %v1754 = vadd.f32 %v1752, 1.0
    %v1755 = vadd.f32 %v1753, 1.0
    %v1756 = vmul.f32 %v1754, 0.5
    %v1757 = vmul.f32 %v1755, 0.5
    %v1758 = vmul.f32 %v1746, %v1475
    %v1759 = vmul.f32 %v1747, %v1476
    %v1760 = vmul.f32 %v1738, %v1748
    %v1761 = vmul.f32 %v1739, %v1749
    %v1762 = vadd.f32 %v1758, %v1760
    %v1763 = vadd.f32 %v1759, %v1761
    %v1764 = vtanh.pop %v1762
    %v1765 = vtanh.pop %v1763
    %v1766 = vmul.f32 %v1756, %v1764
    %v1767 = vmul.f32 %v1757, %v1765
    %v1768 = vpack.c.bf16 %v1766, %v1766
    %v1769 = vpack.c.bf16 %v1767, %v1767
    %v1770 = vpack.c.bf16 %v1643, %v1643
    %v1771 = vpack.c.bf16 %v1644, %v1644
    %v1774 = vunpack.c.l.b16 %v1768
    %v1775 = vunpack.c.l.b16 %v1769
    %v1776 = vpack.c.b16 %v1775, %v1774
    %v1780 = vunpack.c.l.b16 %v1770
    %v1781 = vunpack.c.l.b16 %v1771
    %v1782 = vpack.c.b16 %v1781, %v1780
    %1784 = vmatpush.bf16.msra.mxu0 %v1110
    %1785 = vmatpush.bf16.msra.mxu0 %v1106
    %1786 = vmatpush.bf16.msra.mxu0 %v1102
    %1787 = vmatpush.bf16.msra.mxu0 %v1098
    %1788 = vmatpush.bf16.msra.mxu0 %v1094
    %1789 = vmatpush.bf16.msra.mxu0 %v1090
    %1790 = vmatpush.bf16.msra.mxu0 %v1086
    %1791 = vmatpush.bf16.msra.mxu0 %v1082
    %1792 = vmatmul.bf16.gmra.mxu0 %v1776
    %v1793 = vpop.f32.mrf.mxu0
    %v1794 = vadd.f32 %v882, %v1793
    %v1795 = vpop.f32.mrf.mxu0
    %v1796 = vadd.f32 %v882, %v1795
    %1797 = vdwg.mxu0
    %1798 = vmatpush.bf16.msra.mxu0 %v1142
    %1799 = vmatpush.bf16.msra.mxu0 %v1138
    %1800 = vmatpush.bf16.msra.mxu0 %v1134
    %1801 = vmatpush.bf16.msra.mxu0 %v1130
    %1802 = vmatpush.bf16.msra.mxu0 %v1126
    %1803 = vmatpush.bf16.msra.mxu0 %v1122
    %1804 = vmatpush.bf16.msra.mxu0 %v1118
    %1805 = vmatpush.bf16.msra.mxu0 %v1114
    %1806 = vmatmul.bf16.gmra.mxu0 %v1782
    %v1807 = vpop.f32.mrf.mxu0
    %v1808 = vadd.f32 %v1794, %v1807
    %v1809 = vpop.f32.mrf.mxu0
    %v1810 = vadd.f32 %v1796, %v1809
    %1811 = vdwg.mxu0
    %1812 = vmatpush.bf16.msra.mxu0 %v1111
    %1813 = vmatpush.bf16.msra.mxu0 %v1107
    %1814 = vmatpush.bf16.msra.mxu0 %v1103
    %1815 = vmatpush.bf16.msra.mxu0 %v1099
    %1816 = vmatpush.bf16.msra.mxu0 %v1095
    %1817 = vmatpush.bf16.msra.mxu0 %v1091
    %1818 = vmatpush.bf16.msra.mxu0 %v1087
    %1819 = vmatpush.bf16.msra.mxu0 %v1083
    %1820 = vmatmul.bf16.gmra.mxu0 %v1776
    %v1821 = vpop.f32.mrf.mxu0
    %v1822 = vadd.f32 %v883, %v1821
    %v1823 = vpop.f32.mrf.mxu0
    %v1824 = vadd.f32 %v883, %v1823
    %1825 = vdwg.mxu0
    %1826 = vmatpush.bf16.msra.mxu0 %v1143
    %1827 = vmatpush.bf16.msra.mxu0 %v1139
    %1828 = vmatpush.bf16.msra.mxu0 %v1135
    %1829 = vmatpush.bf16.msra.mxu0 %v1131
    %1830 = vmatpush.bf16.msra.mxu0 %v1127
    %1831 = vmatpush.bf16.msra.mxu0 %v1123
    %1832 = vmatpush.bf16.msra.mxu0 %v1119
    %1833 = vmatpush.bf16.msra.mxu0 %v1115
    %1834 = vmatmul.bf16.gmra.mxu0 %v1782
    %v1835 = vpop.f32.mrf.mxu0
    %v1836 = vadd.f32 %v1822, %v1835
    %v1837 = vpop.f32.mrf.mxu0
    %v1838 = vadd.f32 %v1824, %v1837
    %1839 = vdwg.mxu0
    %1840 = vmatpush.bf16.msra.mxu0 %v1112
    %1841 = vmatpush.bf16.msra.mxu0 %v1108
    %1842 = vmatpush.bf16.msra.mxu0 %v1104
    %1843 = vmatpush.bf16.msra.mxu0 %v1100
    %1844 = vmatpush.bf16.msra.mxu0 %v1096
    %1845 = vmatpush.bf16.msra.mxu0 %v1092
    %1846 = vmatpush.bf16.msra.mxu0 %v1088
    %1847 = vmatpush.bf16.msra.mxu0 %v1084
    %1848 = vmatmul.bf16.gmra.mxu0 %v1776
    %v1849 = vpop.f32.mrf.mxu0
    %v1850 = vadd.f32 %v884, %v1849
    %v1851 = vpop.f32.mrf.mxu0
    %v1852 = vadd.f32 %v884, %v1851
    %1853 = vdwg.mxu0
    %1854 = vmatpush.bf16.msra.mxu0 %v1144
    %1855 = vmatpush.bf16.msra.mxu0 %v1140
    %1856 = vmatpush.bf16.msra.mxu0 %v1136
    %1857 = vmatpush.bf16.msra.mxu0 %v1132
    %1858 = vmatpush.bf16.msra.mxu0 %v1128
    %1859 = vmatpush.bf16.msra.mxu0 %v1124
    %1860 = vmatpush.bf16.msra.mxu0 %v1120
    %1861 = vmatpush.bf16.msra.mxu0 %v1116
    %1862 = vmatmul.bf16.gmra.mxu0 %v1782
    %v1863 = vpop.f32.mrf.mxu0
    %v1864 = vadd.f32 %v1850, %v1863
    %v1865 = vpop.f32.mrf.mxu0
    %v1866 = vadd.f32 %v1852, %v1865
    %1867 = vdwg.mxu0
    %1868 = vmatpush.bf16.msra.mxu0 %v1113
    %1869 = vmatpush.bf16.msra.mxu0 %v1109
    %1870 = vmatpush.bf16.msra.mxu0 %v1105
    %1871 = vmatpush.bf16.msra.mxu0 %v1101
    %1872 = vmatpush.bf16.msra.mxu0 %v1097
    %1873 = vmatpush.bf16.msra.mxu0 %v1093
    %1874 = vmatpush.bf16.msra.mxu0 %v1089
    %1875 = vmatpush.bf16.msra.mxu0 %v1085
    %1876 = vmatmul.bf16.gmra.mxu0 %v1776
    %v1877 = vpop.f32.mrf.mxu0
    %v1878 = vadd.f32 %v885, %v1877
    %v1879 = vpop.f32.mrf.mxu0
    %v1880 = vadd.f32 %v885, %v1879
    %1881 = vdwg.mxu0
    %1882 = vmatpush.bf16.msra.mxu0 %v1145
    %1883 = vmatpush.bf16.msra.mxu0 %v1141
    %1884 = vmatpush.bf16.msra.mxu0 %v1137
    %1885 = vmatpush.bf16.msra.mxu0 %v1133
    %1886 = vmatpush.bf16.msra.mxu0 %v1129
    %1887 = vmatpush.bf16.msra.mxu0 %v1125
    %1888 = vmatpush.bf16.msra.mxu0 %v1121
    %1889 = vmatpush.bf16.msra.mxu0 %v1117
    %1890 = vmatmul.bf16.gmra.mxu0 %v1782
    %v1891 = vpop.f32.mrf.mxu0
    %v1892 = vadd.f32 %v1878, %v1891
    %v1893 = vpop.f32.mrf.mxu0
    %v1894 = vadd.f32 %v1880, %v1893
    %1895 = vdwg.mxu0
    %v1896 = vmul.f32 %v1808, 0.5
    %v1897 = vmul.f32 %v1810, 0.5
    %v1898 = vtanh.pop %v1896
    %v1899 = vtanh.pop %v1897
    %v1900 = vadd.f32 %v1898, 1.0
    %v1901 = vadd.f32 %v1899, 1.0
    %v1902 = vmul.f32 %v1900, 0.5
    %v1903 = vmul.f32 %v1901, 0.5
    %v1904 = vmul.f32 %v1836, 0.5
    %v1905 = vmul.f32 %v1838, 0.5
    %v1906 = vtanh.pop %v1904
    %v1907 = vtanh.pop %v1905
    %v1908 = vadd.f32 %v1906, 1.0
    %v1909 = vadd.f32 %v1907, 1.0
    %v1910 = vmul.f32 %v1908, 0.5
    %v1911 = vmul.f32 %v1909, 0.5
    %v1912 = vtanh.pop %v1864
    %v1913 = vtanh.pop %v1866
    %v1914 = vmul.f32 %v1892, 0.5
    %v1915 = vmul.f32 %v1894, 0.5
    %v1916 = vtanh.pop %v1914
    %v1917 = vtanh.pop %v1915
    %v1918 = vadd.f32 %v1916, 1.0
    %v1919 = vadd.f32 %v1917, 1.0
    %v1920 = vmul.f32 %v1918, 0.5
    %v1921 = vmul.f32 %v1919, 0.5
    %v1922 = vmul.f32 %v1910, %v1639
    %v1923 = vmul.f32 %v1911, %v1640
    %v1924 = vmul.f32 %v1902, %v1912
    %v1925 = vmul.f32 %v1903, %v1913
    %v1926 = vadd.f32 %v1922, %v1924
    %v1927 = vadd.f32 %v1923, %v1925
    %v1928 = vtanh.pop %v1926
    %v1929 = vtanh.pop %v1927
    %v1930 = vmul.f32 %v1920, %v1928
    %v1931 = vmul.f32 %v1921, %v1929
    %s1932 = smul.u32 6, 4
    %s1933 = smul.addr %s1932, 4
    %s1934 = scalar_lea.vmem [#allocation2], %s1933
    %v1935 = vld [vmem:[%s1934] sm:$0xff]
    %v1936 = vld [vmem:[%s1934 + $0x8] sm:$0xff]
    %v1937 = vld [vmem:[%s1934 + $0x10] sm:$0xff]
    %v1938 = vld [vmem:[%s1934 + $0x18] sm:$0xff]
    %v1939 = vunpack.c.l.bf16 %v1935
    %v1940 = vunpack.c.h.bf16 %v1935
    %v1941 = vunpack.c.l.bf16 %v1936
    %v1942 = vunpack.c.h.bf16 %v1936
    %v1943 = vunpack.c.l.bf16 %v1937
    %v1944 = vunpack.c.h.bf16 %v1937
    %v1945 = vunpack.c.l.bf16 %v1938
    %v1946 = vunpack.c.h.bf16 %v1938
    %v1947 = vadd.f32 %v1939, %v492
    %v1948 = vadd.f32 %v1940, %v493
    %v1949 = vadd.f32 %v1941, %v494
    %v1950 = vadd.f32 %v1942, %v495
    %v1951 = vadd.f32 %v1943, %v492
    %v1952 = vadd.f32 %v1944, %v493
    %v1953 = vadd.f32 %v1945, %v494
    %v1954 = vadd.f32 %v1946, %v495
    %1955 = vmatpush.bf16.msra.mxu0 %v665
    %1956 = vmatpush.bf16.msra.mxu0 %v661
    %1957 = vmatpush.bf16.msra.mxu0 %v657
    %1958 = vmatpush.bf16.msra.mxu0 %v653
    %1959 = vmatpush.bf16.msra.mxu0 %v649
    %1960 = vmatpush.bf16.msra.mxu0 %v645
    %1961 = vmatpush.bf16.msra.mxu0 %v641
    %1962 = vmatpush.bf16.msra.mxu0 %v637
    %1963 = vmatmul.bf16.gmra.mxu0 %v1776
    %v1964 = vpop.f32.mrf.mxu0
    %v1965 = vadd.f32 0.0, %v1964
    %v1966 = vpop.f32.mrf.mxu0
    %v1967 = vadd.f32 0.0, %v1966
    %1968 = vdwg.mxu0
    %1969 = vmatpush.bf16.msra.mxu0 %v666
    %1970 = vmatpush.bf16.msra.mxu0 %v662
    %1971 = vmatpush.bf16.msra.mxu0 %v658
    %1972 = vmatpush.bf16.msra.mxu0 %v654
    %1973 = vmatpush.bf16.msra.mxu0 %v650
    %1974 = vmatpush.bf16.msra.mxu0 %v646
    %1975 = vmatpush.bf16.msra.mxu0 %v642
    %1976 = vmatpush.bf16.msra.mxu0 %v638
    %1977 = vmatmul.bf16.gmra.mxu0 %v1776
    %v1978 = vpop.f32.mrf.mxu0
    %v1979 = vadd.f32 0.0, %v1978
    %v1980 = vpop.f32.mrf.mxu0
    %v1981 = vadd.f32 0.0, %v1980
    %1982 = vdwg.mxu0
    %1983 = vmatpush.bf16.msra.mxu0 %v667
    %1984 = vmatpush.bf16.msra.mxu0 %v663
    %1985 = vmatpush.bf16.msra.mxu0 %v659
    %1986 = vmatpush.bf16.msra.mxu0 %v655
    %1987 = vmatpush.bf16.msra.mxu0 %v651
    %1988 = vmatpush.bf16.msra.mxu0 %v647
    %1989 = vmatpush.bf16.msra.mxu0 %v643
    %1990 = vmatpush.bf16.msra.mxu0 %v639
    %1991 = vmatmul.bf16.gmra.mxu0 %v1776
    %v1992 = vpop.f32.mrf.mxu0
    %v1993 = vadd.f32 0.0, %v1992
    %v1994 = vpop.f32.mrf.mxu0
    %v1995 = vadd.f32 0.0, %v1994
    %1996 = vdwg.mxu0
    %1997 = vmatpush.bf16.msra.mxu0 %v668
    %1998 = vmatpush.bf16.msra.mxu0 %v664
    %1999 = vmatpush.bf16.msra.mxu0 %v660
    %2000 = vmatpush.bf16.msra.mxu0 %v656
    %2001 = vmatpush.bf16.msra.mxu0 %v652
    %2002 = vmatpush.bf16.msra.mxu0 %v648
    %2003 = vmatpush.bf16.msra.mxu0 %v644
    %2004 = vmatpush.bf16.msra.mxu0 %v640
    %2005 = vmatmul.bf16.gmra.mxu0 %v1776
    %v2006 = vpop.f32.mrf.mxu0
    %v2007 = vadd.f32 0.0, %v2006
    %v2008 = vpop.f32.mrf.mxu0
    %v2009 = vadd.f32 0.0, %v2008
    %2010 = vdwg.mxu0
    %v2011 = vadd.f32 %v1947, %v1965
    %v2012 = vadd.f32 %v1948, %v1979
    %v2013 = vadd.f32 %v1949, %v1993
    %v2014 = vadd.f32 %v1950, %v2007
    %v2015 = vadd.f32 %v1951, %v1967
    %v2016 = vadd.f32 %v1952, %v1981
    %v2017 = vadd.f32 %v1953, %v1995
    %v2018 = vadd.f32 %v1954, %v2009
    %v2019 = vmul.f32 %v2011, 0.5
    %v2020 = vmul.f32 %v2015, 0.5
    %v2021 = vtanh.pop %v2019
    %v2022 = vtanh.pop %v2020
    %v2023 = vadd.f32 %v2021, 1.0
    %v2024 = vadd.f32 %v2022, 1.0
    %v2025 = vmul.f32 %v2023, 0.5
    %v2026 = vmul.f32 %v2024, 0.5
    %v2027 = vmul.f32 %v2012, 0.5
    %v2028 = vmul.f32 %v2016, 0.5
    %v2029 = vtanh.pop %v2027
    %v2030 = vtanh.pop %v2028
    %v2031 = vadd.f32 %v2029, 1.0
    %v2032 = vadd.f32 %v2030, 1.0
    %v2033 = vmul.f32 %v2031, 0.5
    %v2034 = vmul.f32 %v2032, 0.5
    %v2035 = vtanh.pop %v2013
    %v2036 = vtanh.pop %v2017
    %v2037 = vmul.f32 %v2014, 0.5
    %v2038 = vmul.f32 %v2018, 0.5
    %v2039 = vtanh.pop %v2037
    %v2040 = vtanh.pop %v2038
    %v2041 = vadd.f32 %v2039, 1.0
    %v2042 = vadd.f32 %v2040, 1.0
    %v2043 = vmul.f32 %v2041, 0.5
    %v2044 = vmul.f32 %v2042, 0.5
    %v2045 = vmul.f32 %v2033, %v1762
    %v2046 = vmul.f32 %v2034, %v1763
    %v2047 = vmul.f32 %v2025, %v2035
    %v2048 = vmul.f32 %v2026, %v2036
    %v2049 = vadd.f32 %v2045, %v2047
    %v2050 = vadd.f32 %v2046, %v2048
    %v2051 = vtanh.pop %v2049
    %v2052 = vtanh.pop %v2050
    %v2053 = vmul.f32 %v2043, %v2051
    %v2054 = vmul.f32 %v2044, %v2052
    %v2055 = vpack.c.bf16 %v2053, %v2053
    %v2056 = vpack.c.bf16 %v2054, %v2054
    %v2057 = vpack.c.bf16 %v1930, %v1930
    %v2058 = vpack.c.bf16 %v1931, %v1931
    %v2061 = vunpack.c.l.b16 %v2055
    %v2062 = vunpack.c.l.b16 %v2056
    %v2063 = vpack.c.b16 %v2062, %v2061
    %v2067 = vunpack.c.l.b16 %v2057
    %v2068 = vunpack.c.l.b16 %v2058
    %v2069 = vpack.c.b16 %v2068, %v2067
    %2071 = vmatpush.bf16.msra.mxu0 %v1110
    %2072 = vmatpush.bf16.msra.mxu0 %v1106
    %2073 = vmatpush.bf16.msra.mxu0 %v1102
    %2074 = vmatpush.bf16.msra.mxu0 %v1098
    %2075 = vmatpush.bf16.msra.mxu0 %v1094
    %2076 = vmatpush.bf16.msra.mxu0 %v1090
    %2077 = vmatpush.bf16.msra.mxu0 %v1086
    %2078 = vmatpush.bf16.msra.mxu0 %v1082
    %2079 = vmatmul.bf16.gmra.mxu0 %v2063
    %v2080 = vpop.f32.mrf.mxu0
    %v2081 = vadd.f32 %v882, %v2080
    %v2082 = vpop.f32.mrf.mxu0
    %v2083 = vadd.f32 %v882, %v2082
    %2084 = vdwg.mxu0
    %2085 = vmatpush.bf16.msra.mxu0 %v1142
    %2086 = vmatpush.bf16.msra.mxu0 %v1138
    %2087 = vmatpush.bf16.msra.mxu0 %v1134
    %2088 = vmatpush.bf16.msra.mxu0 %v1130
    %2089 = vmatpush.bf16.msra.mxu0 %v1126
    %2090 = vmatpush.bf16.msra.mxu0 %v1122
    %2091 = vmatpush.bf16.msra.mxu0 %v1118
    %2092 = vmatpush.bf16.msra.mxu0 %v1114
    %2093 = vmatmul.bf16.gmra.mxu0 %v2069
    %v2094 = vpop.f32.mrf.mxu0
    %v2095 = vadd.f32 %v2081, %v2094
    %v2096 = vpop.f32.mrf.mxu0
    %v2097 = vadd.f32 %v2083, %v2096
    %2098 = vdwg.mxu0
    %2099 = vmatpush.bf16.msra.mxu0 %v1111
    %2100 = vmatpush.bf16.msra.mxu0 %v1107
    %2101 = vmatpush.bf16.msra.mxu0 %v1103
    %2102 = vmatpush.bf16.msra.mxu0 %v1099
    %2103 = vmatpush.bf16.msra.mxu0 %v1095
    %2104 = vmatpush.bf16.msra.mxu0 %v1091
    %2105 = vmatpush.bf16.msra.mxu0 %v1087
    %2106 = vmatpush.bf16.msra.mxu0 %v1083
    %2107 = vmatmul.bf16.gmra.mxu0 %v2063
    %v2108 = vpop.f32.mrf.mxu0
    %v2109 = vadd.f32 %v883, %v2108
    %v2110 = vpop.f32.mrf.mxu0
    %v2111 = vadd.f32 %v883, %v2110
    %2112 = vdwg.mxu0
    %2113 = vmatpush.bf16.msra.mxu0 %v1143
    %2114 = vmatpush.bf16.msra.mxu0 %v1139
    %2115 = vmatpush.bf16.msra.mxu0 %v1135
    %2116 = vmatpush.bf16.msra.mxu0 %v1131
    %2117 = vmatpush.bf16.msra.mxu0 %v1127
    %2118 = vmatpush.bf16.msra.mxu0 %v1123
    %2119 = vmatpush.bf16.msra.mxu0 %v1119
    %2120 = vmatpush.bf16.msra.mxu0 %v1115
    %2121 = vmatmul.bf16.gmra.mxu0 %v2069
    %v2122 = vpop.f32.mrf.mxu0
    %v2123 = vadd.f32 %v2109, %v2122
    %v2124 = vpop.f32.mrf.mxu0
    %v2125 = vadd.f32 %v2111, %v2124
    %2126 = vdwg.mxu0
    %2127 = vmatpush.bf16.msra.mxu0 %v1112
    %2128 = vmatpush.bf16.msra.mxu0 %v1108
    %2129 = vmatpush.bf16.msra.mxu0 %v1104
    %2130 = vmatpush.bf16.msra.mxu0 %v1100
    %2131 = vmatpush.bf16.msra.mxu0 %v1096
    %2132 = vmatpush.bf16.msra.mxu0 %v1092
    %2133 = vmatpush.bf16.msra.mxu0 %v1088
    %2134 = vmatpush.bf16.msra.mxu0 %v1084
    %2135 = vmatmul.bf16.gmra.mxu0 %v2063
    %v2136 = vpop.f32.mrf.mxu0
    %v2137 = vadd.f32 %v884, %v2136
    %v2138 = vpop.f32.mrf.mxu0
    %v2139 = vadd.f32 %v884, %v2138
    %2140 = vdwg.mxu0
    %2141 = vmatpush.bf16.msra.mxu0 %v1144
    %2142 = vmatpush.bf16.msra.mxu0 %v1140
    %2143 = vmatpush.bf16.msra.mxu0 %v1136
    %2144 = vmatpush.bf16.msra.mxu0 %v1132
    %2145 = vmatpush.bf16.msra.mxu0 %v1128
    %2146 = vmatpush.bf16.msra.mxu0 %v1124
    %2147 = vmatpush.bf16.msra.mxu0 %v1120
    %2148 = vmatpush.bf16.msra.mxu0 %v1116
    %2149 = vmatmul.bf16.gmra.mxu0 %v2069
    %v2150 = vpop.f32.mrf.mxu0
    %v2151 = vadd.f32 %v2137, %v2150
    %v2152 = vpop.f32.mrf.mxu0
    %v2153 = vadd.f32 %v2139, %v2152
    %2154 = vdwg.mxu0
    %2155 = vmatpush.bf16.msra.mxu0 %v1113
    %2156 = vmatpush.bf16.msra.mxu0 %v1109
    %2157 = vmatpush.bf16.msra.mxu0 %v1105
    %2158 = vmatpush.bf16.msra.mxu0 %v1101
    %2159 = vmatpush.bf16.msra.mxu0 %v1097
    %2160 = vmatpush.bf16.msra.mxu0 %v1093
    %2161 = vmatpush.bf16.msra.mxu0 %v1089
    %2162 = vmatpush.bf16.msra.mxu0 %v1085
    %2163 = vmatmul.bf16.gmra.mxu0 %v2063
    %v2164 = vpop.f32.mrf.mxu0
    %v2165 = vadd.f32 %v885, %v2164
    %v2166 = vpop.f32.mrf.mxu0
    %v2167 = vadd.f32 %v885, %v2166
    %2168 = vdwg.mxu0
    %2169 = vmatpush.bf16.msra.mxu0 %v1145
    %2170 = vmatpush.bf16.msra.mxu0 %v1141
    %2171 = vmatpush.bf16.msra.mxu0 %v1137
    %2172 = vmatpush.bf16.msra.mxu0 %v1133
    %2173 = vmatpush.bf16.msra.mxu0 %v1129
    %2174 = vmatpush.bf16.msra.mxu0 %v1125
    %2175 = vmatpush.bf16.msra.mxu0 %v1121
    %2176 = vmatpush.bf16.msra.mxu0 %v1117
    %2177 = vmatmul.bf16.gmra.mxu0 %v2069
    %v2178 = vpop.f32.mrf.mxu0
    %v2179 = vadd.f32 %v2165, %v2178
    %v2180 = vpop.f32.mrf.mxu0
    %v2181 = vadd.f32 %v2167, %v2180
    %2182 = vdwg.mxu0
    %v2183 = vmul.f32 %v2095, 0.5
    %v2184 = vmul.f32 %v2097, 0.5
    %v2185 = vtanh.pop %v2183
    %v2186 = vtanh.pop %v2184
    %v2187 = vadd.f32 %v2185, 1.0
    %v2188 = vadd.f32 %v2186, 1.0
    %v2189 = vmul.f32 %v2187, 0.5
    %v2190 = vmul.f32 %v2188, 0.5
    %v2191 = vmul.f32 %v2123, 0.5
    %v2192 = vmul.f32 %v2125, 0.5
    %v2193 = vtanh.pop %v2191
    %v2194 = vtanh.pop %v2192
    %v2195 = vadd.f32 %v2193, 1.0
    %v2196 = vadd.f32 %v2194, 1.0
    %v2197 = vmul.f32 %v2195, 0.5
    %v2198 = vmul.f32 %v2196, 0.5
    %v2199 = vtanh.pop %v2151
    %v2200 = vtanh.pop %v2153
    %v2201 = vmul.f32 %v2179, 0.5
    %v2202 = vmul.f32 %v2181, 0.5
    %v2203 = vtanh.pop %v2201
    %v2204 = vtanh.pop %v2202
    %v2205 = vadd.f32 %v2203, 1.0
    %v2206 = vadd.f32 %v2204, 1.0
    %v2207 = vmul.f32 %v2205, 0.5
    %v2208 = vmul.f32 %v2206, 0.5
    %v2209 = vmul.f32 %v2197, %v1926
    %v2210 = vmul.f32 %v2198, %v1927
    %v2211 = vmul.f32 %v2189, %v2199
    %v2212 = vmul.f32 %v2190, %v2200
    %v2213 = vadd.f32 %v2209, %v2211
    %v2214 = vadd.f32 %v2210, %v2212
    %v2215 = vtanh.pop %v2213
    %v2216 = vtanh.pop %v2214
    %v2217 = vmul.f32 %v2207, %v2215
    %v2218 = vmul.f32 %v2208, %v2216
    %s2219 = smul.u32 8, 4
    %s2220 = smul.addr %s2219, 4
    %s2221 = scalar_lea.vmem [#allocation2], %s2220
    %v2222 = vld [vmem:[%s2221] sm:$0xff]
    %v2223 = vld [vmem:[%s2221 + $0x8] sm:$0xff]
    %v2224 = vld [vmem:[%s2221 + $0x10] sm:$0xff]
    %v2225 = vld [vmem:[%s2221 + $0x18] sm:$0xff]
    %v2226 = vunpack.c.l.bf16 %v2222
    %v2227 = vunpack.c.h.bf16 %v2222
    %v2228 = vunpack.c.l.bf16 %v2223
    %v2229 = vunpack.c.h.bf16 %v2223
    %v2230 = vunpack.c.l.bf16 %v2224
    %v2231 = vunpack.c.h.bf16 %v2224
    %v2232 = vunpack.c.l.bf16 %v2225
    %v2233 = vunpack.c.h.bf16 %v2225
    %v2234 = vadd.f32 %v2226, %v492
    %v2235 = vadd.f32 %v2227, %v493
    %v2236 = vadd.f32 %v2228, %v494
    %v2237 = vadd.f32 %v2229, %v495
    %v2238 = vadd.f32 %v2230, %v492
    %v2239 = vadd.f32 %v2231, %v493
    %v2240 = vadd.f32 %v2232, %v494
    %v2241 = vadd.f32 %v2233, %v495
    %2242 = vmatpush.bf16.msra.mxu0 %v665
    %2243 = vmatpush.bf16.msra.mxu0 %v661
    %2244 = vmatpush.bf16.msra.mxu0 %v657
    %2245 = vmatpush.bf16.msra.mxu0 %v653
    %2246 = vmatpush.bf16.msra.mxu0 %v649
    %2247 = vmatpush.bf16.msra.mxu0 %v645
    %2248 = vmatpush.bf16.msra.mxu0 %v641
    %2249 = vmatpush.bf16.msra.mxu0 %v637
    %2250 = vmatmul.bf16.gmra.mxu0 %v2063
    %v2251 = vpop.f32.mrf.mxu0
    %v2252 = vadd.f32 0.0, %v2251
    %v2253 = vpop.f32.mrf.mxu0
    %v2254 = vadd.f32 0.0, %v2253
    %2255 = vdwg.mxu0
    %2256 = vmatpush.bf16.msra.mxu0 %v666
    %2257 = vmatpush.bf16.msra.mxu0 %v662
    %2258 = vmatpush.bf16.msra.mxu0 %v658
    %2259 = vmatpush.bf16.msra.mxu0 %v654
    %2260 = vmatpush.bf16.msra.mxu0 %v650
    %2261 = vmatpush.bf16.msra.mxu0 %v646
    %2262 = vmatpush.bf16.msra.mxu0 %v642
    %2263 = vmatpush.bf16.msra.mxu0 %v638
    %2264 = vmatmul.bf16.gmra.mxu0 %v2063
    %v2265 = vpop.f32.mrf.mxu0
    %v2266 = vadd.f32 0.0, %v2265
    %v2267 = vpop.f32.mrf.mxu0
    %v2268 = vadd.f32 0.0, %v2267
    %2269 = vdwg.mxu0
    %2270 = vmatpush.bf16.msra.mxu0 %v667
    %2271 = vmatpush.bf16.msra.mxu0 %v663
    %2272 = vmatpush.bf16.msra.mxu0 %v659
    %2273 = vmatpush.bf16.msra.mxu0 %v655
    %2274 = vmatpush.bf16.msra.mxu0 %v651
    %2275 = vmatpush.bf16.msra.mxu0 %v647
    %2276 = vmatpush.bf16.msra.mxu0 %v643
    %2277 = vmatpush.bf16.msra.mxu0 %v639
    %2278 = vmatmul.bf16.gmra.mxu0 %v2063
    %v2279 = vpop.f32.mrf.mxu0
    %v2280 = vadd.f32 0.0, %v2279
    %v2281 = vpop.f32.mrf.mxu0
    %v2282 = vadd.f32 0.0, %v2281
    %2283 = vdwg.mxu0
    %2284 = vmatpush.bf16.msra.mxu0 %v668
    %2285 = vmatpush.bf16.msra.mxu0 %v664
    %2286 = vmatpush.bf16.msra.mxu0 %v660
    %2287 = vmatpush.bf16.msra.mxu0 %v656
    %2288 = vmatpush.bf16.msra.mxu0 %v652
    %2289 = vmatpush.bf16.msra.mxu0 %v648
    %2290 = vmatpush.bf16.msra.mxu0 %v644
    %2291 = vmatpush.bf16.msra.mxu0 %v640
    %2292 = vmatmul.bf16.gmra.mxu0 %v2063
    %v2293 = vpop.f32.mrf.mxu0
    %v2294 = vadd.f32 0.0, %v2293
    %v2295 = vpop.f32.mrf.mxu0
    %v2296 = vadd.f32 0.0, %v2295
    %2297 = vdwg.mxu0
    %v2298 = vadd.f32 %v2234, %v2252
    %v2299 = vadd.f32 %v2235, %v2266
    %v2300 = vadd.f32 %v2236, %v2280
    %v2301 = vadd.f32 %v2237, %v2294
    %v2302 = vadd.f32 %v2238, %v2254
    %v2303 = vadd.f32 %v2239, %v2268
    %v2304 = vadd.f32 %v2240, %v2282
    %v2305 = vadd.f32 %v2241, %v2296
    %v2306 = vmul.f32 %v2298, 0.5
    %v2307 = vmul.f32 %v2302, 0.5
    %v2308 = vtanh.pop %v2306
    %v2309 = vtanh.pop %v2307
    %v2310 = vadd.f32 %v2308, 1.0
    %v2311 = vadd.f32 %v2309, 1.0
    %v2312 = vmul.f32 %v2310, 0.5
    %v2313 = vmul.f32 %v2311, 0.5
    %v2314 = vmul.f32 %v2299, 0.5
    %v2315 = vmul.f32 %v2303, 0.5
    %v2316 = vtanh.pop %v2314
    %v2317 = vtanh.pop %v2315
    %v2318 = vadd.f32 %v2316, 1.0
    %v2319 = vadd.f32 %v2317, 1.0
    %v2320 = vmul.f32 %v2318, 0.5
    %v2321 = vmul.f32 %v2319, 0.5
    %v2322 = vtanh.pop %v2300
    %v2323 = vtanh.pop %v2304
    %v2324 = vmul.f32 %v2301, 0.5
    %v2325 = vmul.f32 %v2305, 0.5
    %v2326 = vtanh.pop %v2324
    %v2327 = vtanh.pop %v2325
    %v2328 = vadd.f32 %v2326, 1.0
    %v2329 = vadd.f32 %v2327, 1.0
    %v2330 = vmul.f32 %v2328, 0.5
    %v2331 = vmul.f32 %v2329, 0.5
    %v2332 = vmul.f32 %v2320, %v2049
    %v2333 = vmul.f32 %v2321, %v2050
    %v2334 = vmul.f32 %v2312, %v2322
    %v2335 = vmul.f32 %v2313, %v2323
    %v2336 = vadd.f32 %v2332, %v2334
    %v2337 = vadd.f32 %v2333, %v2335
    %v2338 = vtanh.pop %v2336
    %v2339 = vtanh.pop %v2337
    %v2340 = vmul.f32 %v2330, %v2338
    %v2341 = vmul.f32 %v2331, %v2339
    %v2342 = vpack.c.bf16 %v2340, %v2340
    %v2343 = vpack.c.bf16 %v2341, %v2341
    %v2344 = vpack.c.bf16 %v2217, %v2217
    %v2345 = vpack.c.bf16 %v2218, %v2218
    %v2348 = vunpack.c.l.b16 %v2342
    %v2349 = vunpack.c.l.b16 %v2343
    %v2350 = vpack.c.b16 %v2349, %v2348
    %v2354 = vunpack.c.l.b16 %v2344
    %v2355 = vunpack.c.l.b16 %v2345
    %v2356 = vpack.c.b16 %v2355, %v2354
    %2358 = vmatpush.bf16.msra.mxu0 %v1110
    %2359 = vmatpush.bf16.msra.mxu0 %v1106
    %2360 = vmatpush.bf16.msra.mxu0 %v1102
    %2361 = vmatpush.bf16.msra.mxu0 %v1098
    %2362 = vmatpush.bf16.msra.mxu0 %v1094
    %2363 = vmatpush.bf16.msra.mxu0 %v1090
    %2364 = vmatpush.bf16.msra.mxu0 %v1086
    %2365 = vmatpush.bf16.msra.mxu0 %v1082
    %2366 = vmatmul.bf16.gmra.mxu0 %v2350
    %v2367 = vpop.f32.mrf.mxu0
    %v2368 = vadd.f32 %v882, %v2367
    %v2369 = vpop.f32.mrf.mxu0
    %v2370 = vadd.f32 %v882, %v2369
    %2371 = vdwg.mxu0
    %2372 = vmatpush.bf16.msra.mxu0 %v1142
    %2373 = vmatpush.bf16.msra.mxu0 %v1138
    %2374 = vmatpush.bf16.msra.mxu0 %v1134
    %2375 = vmatpush.bf16.msra.mxu0 %v1130
    %2376 = vmatpush.bf16.msra.mxu0 %v1126
    %2377 = vmatpush.bf16.msra.mxu0 %v1122
    %2378 = vmatpush.bf16.msra.mxu0 %v1118
    %2379 = vmatpush.bf16.msra.mxu0 %v1114
    %2380 = vmatmul.bf16.gmra.mxu0 %v2356
    %v2381 = vpop.f32.mrf.mxu0
    %v2382 = vadd.f32 %v2368, %v2381
    %v2383 = vpop.f32.mrf.mxu0
    %v2384 = vadd.f32 %v2370, %v2383
    %2385 = vdwg.mxu0
    %2386 = vmatpush.bf16.msra.mxu0 %v1111
    %2387 = vmatpush.bf16.msra.mxu0 %v1107
    %2388 = vmatpush.bf16.msra.mxu0 %v1103
    %2389 = vmatpush.bf16.msra.mxu0 %v1099
    %2390 = vmatpush.bf16.msra.mxu0 %v1095
    %2391 = vmatpush.bf16.msra.mxu0 %v1091
    %2392 = vmatpush.bf16.msra.mxu0 %v1087
    %2393 = vmatpush.bf16.msra.mxu0 %v1083
    %2394 = vmatmul.bf16.gmra.mxu0 %v2350
    %v2395 = vpop.f32.mrf.mxu0
    %v2396 = vadd.f32 %v883, %v2395
    %v2397 = vpop.f32.mrf.mxu0
    %v2398 = vadd.f32 %v883, %v2397
    %2399 = vdwg.mxu0
    %2400 = vmatpush.bf16.msra.mxu0 %v1143
    %2401 = vmatpush.bf16.msra.mxu0 %v1139
    %2402 = vmatpush.bf16.msra.mxu0 %v1135
    %2403 = vmatpush.bf16.msra.mxu0 %v1131
    %2404 = vmatpush.bf16.msra.mxu0 %v1127
    %2405 = vmatpush.bf16.msra.mxu0 %v1123
    %2406 = vmatpush.bf16.msra.mxu0 %v1119
    %2407 = vmatpush.bf16.msra.mxu0 %v1115
    %2408 = vmatmul.bf16.gmra.mxu0 %v2356
    %v2409 = vpop.f32.mrf.mxu0
    %v2410 = vadd.f32 %v2396, %v2409
    %v2411 = vpop.f32.mrf.mxu0
    %v2412 = vadd.f32 %v2398, %v2411
    %2413 = vdwg.mxu0
    %2414 = vmatpush.bf16.msra.mxu0 %v1112
    %2415 = vmatpush.bf16.msra.mxu0 %v1108
    %2416 = vmatpush.bf16.msra.mxu0 %v1104
    %2417 = vmatpush.bf16.msra.mxu0 %v1100
    %2418 = vmatpush.bf16.msra.mxu0 %v1096
    %2419 = vmatpush.bf16.msra.mxu0 %v1092
    %2420 = vmatpush.bf16.msra.mxu0 %v1088
    %2421 = vmatpush.bf16.msra.mxu0 %v1084
    %2422 = vmatmul.bf16.gmra.mxu0 %v2350
    %v2423 = vpop.f32.mrf.mxu0
    %v2424 = vadd.f32 %v884, %v2423
    %v2425 = vpop.f32.mrf.mxu0
    %v2426 = vadd.f32 %v884, %v2425
    %2427 = vdwg.mxu0
    %2428 = vmatpush.bf16.msra.mxu0 %v1144
    %2429 = vmatpush.bf16.msra.mxu0 %v1140
    %2430 = vmatpush.bf16.msra.mxu0 %v1136
    %2431 = vmatpush.bf16.msra.mxu0 %v1132
    %2432 = vmatpush.bf16.msra.mxu0 %v1128
    %2433 = vmatpush.bf16.msra.mxu0 %v1124
    %2434 = vmatpush.bf16.msra.mxu0 %v1120
    %2435 = vmatpush.bf16.msra.mxu0 %v1116
    %2436 = vmatmul.bf16.gmra.mxu0 %v2356
    %v2437 = vpop.f32.mrf.mxu0
    %v2438 = vadd.f32 %v2424, %v2437
    %v2439 = vpop.f32.mrf.mxu0
    %v2440 = vadd.f32 %v2426, %v2439
    %2441 = vdwg.mxu0
    %2442 = vmatpush.bf16.msra.mxu0 %v1113
    %2443 = vmatpush.bf16.msra.mxu0 %v1109
    %2444 = vmatpush.bf16.msra.mxu0 %v1105
    %2445 = vmatpush.bf16.msra.mxu0 %v1101
    %2446 = vmatpush.bf16.msra.mxu0 %v1097
    %2447 = vmatpush.bf16.msra.mxu0 %v1093
    %2448 = vmatpush.bf16.msra.mxu0 %v1089
    %2449 = vmatpush.bf16.msra.mxu0 %v1085
    %2450 = vmatmul.bf16.gmra.mxu0 %v2350
    %v2451 = vpop.f32.mrf.mxu0
    %v2452 = vadd.f32 %v885, %v2451
    %v2453 = vpop.f32.mrf.mxu0
    %v2454 = vadd.f32 %v885, %v2453
    %2455 = vdwg.mxu0
    %2456 = vmatpush.bf16.msra.mxu0 %v1145
    %2457 = vmatpush.bf16.msra.mxu0 %v1141
    %2458 = vmatpush.bf16.msra.mxu0 %v1137
    %2459 = vmatpush.bf16.msra.mxu0 %v1133
    %2460 = vmatpush.bf16.msra.mxu0 %v1129
    %2461 = vmatpush.bf16.msra.mxu0 %v1125
    %2462 = vmatpush.bf16.msra.mxu0 %v1121
    %2463 = vmatpush.bf16.msra.mxu0 %v1117
    %2464 = vmatmul.bf16.gmra.mxu0 %v2356
    %v2465 = vpop.f32.mrf.mxu0
    %v2466 = vadd.f32 %v2452, %v2465
    %v2467 = vpop.f32.mrf.mxu0
    %v2468 = vadd.f32 %v2454, %v2467
    %2469 = vdwg.mxu0
    %v2470 = vmul.f32 %v2382, 0.5
    %v2471 = vmul.f32 %v2384, 0.5
    %v2472 = vtanh.pop %v2470
    %v2473 = vtanh.pop %v2471
    %v2474 = vadd.f32 %v2472, 1.0
    %v2475 = vadd.f32 %v2473, 1.0
    %v2476 = vmul.f32 %v2474, 0.5
    %v2477 = vmul.f32 %v2475, 0.5
    %v2478 = vmul.f32 %v2410, 0.5
    %v2479 = vmul.f32 %v2412, 0.5
    %v2480 = vtanh.pop %v2478
    %v2481 = vtanh.pop %v2479
    %v2482 = vadd.f32 %v2480, 1.0
    %v2483 = vadd.f32 %v2481, 1.0
    %v2484 = vmul.f32 %v2482, 0.5
    %v2485 = vmul.f32 %v2483, 0.5
    %v2486 = vtanh.pop %v2438
    %v2487 = vtanh.pop %v2440
    %v2488 = vmul.f32 %v2466, 0.5
    %v2489 = vmul.f32 %v2468, 0.5
    %v2490 = vtanh.pop %v2488
    %v2491 = vtanh.pop %v2489
    %v2492 = vadd.f32 %v2490, 1.0
    %v2493 = vadd.f32 %v2491, 1.0
    %v2494 = vmul.f32 %v2492, 0.5
    %v2495 = vmul.f32 %v2493, 0.5
    %v2496 = vmul.f32 %v2484, %v2213
    %v2497 = vmul.f32 %v2485, %v2214
    %v2498 = vmul.f32 %v2476, %v2486
    %v2499 = vmul.f32 %v2477, %v2487
    %v2500 = vadd.f32 %v2496, %v2498
    %v2501 = vadd.f32 %v2497, %v2499
    %v2502 = vtanh.pop %v2500
    %v2503 = vtanh.pop %v2501
    %v2504 = vmul.f32 %v2494, %v2502
    %v2505 = vmul.f32 %v2495, %v2503
    %s2506 = smul.u32 10, 4
    %s2507 = smul.addr %s2506, 4
    %s2508 = scalar_lea.vmem [#allocation2], %s2507
    %v2509 = vld [vmem:[%s2508] sm:$0xff]
    %v2510 = vld [vmem:[%s2508 + $0x8] sm:$0xff]
    %v2511 = vld [vmem:[%s2508 + $0x10] sm:$0xff]
    %v2512 = vld [vmem:[%s2508 + $0x18] sm:$0xff]
    %v2513 = vunpack.c.l.bf16 %v2509
    %v2514 = vunpack.c.h.bf16 %v2509
    %v2515 = vunpack.c.l.bf16 %v2510
    %v2516 = vunpack.c.h.bf16 %v2510
    %v2517 = vunpack.c.l.bf16 %v2511
    %v2518 = vunpack.c.h.bf16 %v2511
    %v2519 = vunpack.c.l.bf16 %v2512
    %v2520 = vunpack.c.h.bf16 %v2512
    %v2521 = vadd.f32 %v2513, %v492
    %v2522 = vadd.f32 %v2514, %v493
    %v2523 = vadd.f32 %v2515, %v494
    %v2524 = vadd.f32 %v2516, %v495
    %v2525 = vadd.f32 %v2517, %v492
    %v2526 = vadd.f32 %v2518, %v493
    %v2527 = vadd.f32 %v2519, %v494
    %v2528 = vadd.f32 %v2520, %v495
    %2529 = vmatpush.bf16.msra.mxu0 %v665
    %2530 = vmatpush.bf16.msra.mxu0 %v661
    %2531 = vmatpush.bf16.msra.mxu0 %v657
    %2532 = vmatpush.bf16.msra.mxu0 %v653
    %2533 = vmatpush.bf16.msra.mxu0 %v649
    %2534 = vmatpush.bf16.msra.mxu0 %v645
    %2535 = vmatpush.bf16.msra.mxu0 %v641
    %2536 = vmatpush.bf16.msra.mxu0 %v637
    %2537 = vmatmul.bf16.gmra.mxu0 %v2350
    %v2538 = vpop.f32.mrf.mxu0
    %v2539 = vadd.f32 0.0, %v2538
    %v2540 = vpop.f32.mrf.mxu0
    %v2541 = vadd.f32 0.0, %v2540
    %2542 = vdwg.mxu0
    %2543 = vmatpush.bf16.msra.mxu0 %v666
    %2544 = vmatpush.bf16.msra.mxu0 %v662
    %2545 = vmatpush.bf16.msra.mxu0 %v658
    %2546 = vmatpush.bf16.msra.mxu0 %v654
    %2547 = vmatpush.bf16.msra.mxu0 %v650
    %2548 = vmatpush.bf16.msra.mxu0 %v646
    %2549 = vmatpush.bf16.msra.mxu0 %v642
    %2550 = vmatpush.bf16.msra.mxu0 %v638
    %2551 = vmatmul.bf16.gmra.mxu0 %v2350
    %v2552 = vpop.f32.mrf.mxu0
    %v2553 = vadd.f32 0.0, %v2552
    %v2554 = vpop.f32.mrf.mxu0
    %v2555 = vadd.f32 0.0, %v2554
    %2556 = vdwg.mxu0
    %2557 = vmatpush.bf16.msra.mxu0 %v667
    %2558 = vmatpush.bf16.msra.mxu0 %v663
    %2559 = vmatpush.bf16.msra.mxu0 %v659
    %2560 = vmatpush.bf16.msra.mxu0 %v655
    %2561 = vmatpush.bf16.msra.mxu0 %v651
    %2562 = vmatpush.bf16.msra.mxu0 %v647
    %2563 = vmatpush.bf16.msra.mxu0 %v643
    %2564 = vmatpush.bf16.msra.mxu0 %v639
    %2565 = vmatmul.bf16.gmra.mxu0 %v2350
    %v2566 = vpop.f32.mrf.mxu0
    %v2567 = vadd.f32 0.0, %v2566
    %v2568 = vpop.f32.mrf.mxu0
    %v2569 = vadd.f32 0.0, %v2568
    %2570 = vdwg.mxu0
    %2571 = vmatpush.bf16.msra.mxu0 %v668
    %2572 = vmatpush.bf16.msra.mxu0 %v664
    %2573 = vmatpush.bf16.msra.mxu0 %v660
    %2574 = vmatpush.bf16.msra.mxu0 %v656
    %2575 = vmatpush.bf16.msra.mxu0 %v652
    %2576 = vmatpush.bf16.msra.mxu0 %v648
    %2577 = vmatpush.bf16.msra.mxu0 %v644
    %2578 = vmatpush.bf16.msra.mxu0 %v640
    %2579 = vmatmul.bf16.gmra.mxu0 %v2350
    %v2580 = vpop.f32.mrf.mxu0
    %v2581 = vadd.f32 0.0, %v2580
    %v2582 = vpop.f32.mrf.mxu0
    %v2583 = vadd.f32 0.0, %v2582
    %2584 = vdwg.mxu0
    %v2585 = vadd.f32 %v2521, %v2539
    %v2586 = vadd.f32 %v2522, %v2553
    %v2587 = vadd.f32 %v2523, %v2567
    %v2588 = vadd.f32 %v2524, %v2581
    %v2589 = vadd.f32 %v2525, %v2541
    %v2590 = vadd.f32 %v2526, %v2555
    %v2591 = vadd.f32 %v2527, %v2569
    %v2592 = vadd.f32 %v2528, %v2583
    %v2593 = vmul.f32 %v2585, 0.5
    %v2594 = vmul.f32 %v2589, 0.5
    %v2595 = vtanh.pop %v2593
    %v2596 = vtanh.pop %v2594
    %v2597 = vadd.f32 %v2595, 1.0
    %v2598 = vadd.f32 %v2596, 1.0
    %v2599 = vmul.f32 %v2597, 0.5
    %v2600 = vmul.f32 %v2598, 0.5
    %v2601 = vmul.f32 %v2586, 0.5
    %v2602 = vmul.f32 %v2590, 0.5
    %v2603 = vtanh.pop %v2601
    %v2604 = vtanh.pop %v2602
    %v2605 = vadd.f32 %v2603, 1.0
    %v2606 = vadd.f32 %v2604, 1.0
    %v2607 = vmul.f32 %v2605, 0.5
    %v2608 = vmul.f32 %v2606, 0.5
    %v2609 = vtanh.pop %v2587
    %v2610 = vtanh.pop %v2591
    %v2611 = vmul.f32 %v2588, 0.5
    %v2612 = vmul.f32 %v2592, 0.5
    %v2613 = vtanh.pop %v2611
    %v2614 = vtanh.pop %v2612
    %v2615 = vadd.f32 %v2613, 1.0
    %v2616 = vadd.f32 %v2614, 1.0
    %v2617 = vmul.f32 %v2615, 0.5
    %v2618 = vmul.f32 %v2616, 0.5
    %v2619 = vmul.f32 %v2607, %v2336
    %v2620 = vmul.f32 %v2608, %v2337
    %v2621 = vmul.f32 %v2599, %v2609
    %v2622 = vmul.f32 %v2600, %v2610
    %v2623 = vadd.f32 %v2619, %v2621
    %v2624 = vadd.f32 %v2620, %v2622
    %v2625 = vtanh.pop %v2623
    %v2626 = vtanh.pop %v2624
    %v2627 = vmul.f32 %v2617, %v2625
    %v2628 = vmul.f32 %v2618, %v2626
    %v2629 = vpack.c.bf16 %v2627, %v2627
    %v2630 = vpack.c.bf16 %v2628, %v2628
    %v2631 = vpack.c.bf16 %v2504, %v2504
    %v2632 = vpack.c.bf16 %v2505, %v2505
    %v2635 = vunpack.c.l.b16 %v2629
    %v2636 = vunpack.c.l.b16 %v2630
    %v2637 = vpack.c.b16 %v2636, %v2635
    %v2641 = vunpack.c.l.b16 %v2631
    %v2642 = vunpack.c.l.b16 %v2632
    %v2643 = vpack.c.b16 %v2642, %v2641
    %2645 = vmatpush.bf16.msra.mxu0 %v1110
    %2646 = vmatpush.bf16.msra.mxu0 %v1106
    %2647 = vmatpush.bf16.msra.mxu0 %v1102
    %2648 = vmatpush.bf16.msra.mxu0 %v1098
    %2649 = vmatpush.bf16.msra.mxu0 %v1094
    %2650 = vmatpush.bf16.msra.mxu0 %v1090
    %2651 = vmatpush.bf16.msra.mxu0 %v1086
    %2652 = vmatpush.bf16.msra.mxu0 %v1082
    %2653 = vmatmul.bf16.gmra.mxu0 %v2637
    %v2654 = vpop.f32.mrf.mxu0
    %v2655 = vadd.f32 %v882, %v2654
    %v2656 = vpop.f32.mrf.mxu0
    %v2657 = vadd.f32 %v882, %v2656
    %2658 = vdwg.mxu0
    %2659 = vmatpush.bf16.msra.mxu0 %v1142
    %2660 = vmatpush.bf16.msra.mxu0 %v1138
    %2661 = vmatpush.bf16.msra.mxu0 %v1134
    %2662 = vmatpush.bf16.msra.mxu0 %v1130
    %2663 = vmatpush.bf16.msra.mxu0 %v1126
    %2664 = vmatpush.bf16.msra.mxu0 %v1122
    %2665 = vmatpush.bf16.msra.mxu0 %v1118
    %2666 = vmatpush.bf16.msra.mxu0 %v1114
    %2667 = vmatmul.bf16.gmra.mxu0 %v2643
    %v2668 = vpop.f32.mrf.mxu0
    %v2669 = vadd.f32 %v2655, %v2668
    %v2670 = vpop.f32.mrf.mxu0
    %v2671 = vadd.f32 %v2657, %v2670
    %2672 = vdwg.mxu0
    %2673 = vmatpush.bf16.msra.mxu0 %v1111
    %2674 = vmatpush.bf16.msra.mxu0 %v1107
    %2675 = vmatpush.bf16.msra.mxu0 %v1103
    %2676 = vmatpush.bf16.msra.mxu0 %v1099
    %2677 = vmatpush.bf16.msra.mxu0 %v1095
    %2678 = vmatpush.bf16.msra.mxu0 %v1091
    %2679 = vmatpush.bf16.msra.mxu0 %v1087
    %2680 = vmatpush.bf16.msra.mxu0 %v1083
    %2681 = vmatmul.bf16.gmra.mxu0 %v2637
    %v2682 = vpop.f32.mrf.mxu0
    %v2683 = vadd.f32 %v883, %v2682
    %v2684 = vpop.f32.mrf.mxu0
    %v2685 = vadd.f32 %v883, %v2684
    %2686 = vdwg.mxu0
    %2687 = vmatpush.bf16.msra.mxu0 %v1143
    %2688 = vmatpush.bf16.msra.mxu0 %v1139
    %2689 = vmatpush.bf16.msra.mxu0 %v1135
    %2690 = vmatpush.bf16.msra.mxu0 %v1131
    %2691 = vmatpush.bf16.msra.mxu0 %v1127
    %2692 = vmatpush.bf16.msra.mxu0 %v1123
    %2693 = vmatpush.bf16.msra.mxu0 %v1119
    %2694 = vmatpush.bf16.msra.mxu0 %v1115
    %2695 = vmatmul.bf16.gmra.mxu0 %v2643
    %v2696 = vpop.f32.mrf.mxu0
    %v2697 = vadd.f32 %v2683, %v2696
    %v2698 = vpop.f32.mrf.mxu0
    %v2699 = vadd.f32 %v2685, %v2698
    %2700 = vdwg.mxu0
    %2701 = vmatpush.bf16.msra.mxu0 %v1112
    %2702 = vmatpush.bf16.msra.mxu0 %v1108
    %2703 = vmatpush.bf16.msra.mxu0 %v1104
    %2704 = vmatpush.bf16.msra.mxu0 %v1100
    %2705 = vmatpush.bf16.msra.mxu0 %v1096
    %2706 = vmatpush.bf16.msra.mxu0 %v1092
    %2707 = vmatpush.bf16.msra.mxu0 %v1088
    %2708 = vmatpush.bf16.msra.mxu0 %v1084
    %2709 = vmatmul.bf16.gmra.mxu0 %v2637
    %v2710 = vpop.f32.mrf.mxu0
    %v2711 = vadd.f32 %v884, %v2710
    %v2712 = vpop.f32.mrf.mxu0
    %v2713 = vadd.f32 %v884, %v2712
    %2714 = vdwg.mxu0
    %2715 = vmatpush.bf16.msra.mxu0 %v1144
    %2716 = vmatpush.bf16.msra.mxu0 %v1140
    %2717 = vmatpush.bf16.msra.mxu0 %v1136
    %2718 = vmatpush.bf16.msra.mxu0 %v1132
    %2719 = vmatpush.bf16.msra.mxu0 %v1128
    %2720 = vmatpush.bf16.msra.mxu0 %v1124
    %2721 = vmatpush.bf16.msra.mxu0 %v1120
    %2722 = vmatpush.bf16.msra.mxu0 %v1116
    %2723 = vmatmul.bf16.gmra.mxu0 %v2643
    %v2724 = vpop.f32.mrf.mxu0
    %v2725 = vadd.f32 %v2711, %v2724
    %v2726 = vpop.f32.mrf.mxu0
    %v2727 = vadd.f32 %v2713, %v2726
    %2728 = vdwg.mxu0
    %2729 = vmatpush.bf16.msra.mxu0 %v1113
    %2730 = vmatpush.bf16.msra.mxu0 %v1109
    %2731 = vmatpush.bf16.msra.mxu0 %v1105
    %2732 = vmatpush.bf16.msra.mxu0 %v1101
    %2733 = vmatpush.bf16.msra.mxu0 %v1097
    %2734 = vmatpush.bf16.msra.mxu0 %v1093
    %2735 = vmatpush.bf16.msra.mxu0 %v1089
    %2736 = vmatpush.bf16.msra.mxu0 %v1085
    %2737 = vmatmul.bf16.gmra.mxu0 %v2637
    %v2738 = vpop.f32.mrf.mxu0
    %v2739 = vadd.f32 %v885, %v2738
    %v2740 = vpop.f32.mrf.mxu0
    %v2741 = vadd.f32 %v885, %v2740
    %2742 = vdwg.mxu0
    %2743 = vmatpush.bf16.msra.mxu0 %v1145
    %2744 = vmatpush.bf16.msra.mxu0 %v1141
    %2745 = vmatpush.bf16.msra.mxu0 %v1137
    %2746 = vmatpush.bf16.msra.mxu0 %v1133
    %2747 = vmatpush.bf16.msra.mxu0 %v1129
    %2748 = vmatpush.bf16.msra.mxu0 %v1125
    %2749 = vmatpush.bf16.msra.mxu0 %v1121
    %2750 = vmatpush.bf16.msra.mxu0 %v1117
    %2751 = vmatmul.bf16.gmra.mxu0 %v2643
    %v2752 = vpop.f32.mrf.mxu0
    %v2753 = vadd.f32 %v2739, %v2752
    %v2754 = vpop.f32.mrf.mxu0
    %v2755 = vadd.f32 %v2741, %v2754
    %2756 = vdwg.mxu0
    %v2757 = vmul.f32 %v2669, 0.5
    %v2758 = vmul.f32 %v2671, 0.5
    %v2759 = vtanh.pop %v2757
    %v2760 = vtanh.pop %v2758
    %v2761 = vadd.f32 %v2759, 1.0
    %v2762 = vadd.f32 %v2760, 1.0
    %v2763 = vmul.f32 %v2761, 0.5
    %v2764 = vmul.f32 %v2762, 0.5
    %v2765 = vmul.f32 %v2697, 0.5
    %v2766 = vmul.f32 %v2699, 0.5
    %v2767 = vtanh.pop %v2765
    %v2768 = vtanh.pop %v2766
    %v2769 = vadd.f32 %v2767, 1.0
    %v2770 = vadd.f32 %v2768, 1.0
    %v2771 = vmul.f32 %v2769, 0.5
    %v2772 = vmul.f32 %v2770, 0.5
    %v2773 = vtanh.pop %v2725
    %v2774 = vtanh.pop %v2727
    %v2775 = vmul.f32 %v2753, 0.5
    %v2776 = vmul.f32 %v2755, 0.5
    %v2777 = vtanh.pop %v2775
    %v2778 = vtanh.pop %v2776
    %v2779 = vadd.f32 %v2777, 1.0
    %v2780 = vadd.f32 %v2778, 1.0
    %v2781 = vmul.f32 %v2779, 0.5
    %v2782 = vmul.f32 %v2780, 0.5
    %v2783 = vmul.f32 %v2771, %v2500
    %v2784 = vmul.f32 %v2772, %v2501
    %v2785 = vmul.f32 %v2763, %v2773
    %v2786 = vmul.f32 %v2764, %v2774
    %v2787 = vadd.f32 %v2783, %v2785
    %v2788 = vadd.f32 %v2784, %v2786
    %v2789 = vtanh.pop %v2787
    %v2790 = vtanh.pop %v2788
    %v2791 = vmul.f32 %v2781, %v2789
    %v2792 = vmul.f32 %v2782, %v2790
    %s2793 = smul.u32 12, 4
    %s2794 = smul.addr %s2793, 4
    %s2795 = scalar_lea.vmem [#allocation2], %s2794
    %v2796 = vld [vmem:[%s2795] sm:$0xff]
    %v2797 = vld [vmem:[%s2795 + $0x8] sm:$0xff]
    %v2798 = vld [vmem:[%s2795 + $0x10] sm:$0xff]
    %v2799 = vld [vmem:[%s2795 + $0x18] sm:$0xff]
    %v2800 = vunpack.c.l.bf16 %v2796
    %v2801 = vunpack.c.h.bf16 %v2796
    %v2802 = vunpack.c.l.bf16 %v2797
    %v2803 = vunpack.c.h.bf16 %v2797
    %v2804 = vunpack.c.l.bf16 %v2798
    %v2805 = vunpack.c.h.bf16 %v2798
    %v2806 = vunpack.c.l.bf16 %v2799
    %v2807 = vunpack.c.h.bf16 %v2799
    %v2808 = vadd.f32 %v2800, %v492
    %v2809 = vadd.f32 %v2801, %v493
    %v2810 = vadd.f32 %v2802, %v494
    %v2811 = vadd.f32 %v2803, %v495
    %v2812 = vadd.f32 %v2804, %v492
    %v2813 = vadd.f32 %v2805, %v493
    %v2814 = vadd.f32 %v2806, %v494
    %v2815 = vadd.f32 %v2807, %v495
    %2816 = vmatpush.bf16.msra.mxu0 %v665
    %2817 = vmatpush.bf16.msra.mxu0 %v661
    %2818 = vmatpush.bf16.msra.mxu0 %v657
    %2819 = vmatpush.bf16.msra.mxu0 %v653
    %2820 = vmatpush.bf16.msra.mxu0 %v649
    %2821 = vmatpush.bf16.msra.mxu0 %v645
    %2822 = vmatpush.bf16.msra.mxu0 %v641
    %2823 = vmatpush.bf16.msra.mxu0 %v637
    %2824 = vmatmul.bf16.gmra.mxu0 %v2637
    %v2825 = vpop.f32.mrf.mxu0
    %v2826 = vadd.f32 0.0, %v2825
    %v2827 = vpop.f32.mrf.mxu0
    %v2828 = vadd.f32 0.0, %v2827
    %2829 = vdwg.mxu0
    %2830 = vmatpush.bf16.msra.mxu0 %v666
    %2831 = vmatpush.bf16.msra.mxu0 %v662
    %2832 = vmatpush.bf16.msra.mxu0 %v658
    %2833 = vmatpush.bf16.msra.mxu0 %v654
    %2834 = vmatpush.bf16.msra.mxu0 %v650
    %2835 = vmatpush.bf16.msra.mxu0 %v646
    %2836 = vmatpush.bf16.msra.mxu0 %v642
    %2837 = vmatpush.bf16.msra.mxu0 %v638
    %2838 = vmatmul.bf16.gmra.mxu0 %v2637
    %v2839 = vpop.f32.mrf.mxu0
    %v2840 = vadd.f32 0.0, %v2839
    %v2841 = vpop.f32.mrf.mxu0
    %v2842 = vadd.f32 0.0, %v2841
    %2843 = vdwg.mxu0
    %2844 = vmatpush.bf16.msra.mxu0 %v667
    %2845 = vmatpush.bf16.msra.mxu0 %v663
    %2846 = vmatpush.bf16.msra.mxu0 %v659
    %2847 = vmatpush.bf16.msra.mxu0 %v655
    %2848 = vmatpush.bf16.msra.mxu0 %v651
    %2849 = vmatpush.bf16.msra.mxu0 %v647
    %2850 = vmatpush.bf16.msra.mxu0 %v643
    %2851 = vmatpush.bf16.msra.mxu0 %v639
    %2852 = vmatmul.bf16.gmra.mxu0 %v2637
    %v2853 = vpop.f32.mrf.mxu0
    %v2854 = vadd.f32 0.0, %v2853
    %v2855 = vpop.f32.mrf.mxu0
    %v2856 = vadd.f32 0.0, %v2855
    %2857 = vdwg.mxu0
    %2858 = vmatpush.bf16.msra.mxu0 %v668
    %2859 = vmatpush.bf16.msra.mxu0 %v664
    %2860 = vmatpush.bf16.msra.mxu0 %v660
    %2861 = vmatpush.bf16.msra.mxu0 %v656
    %2862 = vmatpush.bf16.msra.mxu0 %v652
    %2863 = vmatpush.bf16.msra.mxu0 %v648
    %2864 = vmatpush.bf16.msra.mxu0 %v644
    %2865 = vmatpush.bf16.msra.mxu0 %v640
    %2866 = vmatmul.bf16.gmra.mxu0 %v2637
    %v2867 = vpop.f32.mrf.mxu0
    %v2868 = vadd.f32 0.0, %v2867
    %v2869 = vpop.f32.mrf.mxu0
    %v2870 = vadd.f32 0.0, %v2869
    %2871 = vdwg.mxu0
    %v2872 = vadd.f32 %v2808, %v2826
    %v2873 = vadd.f32 %v2809, %v2840
    %v2874 = vadd.f32 %v2810, %v2854
    %v2875 = vadd.f32 %v2811, %v2868
    %v2876 = vadd.f32 %v2812, %v2828
    %v2877 = vadd.f32 %v2813, %v2842
    %v2878 = vadd.f32 %v2814, %v2856
    %v2879 = vadd.f32 %v2815, %v2870
    %v2880 = vmul.f32 %v2872, 0.5
    %v2881 = vmul.f32 %v2876, 0.5
    %v2882 = vtanh.pop %v2880
    %v2883 = vtanh.pop %v2881
    %v2884 = vadd.f32 %v2882, 1.0
    %v2885 = vadd.f32 %v2883, 1.0
    %v2886 = vmul.f32 %v2884, 0.5
    %v2887 = vmul.f32 %v2885, 0.5
    %v2888 = vmul.f32 %v2873, 0.5
    %v2889 = vmul.f32 %v2877, 0.5
    %v2890 = vtanh.pop %v2888
    %v2891 = vtanh.pop %v2889
    %v2892 = vadd.f32 %v2890, 1.0
    %v2893 = vadd.f32 %v2891, 1.0
    %v2894 = vmul.f32 %v2892, 0.5
    %v2895 = vmul.f32 %v2893, 0.5
    %v2896 = vtanh.pop %v2874
    %v2897 = vtanh.pop %v2878
    %v2898 = vmul.f32 %v2875, 0.5
    %v2899 = vmul.f32 %v2879, 0.5
    %v2900 = vtanh.pop %v2898
    %v2901 = vtanh.pop %v2899
    %v2902 = vadd.f32 %v2900, 1.0
    %v2903 = vadd.f32 %v2901, 1.0
    %v2904 = vmul.f32 %v2902, 0.5
    %v2905 = vmul.f32 %v2903, 0.5
    %v2906 = vmul.f32 %v2894, %v2623
    %v2907 = vmul.f32 %v2895, %v2624
    %v2908 = vmul.f32 %v2886, %v2896
    %v2909 = vmul.f32 %v2887, %v2897
    %v2910 = vadd.f32 %v2906, %v2908
    %v2911 = vadd.f32 %v2907, %v2909
    %v2912 = vtanh.pop %v2910
    %v2913 = vtanh.pop %v2911
    %v2914 = vmul.f32 %v2904, %v2912
    %v2915 = vmul.f32 %v2905, %v2913
    %v2916 = vpack.c.bf16 %v2914, %v2914
    %v2917 = vpack.c.bf16 %v2915, %v2915
    %v2918 = vpack.c.bf16 %v2791, %v2791
    %v2919 = vpack.c.bf16 %v2792, %v2792
    %v2922 = vunpack.c.l.b16 %v2916
    %v2923 = vunpack.c.l.b16 %v2917
    %v2924 = vpack.c.b16 %v2923, %v2922
    %v2928 = vunpack.c.l.b16 %v2918
    %v2929 = vunpack.c.l.b16 %v2919
    %v2930 = vpack.c.b16 %v2929, %v2928
    %2932 = vmatpush.bf16.msra.mxu0 %v1110
    %2933 = vmatpush.bf16.msra.mxu0 %v1106
    %2934 = vmatpush.bf16.msra.mxu0 %v1102
    %2935 = vmatpush.bf16.msra.mxu0 %v1098
    %2936 = vmatpush.bf16.msra.mxu0 %v1094
    %2937 = vmatpush.bf16.msra.mxu0 %v1090
    %2938 = vmatpush.bf16.msra.mxu0 %v1086
    %2939 = vmatpush.bf16.msra.mxu0 %v1082
    %2940 = vmatmul.bf16.gmra.mxu0 %v2924
    %v2941 = vpop.f32.mrf.mxu0
    %v2942 = vadd.f32 %v882, %v2941
    %v2943 = vpop.f32.mrf.mxu0
    %v2944 = vadd.f32 %v882, %v2943
    %2945 = vdwg.mxu0
    %2946 = vmatpush.bf16.msra.mxu0 %v1142
    %2947 = vmatpush.bf16.msra.mxu0 %v1138
    %2948 = vmatpush.bf16.msra.mxu0 %v1134
    %2949 = vmatpush.bf16.msra.mxu0 %v1130
    %2950 = vmatpush.bf16.msra.mxu0 %v1126
    %2951 = vmatpush.bf16.msra.mxu0 %v1122
    %2952 = vmatpush.bf16.msra.mxu0 %v1118
    %2953 = vmatpush.bf16.msra.mxu0 %v1114
    %2954 = vmatmul.bf16.gmra.mxu0 %v2930
    %v2955 = vpop.f32.mrf.mxu0
    %v2956 = vadd.f32 %v2942, %v2955
    %v2957 = vpop.f32.mrf.mxu0
    %v2958 = vadd.f32 %v2944, %v2957
    %2959 = vdwg.mxu0
    %2960 = vmatpush.bf16.msra.mxu0 %v1111
    %2961 = vmatpush.bf16.msra.mxu0 %v1107
    %2962 = vmatpush.bf16.msra.mxu0 %v1103
    %2963 = vmatpush.bf16.msra.mxu0 %v1099
    %2964 = vmatpush.bf16.msra.mxu0 %v1095
    %2965 = vmatpush.bf16.msra.mxu0 %v1091
    %2966 = vmatpush.bf16.msra.mxu0 %v1087
    %2967 = vmatpush.bf16.msra.mxu0 %v1083
    %2968 = vmatmul.bf16.gmra.mxu0 %v2924
    %v2969 = vpop.f32.mrf.mxu0
    %v2970 = vadd.f32 %v883, %v2969
    %v2971 = vpop.f32.mrf.mxu0
    %v2972 = vadd.f32 %v883, %v2971
    %2973 = vdwg.mxu0
    %2974 = vmatpush.bf16.msra.mxu0 %v1143
    %2975 = vmatpush.bf16.msra.mxu0 %v1139
    %2976 = vmatpush.bf16.msra.mxu0 %v1135
    %2977 = vmatpush.bf16.msra.mxu0 %v1131
    %2978 = vmatpush.bf16.msra.mxu0 %v1127
    %2979 = vmatpush.bf16.msra.mxu0 %v1123
    %2980 = vmatpush.bf16.msra.mxu0 %v1119
    %2981 = vmatpush.bf16.msra.mxu0 %v1115
    %2982 = vmatmul.bf16.gmra.mxu0 %v2930
    %v2983 = vpop.f32.mrf.mxu0
    %v2984 = vadd.f32 %v2970, %v2983
    %v2985 = vpop.f32.mrf.mxu0
    %v2986 = vadd.f32 %v2972, %v2985
    %2987 = vdwg.mxu0
    %2988 = vmatpush.bf16.msra.mxu0 %v1112
    %2989 = vmatpush.bf16.msra.mxu0 %v1108
    %2990 = vmatpush.bf16.msra.mxu0 %v1104
    %2991 = vmatpush.bf16.msra.mxu0 %v1100
    %2992 = vmatpush.bf16.msra.mxu0 %v1096
    %2993 = vmatpush.bf16.msra.mxu0 %v1092
    %2994 = vmatpush.bf16.msra.mxu0 %v1088
    %2995 = vmatpush.bf16.msra.mxu0 %v1084
    %2996 = vmatmul.bf16.gmra.mxu0 %v2924
    %v2997 = vpop.f32.mrf.mxu0
    %v2998 = vadd.f32 %v884, %v2997
    %v2999 = vpop.f32.mrf.mxu0
    %v3000 = vadd.f32 %v884, %v2999
    %3001 = vdwg.mxu0
    %3002 = vmatpush.bf16.msra.mxu0 %v1144
    %3003 = vmatpush.bf16.msra.mxu0 %v1140
    %3004 = vmatpush.bf16.msra.mxu0 %v1136
    %3005 = vmatpush.bf16.msra.mxu0 %v1132
    %3006 = vmatpush.bf16.msra.mxu0 %v1128
    %3007 = vmatpush.bf16.msra.mxu0 %v1124
    %3008 = vmatpush.bf16.msra.mxu0 %v1120
    %3009 = vmatpush.bf16.msra.mxu0 %v1116
    %3010 = vmatmul.bf16.gmra.mxu0 %v2930
    %v3011 = vpop.f32.mrf.mxu0
    %v3012 = vadd.f32 %v2998, %v3011
    %v3013 = vpop.f32.mrf.mxu0
    %v3014 = vadd.f32 %v3000, %v3013
    %3015 = vdwg.mxu0
    %3016 = vmatpush.bf16.msra.mxu0 %v1113
    %3017 = vmatpush.bf16.msra.mxu0 %v1109
    %3018 = vmatpush.bf16.msra.mxu0 %v1105
    %3019 = vmatpush.bf16.msra.mxu0 %v1101
    %3020 = vmatpush.bf16.msra.mxu0 %v1097
    %3021 = vmatpush.bf16.msra.mxu0 %v1093
    %3022 = vmatpush.bf16.msra.mxu0 %v1089
    %3023 = vmatpush.bf16.msra.mxu0 %v1085
    %3024 = vmatmul.bf16.gmra.mxu0 %v2924
    %v3025 = vpop.f32.mrf.mxu0
    %v3026 = vadd.f32 %v885, %v3025
    %v3027 = vpop.f32.mrf.mxu0
    %v3028 = vadd.f32 %v885, %v3027
    %3029 = vdwg.mxu0
    %3030 = vmatpush.bf16.msra.mxu0 %v1145
    %3031 = vmatpush.bf16.msra.mxu0 %v1141
    %3032 = vmatpush.bf16.msra.mxu0 %v1137
    %3033 = vmatpush.bf16.msra.mxu0 %v1133
    %3034 = vmatpush.bf16.msra.mxu0 %v1129
    %3035 = vmatpush.bf16.msra.mxu0 %v1125
    %3036 = vmatpush.bf16.msra.mxu0 %v1121
    %3037 = vmatpush.bf16.msra.mxu0 %v1117
    %3038 = vmatmul.bf16.gmra.mxu0 %v2930
    %v3039 = vpop.f32.mrf.mxu0
    %v3040 = vadd.f32 %v3026, %v3039
    %v3041 = vpop.f32.mrf.mxu0
    %v3042 = vadd.f32 %v3028, %v3041
    %3043 = vdwg.mxu0
    %v3044 = vmul.f32 %v2956, 0.5
    %v3045 = vmul.f32 %v2958, 0.5
    %v3046 = vtanh.pop %v3044
    %v3047 = vtanh.pop %v3045
    %v3048 = vadd.f32 %v3046, 1.0
    %v3049 = vadd.f32 %v3047, 1.0
    %v3050 = vmul.f32 %v3048, 0.5
    %v3051 = vmul.f32 %v3049, 0.5
    %v3052 = vmul.f32 %v2984, 0.5
    %v3053 = vmul.f32 %v2986, 0.5
    %v3054 = vtanh.pop %v3052
    %v3055 = vtanh.pop %v3053
    %v3056 = vadd.f32 %v3054, 1.0
    %v3057 = vadd.f32 %v3055, 1.0
    %v3058 = vmul.f32 %v3056, 0.5
    %v3059 = vmul.f32 %v3057, 0.5
    %v3060 = vtanh.pop %v3012
    %v3061 = vtanh.pop %v3014
    %v3062 = vmul.f32 %v3040, 0.5
    %v3063 = vmul.f32 %v3042, 0.5
    %v3064 = vtanh.pop %v3062
    %v3065 = vtanh.pop %v3063
    %v3066 = vadd.f32 %v3064, 1.0
    %v3067 = vadd.f32 %v3065, 1.0
    %v3068 = vmul.f32 %v3066, 0.5
    %v3069 = vmul.f32 %v3067, 0.5
    %v3070 = vmul.f32 %v3058, %v2787
    %v3071 = vmul.f32 %v3059, %v2788
    %v3072 = vmul.f32 %v3050, %v3060
    %v3073 = vmul.f32 %v3051, %v3061
    %v3074 = vadd.f32 %v3070, %v3072
    %v3075 = vadd.f32 %v3071, %v3073
    %v3076 = vtanh.pop %v3074
    %v3077 = vtanh.pop %v3075
    %v3078 = vmul.f32 %v3068, %v3076
    %v3079 = vmul.f32 %v3069, %v3077
    %s3080 = smul.u32 14, 4
    %s3081 = smul.addr %s3080, 4
    %s3082 = scalar_lea.vmem [#allocation2], %s3081
    %v3083 = vld [vmem:[%s3082] sm:$0xff]
    %v3084 = vld [vmem:[%s3082 + $0x8] sm:$0xff]
    %v3085 = vld [vmem:[%s3082 + $0x10] sm:$0xff]
    %v3086 = vld [vmem:[%s3082 + $0x18] sm:$0xff]
    %v3087 = vunpack.c.l.bf16 %v3083
    %v3088 = vunpack.c.h.bf16 %v3083
    %v3089 = vunpack.c.l.bf16 %v3084
    %v3090 = vunpack.c.h.bf16 %v3084
    %v3091 = vunpack.c.l.bf16 %v3085
    %v3092 = vunpack.c.h.bf16 %v3085
    %v3093 = vunpack.c.l.bf16 %v3086
    %v3094 = vunpack.c.h.bf16 %v3086
    %v3095 = vadd.f32 %v3087, %v492
    %v3096 = vadd.f32 %v3088, %v493
    %v3097 = vadd.f32 %v3089, %v494
    %v3098 = vadd.f32 %v3090, %v495
    %v3099 = vadd.f32 %v3091, %v492
    %v3100 = vadd.f32 %v3092, %v493
    %v3101 = vadd.f32 %v3093, %v494
    %v3102 = vadd.f32 %v3094, %v495
    %3103 = vmatpush.bf16.msra.mxu0 %v665
    %3104 = vmatpush.bf16.msra.mxu0 %v661
    %3105 = vmatpush.bf16.msra.mxu0 %v657
    %3106 = vmatpush.bf16.msra.mxu0 %v653
    %3107 = vmatpush.bf16.msra.mxu0 %v649
    %3108 = vmatpush.bf16.msra.mxu0 %v645
    %3109 = vmatpush.bf16.msra.mxu0 %v641
    %3110 = vmatpush.bf16.msra.mxu0 %v637
    %3111 = vmatmul.bf16.gmra.mxu0 %v2924
    %v3112 = vpop.f32.mrf.mxu0
    %v3113 = vadd.f32 0.0, %v3112
    %v3114 = vpop.f32.mrf.mxu0
    %v3115 = vadd.f32 0.0, %v3114
    %3116 = vdwg.mxu0
    %3117 = vmatpush.bf16.msra.mxu0 %v666
    %3118 = vmatpush.bf16.msra.mxu0 %v662
    %3119 = vmatpush.bf16.msra.mxu0 %v658
    %3120 = vmatpush.bf16.msra.mxu0 %v654
    %3121 = vmatpush.bf16.msra.mxu0 %v650
    %3122 = vmatpush.bf16.msra.mxu0 %v646
    %3123 = vmatpush.bf16.msra.mxu0 %v642
    %3124 = vmatpush.bf16.msra.mxu0 %v638
    %3125 = vmatmul.bf16.gmra.mxu0 %v2924
    %v3126 = vpop.f32.mrf.mxu0
    %v3127 = vadd.f32 0.0, %v3126
    %v3128 = vpop.f32.mrf.mxu0
    %v3129 = vadd.f32 0.0, %v3128
    %3130 = vdwg.mxu0
    %3131 = vmatpush.bf16.msra.mxu0 %v667
    %3132 = vmatpush.bf16.msra.mxu0 %v663
    %3133 = vmatpush.bf16.msra.mxu0 %v659
    %3134 = vmatpush.bf16.msra.mxu0 %v655
    %3135 = vmatpush.bf16.msra.mxu0 %v651
    %3136 = vmatpush.bf16.msra.mxu0 %v647
    %3137 = vmatpush.bf16.msra.mxu0 %v643
    %3138 = vmatpush.bf16.msra.mxu0 %v639
    %3139 = vmatmul.bf16.gmra.mxu0 %v2924
    %v3140 = vpop.f32.mrf.mxu0
    %v3141 = vadd.f32 0.0, %v3140
    %v3142 = vpop.f32.mrf.mxu0
    %v3143 = vadd.f32 0.0, %v3142
    %3144 = vdwg.mxu0
    %3145 = vmatpush.bf16.msra.mxu0 %v668
    %3146 = vmatpush.bf16.msra.mxu0 %v664
    %3147 = vmatpush.bf16.msra.mxu0 %v660
    %3148 = vmatpush.bf16.msra.mxu0 %v656
    %3149 = vmatpush.bf16.msra.mxu0 %v652
    %3150 = vmatpush.bf16.msra.mxu0 %v648
    %3151 = vmatpush.bf16.msra.mxu0 %v644
    %3152 = vmatpush.bf16.msra.mxu0 %v640
    %3153 = vmatmul.bf16.gmra.mxu0 %v2924
    %v3154 = vpop.f32.mrf.mxu0
    %v3155 = vadd.f32 0.0, %v3154
    %v3156 = vpop.f32.mrf.mxu0
    %v3157 = vadd.f32 0.0, %v3156
    %3158 = vdwg.mxu0
    %v3159 = vadd.f32 %v3095, %v3113
    %v3160 = vadd.f32 %v3096, %v3127
    %v3161 = vadd.f32 %v3097, %v3141
    %v3162 = vadd.f32 %v3098, %v3155
    %v3163 = vadd.f32 %v3099, %v3115
    %v3164 = vadd.f32 %v3100, %v3129
    %v3165 = vadd.f32 %v3101, %v3143
    %v3166 = vadd.f32 %v3102, %v3157
    %v3167 = vmul.f32 %v3159, 0.5
    %v3168 = vmul.f32 %v3163, 0.5
    %v3169 = vtanh.pop %v3167
    %v3170 = vtanh.pop %v3168
    %v3171 = vadd.f32 %v3169, 1.0
    %v3172 = vadd.f32 %v3170, 1.0
    %v3173 = vmul.f32 %v3171, 0.5
    %v3174 = vmul.f32 %v3172, 0.5
    %v3175 = vmul.f32 %v3160, 0.5
    %v3176 = vmul.f32 %v3164, 0.5
    %v3177 = vtanh.pop %v3175
    %v3178 = vtanh.pop %v3176
    %v3179 = vadd.f32 %v3177, 1.0
    %v3180 = vadd.f32 %v3178, 1.0
    %v3181 = vmul.f32 %v3179, 0.5
    %v3182 = vmul.f32 %v3180, 0.5
    %v3183 = vtanh.pop %v3161
    %v3184 = vtanh.pop %v3165
    %v3185 = vmul.f32 %v3162, 0.5
    %v3186 = vmul.f32 %v3166, 0.5
    %v3187 = vtanh.pop %v3185
    %v3188 = vtanh.pop %v3186
    %v3189 = vadd.f32 %v3187, 1.0
    %v3190 = vadd.f32 %v3188, 1.0
    %v3191 = vmul.f32 %v3189, 0.5
    %v3192 = vmul.f32 %v3190, 0.5
    %v3193 = vmul.f32 %v3181, %v2910
    %v3194 = vmul.f32 %v3182, %v2911
    %v3195 = vmul.f32 %v3173, %v3183
    %v3196 = vmul.f32 %v3174, %v3184
    %v3197 = vadd.f32 %v3193, %v3195
    %v3198 = vadd.f32 %v3194, %v3196
    %v3199 = vtanh.pop %v3197
    %v3200 = vtanh.pop %v3198
    %v3201 = vmul.f32 %v3191, %v3199
    %v3202 = vmul.f32 %v3192, %v3200
    %v3203 = vpack.c.bf16 %v3201, %v3201
    %v3204 = vpack.c.bf16 %v3202, %v3202
    %v3205 = vpack.c.bf16 %v3078, %v3078
    %v3206 = vpack.c.bf16 %v3079, %v3079
    %v3209 = vunpack.c.l.b16 %v3203
    %v3210 = vunpack.c.l.b16 %v3204
    %v3211 = vpack.c.b16 %v3210, %v3209
    %v3215 = vunpack.c.l.b16 %v3205
    %v3216 = vunpack.c.l.b16 %v3206
    %v3217 = vpack.c.b16 %v3216, %v3215
    %3219 = vmatpush.bf16.msra.mxu0 %v1110
    %3220 = vmatpush.bf16.msra.mxu0 %v1106
    %3221 = vmatpush.bf16.msra.mxu0 %v1102
    %3222 = vmatpush.bf16.msra.mxu0 %v1098
    %3223 = vmatpush.bf16.msra.mxu0 %v1094
    %3224 = vmatpush.bf16.msra.mxu0 %v1090
    %3225 = vmatpush.bf16.msra.mxu0 %v1086
    %3226 = vmatpush.bf16.msra.mxu0 %v1082
    %3227 = vmatmul.bf16.gmra.mxu0 %v3211
    %v3228 = vpop.f32.mrf.mxu0
    %v3229 = vadd.f32 %v882, %v3228
    %v3230 = vpop.f32.mrf.mxu0
    %v3231 = vadd.f32 %v882, %v3230
    %3232 = vdwg.mxu0
    %3233 = vmatpush.bf16.msra.mxu0 %v1142
    %3234 = vmatpush.bf16.msra.mxu0 %v1138
    %3235 = vmatpush.bf16.msra.mxu0 %v1134
    %3236 = vmatpush.bf16.msra.mxu0 %v1130
    %3237 = vmatpush.bf16.msra.mxu0 %v1126
    %3238 = vmatpush.bf16.msra.mxu0 %v1122
    %3239 = vmatpush.bf16.msra.mxu0 %v1118
    %3240 = vmatpush.bf16.msra.mxu0 %v1114
    %3241 = vmatmul.bf16.gmra.mxu0 %v3217
    %v3242 = vpop.f32.mrf.mxu0
    %v3243 = vadd.f32 %v3229, %v3242
    %v3244 = vpop.f32.mrf.mxu0
    %v3245 = vadd.f32 %v3231, %v3244
    %3246 = vdwg.mxu0
    %3247 = vmatpush.bf16.msra.mxu0 %v1111
    %3248 = vmatpush.bf16.msra.mxu0 %v1107
    %3249 = vmatpush.bf16.msra.mxu0 %v1103
    %3250 = vmatpush.bf16.msra.mxu0 %v1099
    %3251 = vmatpush.bf16.msra.mxu0 %v1095
    %3252 = vmatpush.bf16.msra.mxu0 %v1091
    %3253 = vmatpush.bf16.msra.mxu0 %v1087
    %3254 = vmatpush.bf16.msra.mxu0 %v1083
    %3255 = vmatmul.bf16.gmra.mxu0 %v3211
    %v3256 = vpop.f32.mrf.mxu0
    %v3257 = vadd.f32 %v883, %v3256
    %v3258 = vpop.f32.mrf.mxu0
    %v3259 = vadd.f32 %v883, %v3258
    %3260 = vdwg.mxu0
    %3261 = vmatpush.bf16.msra.mxu0 %v1143
    %3262 = vmatpush.bf16.msra.mxu0 %v1139
    %3263 = vmatpush.bf16.msra.mxu0 %v1135
    %3264 = vmatpush.bf16.msra.mxu0 %v1131
    %3265 = vmatpush.bf16.msra.mxu0 %v1127
    %3266 = vmatpush.bf16.msra.mxu0 %v1123
    %3267 = vmatpush.bf16.msra.mxu0 %v1119
    %3268 = vmatpush.bf16.msra.mxu0 %v1115
    %3269 = vmatmul.bf16.gmra.mxu0 %v3217
    %v3270 = vpop.f32.mrf.mxu0
    %v3271 = vadd.f32 %v3257, %v3270
    %v3272 = vpop.f32.mrf.mxu0
    %v3273 = vadd.f32 %v3259, %v3272
    %3274 = vdwg.mxu0
    %3275 = vmatpush.bf16.msra.mxu0 %v1112
    %3276 = vmatpush.bf16.msra.mxu0 %v1108
    %3277 = vmatpush.bf16.msra.mxu0 %v1104
    %3278 = vmatpush.bf16.msra.mxu0 %v1100
    %3279 = vmatpush.bf16.msra.mxu0 %v1096
    %3280 = vmatpush.bf16.msra.mxu0 %v1092
    %3281 = vmatpush.bf16.msra.mxu0 %v1088
    %3282 = vmatpush.bf16.msra.mxu0 %v1084
    %3283 = vmatmul.bf16.gmra.mxu0 %v3211
    %v3284 = vpop.f32.mrf.mxu0
    %v3285 = vadd.f32 %v884, %v3284
    %v3286 = vpop.f32.mrf.mxu0
    %v3287 = vadd.f32 %v884, %v3286
    %3288 = vdwg.mxu0
    %3289 = vmatpush.bf16.msra.mxu0 %v1144
    %3290 = vmatpush.bf16.msra.mxu0 %v1140
    %3291 = vmatpush.bf16.msra.mxu0 %v1136
    %3292 = vmatpush.bf16.msra.mxu0 %v1132
    %3293 = vmatpush.bf16.msra.mxu0 %v1128
    %3294 = vmatpush.bf16.msra.mxu0 %v1124
    %3295 = vmatpush.bf16.msra.mxu0 %v1120
    %3296 = vmatpush.bf16.msra.mxu0 %v1116
    %3297 = vmatmul.bf16.gmra.mxu0 %v3217
    %v3298 = vpop.f32.mrf.mxu0
    %v3299 = vadd.f32 %v3285, %v3298
    %v3300 = vpop.f32.mrf.mxu0
    %v3301 = vadd.f32 %v3287, %v3300
    %3302 = vdwg.mxu0
    %3303 = vmatpush.bf16.msra.mxu0 %v1113
    %3304 = vmatpush.bf16.msra.mxu0 %v1109
    %3305 = vmatpush.bf16.msra.mxu0 %v1105
    %3306 = vmatpush.bf16.msra.mxu0 %v1101
    %3307 = vmatpush.bf16.msra.mxu0 %v1097
    %3308 = vmatpush.bf16.msra.mxu0 %v1093
    %3309 = vmatpush.bf16.msra.mxu0 %v1089
    %3310 = vmatpush.bf16.msra.mxu0 %v1085
    %3311 = vmatmul.bf16.gmra.mxu0 %v3211
    %v3312 = vpop.f32.mrf.mxu0
    %v3313 = vadd.f32 %v885, %v3312
    %v3314 = vpop.f32.mrf.mxu0
    %v3315 = vadd.f32 %v885, %v3314
    %3316 = vdwg.mxu0
    %3317 = vmatpush.bf16.msra.mxu0 %v1145
    %3318 = vmatpush.bf16.msra.mxu0 %v1141
    %3319 = vmatpush.bf16.msra.mxu0 %v1137
    %3320 = vmatpush.bf16.msra.mxu0 %v1133
    %3321 = vmatpush.bf16.msra.mxu0 %v1129
    %3322 = vmatpush.bf16.msra.mxu0 %v1125
    %3323 = vmatpush.bf16.msra.mxu0 %v1121
    %3324 = vmatpush.bf16.msra.mxu0 %v1117
    %3325 = vmatmul.bf16.gmra.mxu0 %v3217
    %v3326 = vpop.f32.mrf.mxu0
    %v3327 = vadd.f32 %v3313, %v3326
    %v3328 = vpop.f32.mrf.mxu0
    %v3329 = vadd.f32 %v3315, %v3328
    %3330 = vdwg.mxu0
    %v3331 = vmul.f32 %v3243, 0.5
    %v3332 = vmul.f32 %v3245, 0.5
    %v3333 = vtanh.pop %v3331
    %v3334 = vtanh.pop %v3332
    %v3335 = vadd.f32 %v3333, 1.0
    %v3336 = vadd.f32 %v3334, 1.0
    %v3337 = vmul.f32 %v3335, 0.5
    %v3338 = vmul.f32 %v3336, 0.5
    %v3339 = vmul.f32 %v3271, 0.5
    %v3340 = vmul.f32 %v3273, 0.5
    %v3341 = vtanh.pop %v3339
    %v3342 = vtanh.pop %v3340
    %v3343 = vadd.f32 %v3341, 1.0
    %v3344 = vadd.f32 %v3342, 1.0
    %v3345 = vmul.f32 %v3343, 0.5
    %v3346 = vmul.f32 %v3344, 0.5
    %v3347 = vtanh.pop %v3299
    %v3348 = vtanh.pop %v3301
    %v3349 = vmul.f32 %v3327, 0.5
    %v3350 = vmul.f32 %v3329, 0.5
    %v3351 = vtanh.pop %v3349
    %v3352 = vtanh.pop %v3350
    %v3353 = vadd.f32 %v3351, 1.0
    %v3354 = vadd.f32 %v3352, 1.0
    %v3355 = vmul.f32 %v3353, 0.5
    %v3356 = vmul.f32 %v3354, 0.5
    %v3357 = vmul.f32 %v3345, %v3074
    %v3358 = vmul.f32 %v3346, %v3075
    %v3359 = vmul.f32 %v3337, %v3347
    %v3360 = vmul.f32 %v3338, %v3348
    %v3361 = vadd.f32 %v3357, %v3359
    %v3362 = vadd.f32 %v3358, %v3360
    %v3363 = vtanh.pop %v3361
    %v3364 = vtanh.pop %v3362
    %v3365 = vmul.f32 %v3355, %v3363
    %v3366 = vmul.f32 %v3356, %v3364
    %3367 = vst [vmem:[#allocation3] sm:$0xff] %v3201
    %3368 = vst [vmem:[#allocation3 + $0x8] sm:$0xff] %v3202
    %3369 = vst [vmem:[#allocation4] sm:$0xff] %v3197
    %3370 = vst [vmem:[#allocation4 + $0x8] sm:$0xff] %v3198
    %3371 = vst [vmem:[#allocation5] sm:$0xff] %v3365
    %3372 = vst [vmem:[#allocation5 + $0x8] sm:$0xff] %v3366
    %3373 = vst [vmem:[#allocation6] sm:$0xff] %v3361
    %3374 = vst [vmem:[#allocation6 + $0x8] sm:$0xff] %v3362
    // Predicated region
    $region46: #{tpu_custom_call.1} parent=1 // pred_check
      %p3375 = pneg %p65
    $region47: #{tpu_custom_call.1} parent=1 // pred_check_branch
      %3377 = sbr.rel (%p3375) target = $region49
    $region48: #{tpu_custom_call.1} parent=1 // pred_region
      %v3378 = vld [vmem:[%s6] sm:$0x1]
      %v3379 = vld [vmem:[#allocation7] sm:$0x1]
      %3381 = vset.pattern.permute.xlu0 0
      %3382 = vperm.xlu0 %3381, %v3379
      %v3383 = vpop.permute.xlu0 %3382
      %v3385 = vperm.slane %v3383, 0
      %3386 = vmatpush.xpose.msra.mxu0 0.0
      %3387 = vmatpush.xpose.msra.mxu0 0.0
      %3388 = vmatpush.xpose.msra.mxu0 0.0
      %3389 = vmatpush.xpose.msra.mxu0 0.0
      %3390 = vmatpush.xpose.msra.mxu0 0.0
      %3391 = vmatpush.xpose.msra.mxu0 0.0
      %3392 = vmatpush.xpose.msra.mxu0 0.0
      %3393 = vmatpush.xpose.msra.mxu0 0.0
      %3394 = vmatpush.xpose.msra.mxu0 0.0
      %3395 = vmatpush.xpose.msra.mxu0 0.0
      %3396 = vmatpush.xpose.msra.mxu0 0.0
      %3397 = vmatpush.xpose.msra.mxu0 0.0
      %3398 = vmatpush.xpose.msra.mxu0 0.0
      %3399 = vmatpush.xpose.msra.mxu0 0.0
      %3400 = vmatpush.xpose.msra.mxu0 %v3366
      %3401 = vmatpush.xpose.msra.mxu0 %v3365
      %3402 = vmatmul.f32.gmra.mxu0 %v3378
      %v3403 = vpop.f32.mrf.mxu0
      %v3404 = vadd.f32 %v3385, %v3403
      %3405 = vdwg.mxu0
      %vm3406 = vcmask 122880
      %3407 = vst.msk [vmem:[#allocation13] sm:$0x1] %vm3406, %v3404
    $region49: #{tpu_custom_call.1} parent=1 // pred_fallthru
      _
    // Predicated region
    $region50: #{tpu_custom_call.1} parent=1 // pred_check
      _
    $region51: #{tpu_custom_call.1} parent=1 // pred_check_branch
      %3409 = sbr.rel (0) target = $region53
    $region52: #{tpu_custom_call.1} parent=1 // pred_region
      %3411 = vsyncadd [#allocation10], 0
      %s3413 = sshll.u32 [#allocation13], 4
      %s3414 = int_to_ptr.vmem [resolvable:$true] %s3413
      %s3415 = sshll.u32 %s8, 4
      %s3416 = int_to_ptr.hbm [resolvable:$true] %s3415
      %3418 = dma.vmem_to_hbm [thread:$0]  %s3414, 16, %s3416, [#allocation10]
    $region53: #{tpu_custom_call.1} parent=1 // pred_fallthru
      _
    // Predicated region
    $region54: #{tpu_custom_call.1} parent=1 // pred_check
      _
    $region55: #{tpu_custom_call.1} parent=1 // pred_check_branch
      %3420 = sbr.rel (0) target = $region57
    $region56: #{tpu_custom_call.1} parent=1 // pred_region
      %3422 = dma.done [#allocation10], 16
    $region57: #{tpu_custom_call.1} parent=1 // pred_fallthru
      _
    %3423 = vsyncpa [#allocation9], 1
    %3424 = vsyncpa [#allocation12], 1
    %3425 = vsyncpa [#allocation10], 1

</llo_original>
